<compile_context>
chip_gen: v6e
topology: v6e:2x2x1
jax: 0.10.0
libtpu: 0.0.40
codegen_flags: <defaults>
</compile_context>

<pallas_src>
import jax
import jax.numpy as jnp
from jax import lax
from jax.experimental import pallas as pl
from jax.experimental.pallas import tpu as pltpu

EPS = 1e-5
VMEM_LIMIT = 64 * 1024 * 1024  # fits v7x's 64 MiB VMEM; plenty of headroom on v5e/v6e


# ---------------------------------------------------------------------------
# small helpers
# ---------------------------------------------------------------------------
def _choose_row_tile(rows, max_tile=512):
    """Largest power-of-two tile (<= max_tile) dividing `rows`; whole-M fallback."""
    for t in (2048, 1024, 512, 256, 128, 64, 32, 16, 8):
        if t <= max_tile and rows % t == 0:
            return t
    return rows


def _bn_scale_bias(total_sum, total_ssq, count, gamma, beta, eps=EPS):
    # NOTE: E[x^2]-E[x]^2 in f32 with a clamp; fine for zero-mean-ish activations.
    mean = total_sum / count
    var = jnp.maximum(total_ssq / count - mean * mean, 0.0)
    scale = gamma / jnp.sqrt(var + eps)
    bias = beta - mean * scale
    return scale, bias


# ---------------------------------------------------------------------------
# Pallas kernels
# ---------------------------------------------------------------------------
def _matmul_stats_kernel(x_ref, w_ref, y_ref, sum_ref, ssq_ref):
    """y = x @ w (f32 accumulation) + per-row-block column sum / sum-of-squares."""
    y = jnp.dot(x_ref[...], w_ref[...], preferred_element_type=jnp.float32)
    y_ref[...] = y
    sum_ref[...] = jnp.sum(y, axis=0).reshape(sum_ref.shape)
    ssq_ref[...] = jnp.sum(y * y, axis=0).reshape(ssq_ref.shape)


def _affine_relu_kernel(y_ref, scale_ref, bias_ref, o_ref):
    """o = relu(y * scale + bias)   (fused BatchNorm-apply + ReLU)."""
    o_ref[...] = jnp.maximum(y_ref[...] * scale_ref[...] + bias_ref[...], 0.0)


def matmul_stats(x2d, w2d):
    """x2d (M, K) @ w2d (K, N) -> y (M, N) f32, plus per-column sum / sum-of-squares."""
    m, k = x2d.shape
    ncols = w2d.shape[1]
    tm = _choose_row_tile(m, max_tile=512)
    grid0 = m // tm
    y, s_blk, q_blk = pl.pallas_call(
        _matmul_stats_kernel,
        out_shape=(jax.ShapeDtypeStruct((m, ncols), jnp.float32),
                   jax.ShapeDtypeStruct((grid0, 1, ncols), jnp.float32),
                   jax.ShapeDtypeStruct((grid0, 1, ncols), jnp.float32)),
        grid=(grid0,),
        in_specs=[pl.BlockSpec((tm, k), lambda i: (i, 0)),
                  pl.BlockSpec((k, ncols), lambda i: (0, 0))],
        out_specs=(pl.BlockSpec((tm, ncols), lambda i: (i, 0)),
                   pl.BlockSpec((1, 1, ncols), lambda i: (i, 0, 0)),
                   pl.BlockSpec((1, 1, ncols), lambda i: (i, 0, 0))),
        compiler_params=pltpu.CompilerParams(
            dimension_semantics=("parallel",),
            vmem_limit_bytes=VMEM_LIMIT),
    )(x2d, w2d)
    # per-block partial stats -> global stats (reduced in plain JAX; tiny arrays)
    return y, s_blk.sum(axis=(0, 1)), q_blk.sum(axis=(0, 1))


def affine_relu(y2d, scale_col, bias_col):
    """relu(y * scale + bias) with lane-densified stores when ncols divides 128."""
    m, ncols = y2d.shape
    reps = 1
    if ncols < 128 and 128 % ncols == 0 and m % (128 // ncols) == 0:
        reps = 128 // ncols
    if reps > 1:
        y = y2d.reshape(m // reps, ncols * reps)          # free (row-major) reshape
        scale = jnp.tile(scale_col, reps)
        bias = jnp.tile(bias_col, reps)
    else:
        y, scale, bias = y2d, scale_col, bias_col
    rows, cols = y.shape
    tr = _choose_row_tile(rows, max_tile=1024)
    out = pl.pallas_call(
        _affine_relu_kernel,
        out_shape=jax.ShapeDtypeStruct((rows, cols), jnp.float32),
        grid=(rows // tr,),
        in_specs=[pl.BlockSpec((tr, cols), lambda i: (i, 0)),
                  pl.BlockSpec((1, cols), lambda i: (0, 0)),
                  pl.BlockSpec((1, cols), lambda i: (0, 0))],
        out_specs=pl.BlockSpec((tr, cols), lambda i: (i, 0)),
        compiler_params=pltpu.CompilerParams(
            dimension_semantics=("parallel",),
            vmem_limit_bytes=VMEM_LIMIT),
    )(y, scale.reshape(1, cols), bias.reshape(1, cols))
    return out.reshape(m, ncols)


def conv3x3x3_stats(xup_pad, skip_pad, w_up, w_sk):
    """3x3x3 'same' conv over concat([x_up, skip], channel) without materializing the
    concat or an im2col tensor.  Inputs are channels-last and spatially padded by 1.
    Grid = (N, D2, 3 depth taps); the 3x3 in-plane taps are static window slices of the
    padded plane held in VMEM.  Also emits per-batch partial BN statistics."""
    n, d2p, h2p, w2p, c = xup_pad.shape
    d2, h2, w2 = d2p - 2, h2p - 2, w2p - 2
    cout = w_up.shape[-1]
    hw = h2 * w2

    xu_flat = xup_pad.reshape(n * d2p, h2p, w2p, c)       # free reshapes (rank <= 4)
    sk_flat = skip_pad.reshape(n * d2p, h2p, w2p, c)

    def kernel(xu_ref, sk_ref, wu_ref, ws_ref, y_ref, sum_ref, ssq_ref, acc_ref):
        z = pl.program_id(1)
        kd = pl.program_id(2)

        @pl.when(kd == 0)
        def _():
            acc_ref[...] = jnp.zeros_like(acc_ref)

        @pl.when((z == 0) & (kd == 0))
        def _():
            sum_ref[...] = jnp.zeros_like(sum_ref)
            ssq_ref[...] = jnp.zeros_like(ssq_ref)

        wu = wu_ref[0]                                    # (9*c, cout) taps for this kd
        ws = ws_ref[0]
        acc = acc_ref[...]
        for kh in range(3):
            for kw in range(3):
                r0 = (kh * 3 + kw) * c
                pu = xu_ref[0, kh:kh + h2, kw:kw + w2, :].reshape(hw, c)
                ps = sk_ref[0, kh:kh + h2, kw:kw + w2, :].reshape(hw, c)
                acc = acc + jnp.dot(pu, wu[r0:r0 + c, :],
                                    preferred_element_type=jnp.float32)
                acc = acc + jnp.dot(ps, ws[r0:r0 + c, :],
                                    preferred_element_type=jnp.float32)
        acc_ref[...] = acc

        @pl.when(kd == 2)
        def _():
            a = acc_ref[...]
            y_ref[0] = a
            sum_ref[...] += jnp.sum(a, axis=0).reshape(sum_ref.shape)
            ssq_ref[...] += jnp.sum(a * a, axis=0).reshape(ssq_ref.shape)

    y, s, q = pl.pallas_call(
        kernel,
        out_shape=(jax.ShapeDtypeStruct((n * d2, hw, cout), jnp.float32),
                   jax.ShapeDtypeStruct((n, 1, cout), jnp.float32),
                   jax.ShapeDtypeStruct((n, 1, cout), jnp.float32)),
        grid=(n, d2, 3),
        in_specs=[
            pl.BlockSpec((1, h2p, w2p, c), lambda b, z, kd: (b * d2p + z + kd, 0, 0, 0)),
            pl.BlockSpec((1, h2p, w2p, c), lambda b, z, kd: (b * d2p + z + kd, 0, 0, 0)),
            pl.BlockSpec((1, 9 * c, cout), lambda b, z, kd: (kd, 0, 0)),
            pl.BlockSpec((1, 9 * c, cout), lambda b, z, kd: (kd, 0, 0)),
        ],
        out_specs=(
            pl.BlockSpec((1, hw, cout), lambda b, z, kd: (b * d2 + z, 0, 0)),
            pl.BlockSpec((1, 1, cout), lambda b, z, kd: (b, 0, 0)),
            pl.BlockSpec((1, 1, cout), lambda b, z, kd: (b, 0, 0)),
        ),
        scratch_shapes=[pltpu.VMEM((hw, cout), jnp.float32)],
        compiler_params=pltpu.CompilerParams(
            dimension_semantics=("parallel", "arbitrary", "arbitrary"),
            vmem_limit_bytes=VMEM_LIMIT),
    )(xu_flat, sk_flat, w_up, w_sk)
    return y, s.sum(axis=(0, 1)), q.sum(axis=(0, 1))


# ---------------------------------------------------------------------------
# Layout plumbing (plain JAX)
# ---------------------------------------------------------------------------
def _center_crop_or_pad_cl(t, target, halo=0):
    """Channels-last crop/pad of (N, D, H, W, C) to `target` spatial dims, plus an extra
    `halo` of zero padding on every spatial side (fused with the conv's p=1 padding)."""
    slices = [slice(None)]
    for cur, tgt in zip(t.shape[1:4], target):
        if cur > tgt:
            s = (cur - tgt) // 2
            slices.append(slice(s, s + tgt))
        else:
            slices.append(slice(None))
    slices.append(slice(None))
    t = t[tuple(slices)]
    pads = [(0, 0)]
    for cur, tgt in zip(t.shape[1:4], target):
        if cur < tgt:
            total = tgt - cur
            pads.append((total // 2 + halo, total - total // 2 + halo))
        else:
            pads.append((halo, halo))
    pads.append((0, 0))
    return jnp.pad(t, pads)


def center_crop_or_pad(t, target):
    """NCDHW version (used by the reference)."""
    slices = [slice(None), slice(None)]
    for cur, tgt in zip(t.shape[2:], target):
        if cur > tgt:
            s = (cur - tgt) // 2
            slices.append(slice(s, s + tgt))
        else:
            slices.append(slice(None))
    t = t[tuple(slices)]
    pads = [(0, 0), (0, 0)]
    for cur, tgt in zip(t.shape[2:], target):
        if cur < tgt:
            total = tgt - cur
            pads.append((total // 2, total - total // 2))
        else:
            pads.append((0, 0))
    return jnp.pad(t, pads)


def decoder_block_forward(x, skip, params):
    """Pallas implementation of DecoderBlock.forward (training-mode BatchNorm)."""
    n, cin, d, h, w = x.shape
    c = params["wt"].shape[1]                      # skip_channels
    d2, h2, w2 = 2 * d, 2 * h, 2 * w
    m1 = n * d * h * w

    # --- stage 1: ConvTranspose3d(k=2, s=2) == one (M1, Cin) x (Cin, 8C) matmul --------
    x_cl = jnp.transpose(x, (0, 2, 3, 4, 1)).reshape(m1, cin)
    wt2d = jnp.transpose(params["wt"], (0, 2, 3, 4, 1)).reshape(cin, 8 * c)
    # bf16 operands, f32 accumulation. ConvTranspose bias is dropped: BN1 absorbs it.
    y1, s1, q1 = matmul_stats(x_cl.astype(jnp.bfloat16), wt2d.astype(jnp.bfloat16))

    count1 = float(n * d2 * h2 * w2)
    ch_sum = s1.reshape(8, c).sum(axis=0)          # fold the 8 tap columns per channel
    ch_ssq = q1.reshape(8, c).sum(axis=0)
    sc1, bi1 = _bn_scale_bias(ch_sum, ch_ssq, count1, params["gamma1"], params["beta1"])
    a1 = affine_relu(y1, jnp.tile(sc1, 8), jnp.tile(bi1, 8))          # (M1, 8C)

    # TODO(synk): the stride-2 upsample interleave stays one channels-last XLA transpose;
    # folding it into the affine kernel's output BlockSpec needs sub-(8,128) strided
    # output blocks that Mosaic does not support cleanly.
    x_up = a1.reshape(n, d, h, w, 2, 2, 2, c)
    x_up = jnp.transpose(x_up, (0, 1, 4, 2, 5, 3, 6, 7)).reshape(n, d2, h2, w2, c)
    xup_pad = jnp.pad(x_up, ((0, 0), (1, 1), (1, 1), (1, 1), (0, 0)))

    # --- stage 2: crop/pad skip (channels-last, conv halo fused), Conv3d(k=3, p=1) -----
    skip_cl = jnp.transpose(skip, (0, 2, 3, 4, 1))
    skip_pad = _center_crop_or_pad_cl(skip_cl, (d2, h2, w2), halo=1)

    wc = params["wc"]                              # (C, 2C, 3, 3, 3)  OIDHW
    w_up = jnp.transpose(wc[:, :c], (2, 3, 4, 1, 0)).reshape(3, 9 * c, c)
    w_sk = jnp.transpose(wc[:, c:], (2, 3, 4, 1, 0)).reshape(3, 9 * c, c)
    # Conv bias dropped: BN2 absorbs it.
    y2, s2, q2 = conv3x3x3_stats(xup_pad, skip_pad, w_up, w_sk)       # (N*D2, H2*W2, C)

    count2 = float(n * d2 * h2 * w2)
    sc2, bi2 = _bn_scale_bias(s2, q2, count2, params["gamma2"], params["beta2"])
    a2 = affine_relu(y2.reshape(n * d2 * h2 * w2, c), sc2, bi2)

    out = a2.reshape(n, d2, h2, w2, c)
    return jnp.transpose(out, (0, 4, 1, 2, 3))     # single NDHWC -> NCDHW at the end


# ---------------------------------------------------------------------------
# Pure-JAX reference (independent path, for a sanity check)
# ---------------------------------------------------------------------------
def _bn_train_ref(y, gamma, beta, eps=EPS):
    mean = y.mean(axis=(0, 2, 3, 4), keepdims=True)
    var = y.var(axis=(0, 2, 3, 4), keepdims=True)
    g = gamma[None, :, None, None, None]
    b = beta[None, :, None, None, None]
    return (y - mean) / jnp.sqrt(var + eps) * g + b


def decoder_block_reference(x, skip, params):
    n, cin, d, h, w = x.shape
    c = params["wt"].shape[1]
    y = jnp.einsum('nidhw,iokab->nodkhawb', x, params["wt"],
                   precision=jax.lax.Precision.HIGHEST)
    y = y.reshape(n, c, 2 * d, 2 * h, 2 * w) + params["bt"][None, :, None, None, None]
    y = jnp.maximum(_bn_train_ref(y, params["gamma1"], params["beta1"]), 0.0)
    skip_c = center_crop_or_pad(skip, y.shape[2:])
    x_cat = jnp.concatenate([y, skip_c], axis=1)
    z = lax.conv_general_dilated(
        x_cat, params["wc"], window_strides=(1, 1, 1), padding=[(1, 1)] * 3,
        dimension_numbers=('NCDHW', 'OIDHW', 'NCDHW'),
        precision=jax.lax.Precision.HIGHEST)
    z = z + params["bc"][None, :, None, None, None]
    return jnp.maximum(_bn_train_ref(z, params["gamma2"], params["beta2"]), 0.0)


if __name__ == "__main__":
    key = jax.random.PRNGKey(0)
    up_in_channels, skip_channels = 8, 4
    n, d, h, w = 2, 4, 4, 4
    keys = jax.random.split(key, 10)
    params = {
        "wt": 0.1 * jax.random.normal(keys[0], (up_in_channels, skip_channels, 2, 2, 2), jnp.float32),
        "bt": 0.1 * jax.random.normal(keys[1], (skip_channels,), jnp.float32),
        "gamma1": 1.0 + 0.1 * jax.random.normal(keys[2], (skip_channels,), jnp.float32),
        "beta1": 0.1 * jax.random.normal(keys[3], (skip_channels,), jnp.float32),
        "wc": 0.1 * jax.random.normal(keys[4], (skip_channels, 2 * skip_channels, 3, 3, 3), jnp.float32),
        "bc": 0.1 * jax.random.normal(keys[5], (skip_channels,), jnp.float32),
        "gamma2": 1.0 + 0.1 * jax.random.normal(keys[6], (skip_channels,), jnp.float32),
        "beta2": 0.1 * jax.random.normal(keys[7], (skip_channels,), jnp.float32),
    }
    x = jax.random.normal(keys[8], (n, up_in_channels, d, h, w), jnp.float32)
    # skip spatial dims chosen to exercise both crop (10 -> 8) and pad (6 -> 8)
    skip = jax.random.normal(keys[9], (n, skip_channels, 10, 8, 6), jnp.float32)

    fwd = jax.jit(decoder_block_forward)
    ref_fn = jax.jit(decoder_block_reference)

    out = jax.block_until_ready(fwd(x, skip, params))
    ref = jax.block_until_ready(ref_fn(x, skip, params))

    assert out.shape == (n, skip_channels, 2 * d, 2 * h, 2 * w), out.shape
    assert bool(jnp.all(jnp.isfinite(out)))
    assert bool(jnp.allclose(out, ref, atol=3e-2, rtol=3e-2)), \
        float(jnp.max(jnp.abs(out - ref)))
    print("KERNEL_OK")
</pallas_src>

<mosaic_0001>
module attributes {stable_mosaic.version = 11 : i64} {
  func.func @_matmul_stats_kernel(%arg0: i32, %arg1: memref<128x8xbf16, #tpu.memory_space<vmem>>, %arg2: memref<8x32xbf16, #tpu.memory_space<vmem>>, %arg3: memref<128x32xf32, #tpu.memory_space<vmem>>, %arg4: memref<1x1x32xf32, #tpu.memory_space<vmem>>, %arg5: memref<1x1x32xf32, #tpu.memory_space<vmem>>) attributes {dimension_semantics = [#tpu.dimension_semantics<parallel>], iteration_bounds = array<i64: 1>, scalar_prefetch = 0 : i64, scratch_operands = 0 : i64, tpu.core_type = #tpu.core_type<tc>, window_params = [{transform_indices = @transform_0, window_bounds = array<i64: 128, 8>}, {pipeline_mode = #tpu.pipeline_mode<synchronous>, transform_indices = @transform_1, window_bounds = array<i64: 8, 32>}, {transform_indices = @transform_2, window_bounds = array<i64: 128, 32>}, {transform_indices = @transform_3, window_bounds = array<i64: 1, 1, 32>}, {transform_indices = @transform_4, window_bounds = array<i64: 1, 1, 32>}]} {
    %c0 = arith.constant 0 : index
    %c0_0 = arith.constant 0 : index
    %0 = vector.load %arg1[%c0, %c0_0] : memref<128x8xbf16, #tpu.memory_space<vmem>>, vector<128x8xbf16>
    %c0_1 = arith.constant 0 : index
    %c0_2 = arith.constant 0 : index
    %1 = vector.load %arg2[%c0_1, %c0_2] : memref<8x32xbf16, #tpu.memory_space<vmem>>, vector<8x32xbf16>
    %cst = arith.constant dense<0.000000e+00> : vector<128x32xf32>
    %2 = tpu.matmul %0, %1, %cst {dimension_numbers = #tpu.dot_dimension_numbers<[1], [0], [0], [1], [0, 0, 1, 1], [], []>} : vector<128x8xbf16>, vector<8x32xbf16>, vector<128x32xf32> -> vector<128x32xf32>
    %c0_3 = arith.constant 0 : index
    %c0_4 = arith.constant 0 : index
    %3 = vector.load %arg3[%c0_3, %c0_4] : memref<128x32xf32, #tpu.memory_space<vmem>>, vector<128x32xf32>
    tpu.vector_store %arg3[%c0_3, %c0_4], %2 {strides = array<i32>} : memref<128x32xf32, #tpu.memory_space<vmem>>, vector<128x32xf32>,
    %cst_5 = arith.constant dense<0.000000e+00> : vector<32xf32>
    %4 = vector.multi_reduction <add>, %2, %cst_5 [0] : vector<128x32xf32> to vector<32xf32>
    %5 = vector.shape_cast %4 : vector<32xf32> to vector<1x1x32xf32>
    %c0_6 = arith.constant 0 : index
    %c0_7 = arith.constant 0 : index
    %c0_8 = arith.constant 0 : index
    %6 = vector.load %arg4[%c0_6, %c0_7, %c0_8] : memref<1x1x32xf32, #tpu.memory_space<vmem>>, vector<1x1x32xf32>
    tpu.vector_store %arg4[%c0_6, %c0_7, %c0_8], %5 {strides = array<i32>} : memref<1x1x32xf32, #tpu.memory_space<vmem>>, vector<1x1x32xf32>,
    %7 = arith.mulf %2, %2 : vector<128x32xf32>
    %cst_9 = arith.constant dense<0.000000e+00> : vector<32xf32>
    %8 = vector.multi_reduction <add>, %7, %cst_9 [0] : vector<128x32xf32> to vector<32xf32>
    %9 = vector.shape_cast %8 : vector<32xf32> to vector<1x1x32xf32>
    %c0_10 = arith.constant 0 : index
    %c0_11 = arith.constant 0 : index
    %c0_12 = arith.constant 0 : index
    %10 = vector.load %arg5[%c0_10, %c0_11, %c0_12] : memref<1x1x32xf32, #tpu.memory_space<vmem>>, vector<1x1x32xf32>
    tpu.vector_store %arg5[%c0_10, %c0_11, %c0_12], %9 {strides = array<i32>} : memref<1x1x32xf32, #tpu.memory_space<vmem>>, vector<1x1x32xf32>,
    return
  }
  func.func @transform_0(%arg0: i32) -> (i32, i32) {
    %c0_i32 = arith.constant 0 : i32
    %c0_i32_0 = arith.constant 0 : i32
    return %arg0, %c0_i32 : i32, i32
  }
  func.func @transform_1(%arg0: i32) -> (i32, i32) {
    %c0_i32 = arith.constant 0 : i32
    %c0_i32_0 = arith.constant 0 : i32
    %c0_i32_1 = arith.constant 0 : i32
    return %c0_i32, %c0_i32_0 : i32, i32
  }
  func.func @transform_2(%arg0: i32) -> (i32, i32) {
    %c0_i32 = arith.constant 0 : i32
    %c0_i32_0 = arith.constant 0 : i32
    return %arg0, %c0_i32 : i32, i32
  }
  func.func @transform_3(%arg0: i32) -> (i32, i32, i32) {
    %c0_i32 = arith.constant 0 : i32
    %c0_i32_0 = arith.constant 0 : i32
    %c0_i32_1 = arith.constant 0 : i32
    return %arg0, %c0_i32, %c0_i32_0 : i32, i32, i32
  }
  func.func @transform_4(%arg0: i32) -> (i32, i32, i32) {
    %c0_i32 = arith.constant 0 : i32
    %c0_i32_0 = arith.constant 0 : i32
    %c0_i32_1 = arith.constant 0 : i32
    return %arg0, %c0_i32, %c0_i32_0 : i32, i32, i32
  }
}

module attributes {stable_mosaic.version = 11 : i64} {
  func.func @_affine_relu_kernel(%arg0: i32, %arg1: memref<32x128xf32, #tpu.memory_space<vmem>>, %arg2: memref<1x128xf32, #tpu.memory_space<vmem>>, %arg3: memref<1x128xf32, #tpu.memory_space<vmem>>, %arg4: memref<32x128xf32, #tpu.memory_space<vmem>>) attributes {dimension_semantics = [#tpu.dimension_semantics<parallel>], iteration_bounds = array<i64: 1>, scalar_prefetch = 0 : i64, scratch_operands = 0 : i64, tpu.core_type = #tpu.core_type<tc>, window_params = [{transform_indices = @transform_0, window_bounds = array<i64: 32, 128>}, {pipeline_mode = #tpu.pipeline_mode<synchronous>, transform_indices = @transform_1, window_bounds = array<i64: 1, 128>}, {pipeline_mode = #tpu.pipeline_mode<synchronous>, transform_indices = @transform_2, window_bounds = array<i64: 1, 128>}, {transform_indices = @transform_3, window_bounds = array<i64: 32, 128>}]} {
    %c0 = arith.constant 0 : index
    %c0_0 = arith.constant 0 : index
    %0 = vector.load %arg1[%c0, %c0_0] : memref<32x128xf32, #tpu.memory_space<vmem>>, vector<32x128xf32>
    %c0_1 = arith.constant 0 : index
    %c0_2 = arith.constant 0 : index
    %1 = vector.load %arg2[%c0_1, %c0_2] : memref<1x128xf32, #tpu.memory_space<vmem>>, vector<1x128xf32>
    %2 = vector.broadcast %1 : vector<1x128xf32> to vector<32x128xf32>
    %3 = arith.mulf %0, %2 : vector<32x128xf32>
    %c0_3 = arith.constant 0 : index
    %c0_4 = arith.constant 0 : index
    %4 = vector.load %arg3[%c0_3, %c0_4] : memref<1x128xf32, #tpu.memory_space<vmem>>, vector<1x128xf32>
    %5 = vector.broadcast %4 : vector<1x128xf32> to vector<32x128xf32>
    %6 = arith.addf %3, %5 : vector<32x128xf32>
    %cst = arith.constant 0.000000e+00 : f32
    %7 = vector.broadcast %cst : f32 to vector<32x128xf32>
    %8 = arith.maximumf %6, %7 : vector<32x128xf32>
    %c0_5 = arith.constant 0 : index
    %c0_6 = arith.constant 0 : index
    %9 = vector.load %arg4[%c0_5, %c0_6] : memref<32x128xf32, #tpu.memory_space<vmem>>, vector<32x128xf32>
    tpu.vector_store %arg4[%c0_5, %c0_6], %8 {strides = array<i32>} : memref<32x128xf32, #tpu.memory_space<vmem>>, vector<32x128xf32>,
    return
  }
  func.func @transform_0(%arg0: i32) -> (i32, i32) {
    %c0_i32 = arith.constant 0 : i32
    %c0_i32_0 = arith.constant 0 : i32
    return %arg0, %c0_i32 : i32, i32
  }
  func.func @transform_1(%arg0: i32) -> (i32, i32) {
    %c0_i32 = arith.constant 0 : i32
    %c0_i32_0 = arith.constant 0 : i32
    %c0_i32_1 = arith.constant 0 : i32
    return %c0_i32, %c0_i32_0 : i32, i32
  }
  func.func @transform_2(%arg0: i32) -> (i32, i32) {
    %c0_i32 = arith.constant 0 : i32
    %c0_i32_0 = arith.constant 0 : i32
    %c0_i32_1 = arith.constant 0 : i32
    return %c0_i32, %c0_i32_0 : i32, i32
  }
  func.func @transform_3(%arg0: i32) -> (i32, i32) {
    %c0_i32 = arith.constant 0 : i32
    %c0_i32_0 = arith.constant 0 : i32
    return %arg0, %c0_i32 : i32, i32
  }
}

module attributes {stable_mosaic.version = 11 : i64} {
  func.func @kernel(%arg0: i32, %arg1: i32, %arg2: i32, %arg3: memref<1x10x10x4xf32, #tpu.memory_space<vmem>>, %arg4: memref<1x10x10x4xf32, #tpu.memory_space<vmem>>, %arg5: memref<1x36x4xf32, #tpu.memory_space<vmem>>, %arg6: memref<1x36x4xf32, #tpu.memory_space<vmem>>, %arg7: memref<1x64x4xf32, #tpu.memory_space<vmem>>, %arg8: memref<1x1x4xf32, #tpu.memory_space<vmem>>, %arg9: memref<1x1x4xf32, #tpu.memory_space<vmem>>, %arg10: memref<64x4xf32, #tpu.memory_space<vmem>>) attributes {dimension_semantics = [#tpu.dimension_semantics<parallel>, #tpu.dimension_semantics<arbitrary>, #tpu.dimension_semantics<arbitrary>], iteration_bounds = array<i64: 2, 8, 3>, scalar_prefetch = 0 : i64, scratch_operands = 1 : i64, tpu.core_type = #tpu.core_type<tc>, window_params = [{transform_indices = @transform_0, window_bounds = array<i64: 1, 10, 10, 4>}, {transform_indices = @transform_1, window_bounds = array<i64: 1, 10, 10, 4>}, {transform_indices = @transform_2, window_bounds = array<i64: 1, 36, 4>}, {transform_indices = @transform_3, window_bounds = array<i64: 1, 36, 4>}, {transform_indices = @transform_4, window_bounds = array<i64: 1, 64, 4>}, {transform_indices = @transform_5, window_bounds = array<i64: 1, 1, 4>}, {transform_indices = @transform_6, window_bounds = array<i64: 1, 1, 4>}]} {
    %c0_i32 = arith.constant 0 : i32
    %0 = arith.cmpi eq, %arg2, %c0_i32 : i32
    %1 = arith.extui %0 : i1 to i32
    %c0_i32_0 = arith.constant 0 : i32
    %2 = arith.cmpi ne, %1, %c0_i32_0 : i32
    scf.if %2 {
      %cst_101 = arith.constant 0.000000e+00 : f32
      %125 = vector.broadcast %cst_101 : f32 to vector<64x4xf32>
      %c0_102 = arith.constant 0 : index
      %c0_103 = arith.constant 0 : index
      %126 = vector.load %arg10[%c0_102, %c0_103] : memref<64x4xf32, #tpu.memory_space<vmem>>, vector<64x4xf32>
      tpu.vector_store %arg10[%c0_102, %c0_103], %125 {strides = array<i32>} : memref<64x4xf32, #tpu.memory_space<vmem>>, vector<64x4xf32>,
    } else {
    }
    %c0_i32_1 = arith.constant 0 : i32
    %3 = arith.cmpi eq, %arg1, %c0_i32_1 : i32
    %c0_i32_2 = arith.constant 0 : i32
    %4 = arith.cmpi eq, %arg2, %c0_i32_2 : i32
    %5 = arith.andi %3, %4 : i1
    %6 = arith.extui %5 : i1 to i32
    %c0_i32_3 = arith.constant 0 : i32
    %7 = arith.cmpi ne, %6, %c0_i32_3 : i32
    scf.if %7 {
      %cst_101 = arith.constant 0.000000e+00 : f32
      %125 = vector.broadcast %cst_101 : f32 to vector<1x1x4xf32>
      %c0_102 = arith.constant 0 : index
      %c0_103 = arith.constant 0 : index
      %c0_104 = arith.constant 0 : index
      %126 = vector.load %arg8[%c0_102, %c0_103, %c0_104] : memref<1x1x4xf32, #tpu.memory_space<vmem>>, vector<1x1x4xf32>
      tpu.vector_store %arg8[%c0_102, %c0_103, %c0_104], %125 {strides = array<i32>} : memref<1x1x4xf32, #tpu.memory_space<vmem>>, vector<1x1x4xf32>,
      %cst_105 = arith.constant 0.000000e+00 : f32
      %127 = vector.broadcast %cst_105 : f32 to vector<1x1x4xf32>
      %c0_106 = arith.constant 0 : index
      %c0_107 = arith.constant 0 : index
      %c0_108 = arith.constant 0 : index
      %128 = vector.load %arg9[%c0_106, %c0_107, %c0_108] : memref<1x1x4xf32, #tpu.memory_space<vmem>>, vector<1x1x4xf32>
      tpu.vector_store %arg9[%c0_106, %c0_107, %c0_108], %127 {strides = array<i32>} : memref<1x1x4xf32, #tpu.memory_space<vmem>>, vector<1x1x4xf32>,
    } else {
    }
    %c0 = arith.constant 0 : index
    %c0_4 = arith.constant 0 : index
    %c0_5 = arith.constant 0 : index
    %8 = vector.load %arg5[%c0, %c0_4, %c0_5] : memref<1x36x4xf32, #tpu.memory_space<vmem>>, vector<1x36x4xf32>
    %9 = vector.shape_cast %8 : vector<1x36x4xf32> to vector<36x4xf32>
    %c0_6 = arith.constant 0 : index
    %c0_7 = arith.constant 0 : index
    %c0_8 = arith.constant 0 : index
    %10 = vector.load %arg6[%c0_6, %c0_7, %c0_8] : memref<1x36x4xf32, #tpu.memory_space<vmem>>, vector<1x36x4xf32>
    %11 = vector.shape_cast %10 : vector<1x36x4xf32> to vector<36x4xf32>
    %c0_9 = arith.constant 0 : index
    %c0_10 = arith.constant 0 : index
    %12 = vector.load %arg10[%c0_9, %c0_10] : memref<64x4xf32, #tpu.memory_space<vmem>>, vector<64x4xf32>
    %c0_11 = arith.constant 0 : index
    %c0_12 = arith.constant 0 : index
    %c0_13 = arith.constant 0 : index
    %c0_14 = arith.constant 0 : index
    %13 = vector.load %arg3[%c0_11, %c0_12, %c0_13, %c0_14] : memref<1x10x10x4xf32, #tpu.memory_space<vmem>>, vector<1x8x8x4xf32>
    %14 = vector.shape_cast %13 : vector<1x8x8x4xf32> to vector<8x8x4xf32>
    %15 = vector.shape_cast %14 : vector<8x8x4xf32> to vector<64x4xf32>
    %c0_15 = arith.constant 0 : index
    %c0_16 = arith.constant 0 : index
    %c0_17 = arith.constant 0 : index
    %c0_18 = arith.constant 0 : index
    %16 = vector.load %arg4[%c0_15, %c0_16, %c0_17, %c0_18] : memref<1x10x10x4xf32, #tpu.memory_space<vmem>>, vector<1x8x8x4xf32>
    %17 = vector.shape_cast %16 : vector<1x8x8x4xf32> to vector<8x8x4xf32>
    %18 = vector.shape_cast %17 : vector<8x8x4xf32> to vector<64x4xf32>
    %19 = vector.extract_strided_slice %9 {offsets = [0, 0], sizes = [4, 4], strides = [1, 1]} : vector<36x4xf32> to vector<4x4xf32>
    %cst = arith.constant dense<0.000000e+00> : vector<64x4xf32>
    %20 = tpu.matmul %15, %19, %cst {dimension_numbers = #tpu.dot_dimension_numbers<[1], [0], [0], [1], [0, 0, 1, 1], [], []>} : vector<64x4xf32>, vector<4x4xf32>, vector<64x4xf32> -> vector<64x4xf32>
    %21 = arith.addf %12, %20 : vector<64x4xf32>
    %22 = vector.extract_strided_slice %11 {offsets = [0, 0], sizes = [4, 4], strides = [1, 1]} : vector<36x4xf32> to vector<4x4xf32>
    %cst_19 = arith.constant dense<0.000000e+00> : vector<64x4xf32>
    %23 = tpu.matmul %18, %22, %cst_19 {dimension_numbers = #tpu.dot_dimension_numbers<[1], [0], [0], [1], [0, 0, 1, 1], [], []>} : vector<64x4xf32>, vector<4x4xf32>, vector<64x4xf32> -> vector<64x4xf32>
    %24 = arith.addf %21, %23 : vector<64x4xf32>
    %c0_20 = arith.constant 0 : index
    %c0_21 = arith.constant 0 : index
    %c1 = arith.constant 1 : index
    %c0_22 = arith.constant 0 : index
    %25 = vector.load %arg3[%c0_20, %c0_21, %c1, %c0_22] : memref<1x10x10x4xf32, #tpu.memory_space<vmem>>, vector<1x8x8x4xf32>
    %26 = vector.shape_cast %25 : vector<1x8x8x4xf32> to vector<8x8x4xf32>
    %27 = vector.shape_cast %26 : vector<8x8x4xf32> to vector<64x4xf32>
    %c0_23 = arith.constant 0 : index
    %c0_24 = arith.constant 0 : index
    %c1_25 = arith.constant 1 : index
    %c0_26 = arith.constant 0 : index
    %28 = vector.load %arg4[%c0_23, %c0_24, %c1_25, %c0_26] : memref<1x10x10x4xf32, #tpu.memory_space<vmem>>, vector<1x8x8x4xf32>
    %29 = vector.shape_cast %28 : vector<1x8x8x4xf32> to vector<8x8x4xf32>
    %30 = vector.shape_cast %29 : vector<8x8x4xf32> to vector<64x4xf32>
    %31 = vector.extract_strided_slice %9 {offsets = [4, 0], sizes = [4, 4], strides = [1, 1]} : vector<36x4xf32> to vector<4x4xf32>
    %cst_27 = arith.constant dense<0.000000e+00> : vector<64x4xf32>
    %32 = tpu.matmul %27, %31, %cst_27 {dimension_numbers = #tpu.dot_dimension_numbers<[1], [0], [0], [1], [0, 0, 1, 1], [], []>} : vector<64x4xf32>, vector<4x4xf32>, vector<64x4xf32> -> vector<64x4xf32>
    %33 = arith.addf %24, %32 : vector<64x4xf32>
    %34 = vector.extract_strided_slice %11 {offsets = [4, 0], sizes = [4, 4], strides = [1, 1]} : vector<36x4xf32> to vector<4x4xf32>
    %cst_28 = arith.constant dense<0.000000e+00> : vector<64x4xf32>
    %35 = tpu.matmul %30, %34, %cst_28 {dimension_numbers = #tpu.dot_dimension_numbers<[1], [0], [0], [1], [0, 0, 1, 1], [], []>} : vector<64x4xf32>, vector<4x4xf32>, vector<64x4xf32> -> vector<64x4xf32>
    %36 = arith.addf %33, %35 : vector<64x4xf32>
    %c0_29 = arith.constant 0 : index
    %c0_30 = arith.constant 0 : index
    %c2 = arith.constant 2 : index
    %c0_31 = arith.constant 0 : index
    %37 = vector.load %arg3[%c0_29, %c0_30, %c2, %c0_31] : memref<1x10x10x4xf32, #tpu.memory_space<vmem>>, vector<1x8x8x4xf32>
    %38 = vector.shape_cast %37 : vector<1x8x8x4xf32> to vector<8x8x4xf32>
    %39 = vector.shape_cast %38 : vector<8x8x4xf32> to vector<64x4xf32>
    %c0_32 = arith.constant 0 : index
    %c0_33 = arith.constant 0 : index
    %c2_34 = arith.constant 2 : index
    %c0_35 = arith.constant 0 : index
    %40 = vector.load %arg4[%c0_32, %c0_33, %c2_34, %c0_35] : memref<1x10x10x4xf32, #tpu.memory_space<vmem>>, vector<1x8x8x4xf32>
    %41 = vector.shape_cast %40 : vector<1x8x8x4xf32> to vector<8x8x4xf32>
    %42 = vector.shape_cast %41 : vector<8x8x4xf32> to vector<64x4xf32>
    %43 = vector.extract_strided_slice %9 {offsets = [8, 0], sizes = [4, 4], strides = [1, 1]} : vector<36x4xf32> to vector<4x4xf32>
    %cst_36 = arith.constant dense<0.000000e+00> : vector<64x4xf32>
    %44 = tpu.matmul %39, %43, %cst_36 {dimension_numbers = #tpu.dot_dimension_numbers<[1], [0], [0], [1], [0, 0, 1, 1], [], []>} : vector<64x4xf32>, vector<4x4xf32>, vector<64x4xf32> -> vector<64x4xf32>
    %45 = arith.addf %36, %44 : vector<64x4xf32>
    %46 = vector.extract_strided_slice %11 {offsets = [8, 0], sizes = [4, 4], strides = [1, 1]} : vector<36x4xf32> to vector<4x4xf32>
    %cst_37 = arith.constant dense<0.000000e+00> : vector<64x4xf32>
    %47 = tpu.matmul %42, %46, %cst_37 {dimension_numbers = #tpu.dot_dimension_numbers<[1], [0], [0], [1], [0, 0, 1, 1], [], []>} : vector<64x4xf32>, vector<4x4xf32>, vector<64x4xf32> -> vector<64x4xf32>
    %48 = arith.addf %45, %47 : vector<64x4xf32>
    %c0_38 = arith.constant 0 : index
    %c1_39 = arith.constant 1 : index
    %c0_40 = arith.constant 0 : index
    %c0_41 = arith.constant 0 : index
    %49 = vector.load %arg3[%c0_38, %c1_39, %c0_40, %c0_41] : memref<1x10x10x4xf32, #tpu.memory_space<vmem>>, vector<1x8x8x4xf32>
    %50 = vector.shape_cast %49 : vector<1x8x8x4xf32> to vector<8x8x4xf32>
    %51 = vector.shape_cast %50 : vector<8x8x4xf32> to vector<64x4xf32>
    %c0_42 = arith.constant 0 : index
    %c1_43 = arith.constant 1 : index
    %c0_44 = arith.constant 0 : index
    %c0_45 = arith.constant 0 : index
    %52 = vector.load %arg4[%c0_42, %c1_43, %c0_44, %c0_45] : memref<1x10x10x4xf32, #tpu.memory_space<vmem>>, vector<1x8x8x4xf32>
    %53 = vector.shape_cast %52 : vector<1x8x8x4xf32> to vector<8x8x4xf32>
    %54 = vector.shape_cast %53 : vector<8x8x4xf32> to vector<64x4xf32>
    %55 = vector.extract_strided_slice %9 {offsets = [12, 0], sizes = [4, 4], strides = [1, 1]} : vector<36x4xf32> to vector<4x4xf32>
    %cst_46 = arith.constant dense<0.000000e+00> : vector<64x4xf32>
    %56 = tpu.matmul %51, %55, %cst_46 {dimension_numbers = #tpu.dot_dimension_numbers<[1], [0], [0], [1], [0, 0, 1, 1], [], []>} : vector<64x4xf32>, vector<4x4xf32>, vector<64x4xf32> -> vector<64x4xf32>
    %57 = arith.addf %48, %56 : vector<64x4xf32>
    %58 = vector.extract_strided_slice %11 {offsets = [12, 0], sizes = [4, 4], strides = [1, 1]} : vector<36x4xf32> to vector<4x4xf32>
    %cst_47 = arith.constant dense<0.000000e+00> : vector<64x4xf32>
    %59 = tpu.matmul %54, %58, %cst_47 {dimension_numbers = #tpu.dot_dimension_numbers<[1], [0], [0], [1], [0, 0, 1, 1], [], []>} : vector<64x4xf32>, vector<4x4xf32>, vector<64x4xf32> -> vector<64x4xf32>
    %60 = arith.addf %57, %59 : vector<64x4xf32>
    %c0_48 = arith.constant 0 : index
    %c1_49 = arith.constant 1 : index
    %c1_50 = arith.constant 1 : index
    %c0_51 = arith.constant 0 : index
    %61 = vector.load %arg3[%c0_48, %c1_49, %c1_50, %c0_51] : memref<1x10x10x4xf32, #tpu.memory_space<vmem>>, vector<1x8x8x4xf32>
    %62 = vector.shape_cast %61 : vector<1x8x8x4xf32> to vector<8x8x4xf32>
    %63 = vector.shape_cast %62 : vector<8x8x4xf32> to vector<64x4xf32>
    %c0_52 = arith.constant 0 : index
    %c1_53 = arith.constant 1 : index
    %c1_54 = arith.constant 1 : index
    %c0_55 = arith.constant 0 : index
    %64 = vector.load %arg4[%c0_52, %c1_53, %c1_54, %c0_55] : memref<1x10x10x4xf32, #tpu.memory_space<vmem>>, vector<1x8x8x4xf32>
    %65 = vector.shape_cast %64 : vector<1x8x8x4xf32> to vector<8x8x4xf32>
    %66 = vector.shape_cast %65 : vector<8x8x4xf32> to vector<64x4xf32>
    %67 = vector.extract_strided_slice %9 {offsets = [16, 0], sizes = [4, 4], strides = [1, 1]} : vector<36x4xf32> to vector<4x4xf32>
    %cst_56 = arith.constant dense<0.000000e+00> : vector<64x4xf32>
    %68 = tpu.matmul %63, %67, %cst_56 {dimension_numbers = #tpu.dot_dimension_numbers<[1], [0], [0], [1], [0, 0, 1, 1], [], []>} : vector<64x4xf32>, vector<4x4xf32>, vector<64x4xf32> -> vector<64x4xf32>
    %69 = arith.addf %60, %68 : vector<64x4xf32>
    %70 = vector.extract_strided_slice %11 {offsets = [16, 0], sizes = [4, 4], strides = [1, 1]} : vector<36x4xf32> to vector<4x4xf32>
    %cst_57 = arith.constant dense<0.000000e+00> : vector<64x4xf32>
    %71 = tpu.matmul %66, %70, %cst_57 {dimension_numbers = #tpu.dot_dimension_numbers<[1], [0], [0], [1], [0, 0, 1, 1], [], []>} : vector<64x4xf32>, vector<4x4xf32>, vector<64x4xf32> -> vector<64x4xf32>
    %72 = arith.addf %69, %71 : vector<64x4xf32>
    %c0_58 = arith.constant 0 : index
    %c1_59 = arith.constant 1 : index
    %c2_60 = arith.constant 2 : index
    %c0_61 = arith.constant 0 : index
    %73 = vector.load %arg3[%c0_58, %c1_59, %c2_60, %c0_61] : memref<1x10x10x4xf32, #tpu.memory_space<vmem>>, vector<1x8x8x4xf32>
    %74 = vector.shape_cast %73 : vector<1x8x8x4xf32> to vector<8x8x4xf32>
    %75 = vector.shape_cast %74 : vector<8x8x4xf32> to vector<64x4xf32>
    %c0_62 = arith.constant 0 : index
    %c1_63 = arith.constant 1 : index
    %c2_64 = arith.constant 2 : index
    %c0_65 = arith.constant 0 : index
    %76 = vector.load %arg4[%c0_62, %c1_63, %c2_64, %c0_65] : memref<1x10x10x4xf32, #tpu.memory_space<vmem>>, vector<1x8x8x4xf32>
    %77 = vector.shape_cast %76 : vector<1x8x8x4xf32> to vector<8x8x4xf32>
    %78 = vector.shape_cast %77 : vector<8x8x4xf32> to vector<64x4xf32>
    %79 = vector.extract_strided_slice %9 {offsets = [20, 0], sizes = [4, 4], strides = [1, 1]} : vector<36x4xf32> to vector<4x4xf32>
    %cst_66 = arith.constant dense<0.000000e+00> : vector<64x4xf32>
    %80 = tpu.matmul %75, %79, %cst_66 {dimension_numbers = #tpu.dot_dimension_numbers<[1], [0], [0], [1], [0, 0, 1, 1], [], []>} : vector<64x4xf32>, vector<4x4xf32>, vector<64x4xf32> -> vector<64x4xf32>
    %81 = arith.addf %72, %80 : vector<64x4xf32>
    %82 = vector.extract_strided_slice %11 {offsets = [20, 0], sizes = [4, 4], strides = [1, 1]} : vector<36x4xf32> to vector<4x4xf32>
    %cst_67 = arith.constant dense<0.000000e+00> : vector<64x4xf32>
    %83 = tpu.matmul %78, %82, %cst_67 {dimension_numbers = #tpu.dot_dimension_numbers<[1], [0], [0], [1], [0, 0, 1, 1], [], []>} : vector<64x4xf32>, vector<4x4xf32>, vector<64x4xf32> -> vector<64x4xf32>
    %84 = arith.addf %81, %83 : vector<64x4xf32>
    %c0_68 = arith.constant 0 : index
    %c2_69 = arith.constant 2 : index
    %c0_70 = arith.constant 0 : index
    %c0_71 = arith.constant 0 : index
    %85 = vector.load %arg3[%c0_68, %c2_69, %c0_70, %c0_71] : memref<1x10x10x4xf32, #tpu.memory_space<vmem>>, vector<1x8x8x4xf32>
    %86 = vector.shape_cast %85 : vector<1x8x8x4xf32> to vector<8x8x4xf32>
    %87 = vector.shape_cast %86 : vector<8x8x4xf32> to vector<64x4xf32>
    %c0_72 = arith.constant 0 : index
    %c2_73 = arith.constant 2 : index
    %c0_74 = arith.constant 0 : index
    %c0_75 = arith.constant 0 : index
    %88 = vector.load %arg4[%c0_72, %c2_73, %c0_74, %c0_75] : memref<1x10x10x4xf32, #tpu.memory_space<vmem>>, vector<1x8x8x4xf32>
    %89 = vector.shape_cast %88 : vector<1x8x8x4xf32> to vector<8x8x4xf32>
    %90 = vector.shape_cast %89 : vector<8x8x4xf32> to vector<64x4xf32>
    %91 = vector.extract_strided_slice %9 {offsets = [24, 0], sizes = [4, 4], strides = [1, 1]} : vector<36x4xf32> to vector<4x4xf32>
    %cst_76 = arith.constant dense<0.000000e+00> : vector<64x4xf32>
    %92 = tpu.matmul %87, %91, %cst_76 {dimension_numbers = #tpu.dot_dimension_numbers<[1], [0], [0], [1], [0, 0, 1, 1], [], []>} : vector<64x4xf32>, vector<4x4xf32>, vector<64x4xf32> -> vector<64x4xf32>
    %93 = arith.addf %84, %92 : vector<64x4xf32>
    %94 = vector.extract_strided_slice %11 {offsets = [24, 0], sizes = [4, 4], strides = [1, 1]} : vector<36x4xf32> to vector<4x4xf32>
    %cst_77 = arith.constant dense<0.000000e+00> : vector<64x4xf32>
    %95 = tpu.matmul %90, %94, %cst_77 {dimension_numbers = #tpu.dot_dimension_numbers<[1], [0], [0], [1], [0, 0, 1, 1], [], []>} : vector<64x4xf32>, vector<4x4xf32>, vector<64x4xf32> -> vector<64x4xf32>
    %96 = arith.addf %93, %95 : vector<64x4xf32>
    %c0_78 = arith.constant 0 : index
    %c2_79 = arith.constant 2 : index
    %c1_80 = arith.constant 1 : index
    %c0_81 = arith.constant 0 : index
    %97 = vector.load %arg3[%c0_78, %c2_79, %c1_80, %c0_81] : memref<1x10x10x4xf32, #tpu.memory_space<vmem>>, vector<1x8x8x4xf32>
    %98 = vector.shape_cast %97 : vector<1x8x8x4xf32> to vector<8x8x4xf32>
    %99 = vector.shape_cast %98 : vector<8x8x4xf32> to vector<64x4xf32>
    %c0_82 = arith.constant 0 : index
    %c2_83 = arith.constant 2 : index
    %c1_84 = arith.constant 1 : index
    %c0_85 = arith.constant 0 : index
    %100 = vector.load %arg4[%c0_82, %c2_83, %c1_84, %c0_85] : memref<1x10x10x4xf32, #tpu.memory_space<vmem>>, vector<1x8x8x4xf32>
    %101 = vector.shape_cast %100 : vector<1x8x8x4xf32> to vector<8x8x4xf32>
    %102 = vector.shape_cast %101 : vector<8x8x4xf32> to vector<64x4xf32>
    %103 = vector.extract_strided_slice %9 {offsets = [28, 0], sizes = [4, 4], strides = [1, 1]} : vector<36x4xf32> to vector<4x4xf32>
    %cst_86 = arith.constant dense<0.000000e+00> : vector<64x4xf32>
    %104 = tpu.matmul %99, %103, %cst_86 {dimension_numbers = #tpu.dot_dimension_numbers<[1], [0], [0], [1], [0, 0, 1, 1], [], []>} : vector<64x4xf32>, vector<4x4xf32>, vector<64x4xf32> -> vector<64x4xf32>
    %105 = arith.addf %96, %104 : vector<64x4xf32>
    %106 = vector.extract_strided_slice %11 {offsets = [28, 0], sizes = [4, 4], strides = [1, 1]} : vector<36x4xf32> to vector<4x4xf32>
    %cst_87 = arith.constant dense<0.000000e+00> : vector<64x4xf32>
    %107 = tpu.matmul %102, %106, %cst_87 {dimension_numbers = #tpu.dot_dimension_numbers<[1], [0], [0], [1], [0, 0, 1, 1], [], []>} : vector<64x4xf32>, vector<4x4xf32>, vector<64x4xf32> -> vector<64x4xf32>
    %108 = arith.addf %105, %107 : vector<64x4xf32>
    %c0_88 = arith.constant 0 : index
    %c2_89 = arith.constant 2 : index
    %c2_90 = arith.constant 2 : index
    %c0_91 = arith.constant 0 : index
    %109 = vector.load %arg3[%c0_88, %c2_89, %c2_90, %c0_91] : memref<1x10x10x4xf32, #tpu.memory_space<vmem>>, vector<1x8x8x4xf32>
    %110 = vector.shape_cast %109 : vector<1x8x8x4xf32> to vector<8x8x4xf32>
    %111 = vector.shape_cast %110 : vector<8x8x4xf32> to vector<64x4xf32>
    %c0_92 = arith.constant 0 : index
    %c2_93 = arith.constant 2 : index
    %c2_94 = arith.constant 2 : index
    %c0_95 = arith.constant 0 : index
    %112 = vector.load %arg4[%c0_92, %c2_93, %c2_94, %c0_95] : memref<1x10x10x4xf32, #tpu.memory_space<vmem>>, vector<1x8x8x4xf32>
    %113 = vector.shape_cast %112 : vector<1x8x8x4xf32> to vector<8x8x4xf32>
    %114 = vector.shape_cast %113 : vector<8x8x4xf32> to vector<64x4xf32>
    %115 = vector.extract_strided_slice %9 {offsets = [32, 0], sizes = [4, 4], strides = [1, 1]} : vector<36x4xf32> to vector<4x4xf32>
    %cst_96 = arith.constant dense<0.000000e+00> : vector<64x4xf32>
    %116 = tpu.matmul %111, %115, %cst_96 {dimension_numbers = #tpu.dot_dimension_numbers<[1], [0], [0], [1], [0, 0, 1, 1], [], []>} : vector<64x4xf32>, vector<4x4xf32>, vector<64x4xf32> -> vector<64x4xf32>
    %117 = arith.addf %108, %116 : vector<64x4xf32>
    %118 = vector.extract_strided_slice %11 {offsets = [32, 0], sizes = [4, 4], strides = [1, 1]} : vector<36x4xf32> to vector<4x4xf32>
    %cst_97 = arith.constant dense<0.000000e+00> : vector<64x4xf32>
    %119 = tpu.matmul %114, %118, %cst_97 {dimension_numbers = #tpu.dot_dimension_numbers<[1], [0], [0], [1], [0, 0, 1, 1], [], []>} : vector<64x4xf32>, vector<4x4xf32>, vector<64x4xf32> -> vector<64x4xf32>
    %120 = arith.addf %117, %119 : vector<64x4xf32>
    %c0_98 = arith.constant 0 : index
    %c0_99 = arith.constant 0 : index
    %121 = vector.load %arg10[%c0_98, %c0_99] : memref<64x4xf32, #tpu.memory_space<vmem>>, vector<64x4xf32>
    tpu.vector_store %arg10[%c0_98, %c0_99], %120 {strides = array<i32>} : memref<64x4xf32, #tpu.memory_space<vmem>>, vector<64x4xf32>,
    %c2_i32 = arith.constant 2 : i32
    %122 = arith.cmpi eq, %arg2, %c2_i32 : i32
    %123 = arith.extui %122 : i1 to i32
    %c0_i32_100 = arith.constant 0 : i32
    %124 = arith.cmpi ne, %123, %c0_i32_100 : i32
    scf.if %124 {
      %c0_101 = arith.constant 0 : index
      %c0_102 = arith.constant 0 : index
      %125 = vector.load %arg10[%c0_101, %c0_102] : memref<64x4xf32, #tpu.memory_space<vmem>>, vector<64x4xf32>
      %c0_103 = arith.constant 0 : index
      %c0_104 = arith.constant 0 : index
      %c0_105 = arith.constant 0 : index
      %126 = vector.load %arg7[%c0_103, %c0_104, %c0_105] : memref<1x64x4xf32, #tpu.memory_space<vmem>>, vector<1x64x4xf32>
      %127 = vector.shape_cast %126 : vector<1x64x4xf32> to vector<64x4xf32>
      %128 = vector.shape_cast %125 : vector<64x4xf32> to vector<1x64x4xf32>
      tpu.vector_store %arg7[%c0_103, %c0_104, %c0_105], %128 {strides = array<i32>} : memref<1x64x4xf32, #tpu.memory_space<vmem>>, vector<1x64x4xf32>,
      %c0_106 = arith.constant 0 : index
      %c0_107 = arith.constant 0 : index
      %c0_108 = arith.constant 0 : index
      %129 = vector.load %arg8[%c0_106, %c0_107, %c0_108] : memref<1x1x4xf32, #tpu.memory_space<vmem>>, vector<1x1x4xf32>
      %cst_109 = arith.constant dense<0.000000e+00> : vector<4xf32>
      %130 = vector.multi_reduction <add>, %125, %cst_109 [0] : vector<64x4xf32> to vector<4xf32>
      %131 = vector.shape_cast %130 : vector<4xf32> to vector<1x1x4xf32>
      %132 = arith.addf %129, %131 : vector<1x1x4xf32>
      %c0_110 = arith.constant 0 : index
      %c0_111 = arith.constant 0 : index
      %c0_112 = arith.constant 0 : index
      %133 = vector.load %arg8[%c0_110, %c0_111, %c0_112] : memref<1x1x4xf32, #tpu.memory_space<vmem>>, vector<1x1x4xf32>
      tpu.vector_store %arg8[%c0_110, %c0_111, %c0_112], %132 {strides = array<i32>} : memref<1x1x4xf32, #tpu.memory_space<vmem>>, vector<1x1x4xf32>,
      %c0_113 = arith.constant 0 : index
      %c0_114 = arith.constant 0 : index
      %c0_115 = arith.constant 0 : index
      %134 = vector.load %arg9[%c0_113, %c0_114, %c0_115] : memref<1x1x4xf32, #tpu.memory_space<vmem>>, vector<1x1x4xf32>
      %135 = arith.mulf %125, %125 : vector<64x4xf32>
      %cst_116 = arith.constant dense<0.000000e+00> : vector<4xf32>
      %136 = vector.multi_reduction <add>, %135, %cst_116 [0] : vector<64x4xf32> to vector<4xf32>
      %137 = vector.shape_cast %136 : vector<4xf32> to vector<1x1x4xf32>
      %138 = arith.addf %134, %137 : vector<1x1x4xf32>
      %c0_117 = arith.constant 0 : index
      %c0_118 = arith.constant 0 : index
      %c0_119 = arith.constant 0 : index
      %139 = vector.load %arg9[%c0_117, %c0_118, %c0_119] : memref<1x1x4xf32, #tpu.memory_space<vmem>>, vector<1x1x4xf32>
      tpu.vector_store %arg9[%c0_117, %c0_118, %c0_119], %138 {strides = array<i32>} : memref<1x1x4xf32, #tpu.memory_space<vmem>>, vector<1x1x4xf32>,
    } else {
    }
    return
  }
  func.func @transform_0(%arg0: i32, %arg1: i32, %arg2: i32) -> (i32, i32, i32, i32) {
    %c10_i32 = arith.constant 10 : i32
    %0 = arith.muli %arg0, %c10_i32 : i32
    %1 = arith.addi %0, %arg1 : i32
    %2 = arith.addi %1, %arg2 : i32
    %c0_i32 = arith.constant 0 : i32
    %c0_i32_0 = arith.constant 0 : i32
    %c0_i32_1 = arith.constant 0 : i32
    %c0_i32_2 = arith.constant 0 : i32
    return %2, %c0_i32, %c0_i32_0, %c0_i32_1 : i32, i32, i32, i32
  }
  func.func @transform_1(%arg0: i32, %arg1: i32, %arg2: i32) -> (i32, i32, i32, i32) {
    %c10_i32 = arith.constant 10 : i32
    %0 = arith.muli %arg0, %c10_i32 : i32
    %1 = arith.addi %0, %arg1 : i32
    %2 = arith.addi %1, %arg2 : i32
    %c0_i32 = arith.constant 0 : i32
    %c0_i32_0 = arith.constant 0 : i32
    %c0_i32_1 = arith.constant 0 : i32
    %c0_i32_2 = arith.constant 0 : i32
    return %2, %c0_i32, %c0_i32_0, %c0_i32_1 : i32, i32, i32, i32
  }
  func.func @transform_2(%arg0: i32, %arg1: i32, %arg2: i32) -> (i32, i32, i32) {
    %c0_i32 = arith.constant 0 : i32
    %c0_i32_0 = arith.constant 0 : i32
    %c0_i32_1 = arith.constant 0 : i32
    return %arg2, %c0_i32, %c0_i32_0 : i32, i32, i32
  }
  func.func @transform_3(%arg0: i32, %arg1: i32, %arg2: i32) -> (i32, i32, i32) {
    %c0_i32 = arith.constant 0 : i32
    %c0_i32_0 = arith.constant 0 : i32
    %c0_i32_1 = arith.constant 0 : i32
    return %arg2, %c0_i32, %c0_i32_0 : i32, i32, i32
  }
  func.func @transform_4(%arg0: i32, %arg1: i32, %arg2: i32) -> (i32, i32, i32) {
    %c8_i32 = arith.constant 8 : i32
    %0 = arith.muli %arg0, %c8_i32 : i32
    %1 = arith.addi %0, %arg1 : i32
    %c0_i32 = arith.constant 0 : i32
    %c0_i32_0 = arith.constant 0 : i32
    %c0_i32_1 = arith.constant 0 : i32
    return %1, %c0_i32, %c0_i32_0 : i32, i32, i32
  }
  func.func @transform_5(%arg0: i32, %arg1: i32, %arg2: i32) -> (i32, i32, i32) {
    %c0_i32 = arith.constant 0 : i32
    %c0_i32_0 = arith.constant 0 : i32
    %c0_i32_1 = arith.constant 0 : i32
    return %arg0, %c0_i32, %c0_i32_0 : i32, i32, i32
  }
  func.func @transform_6(%arg0: i32, %arg1: i32, %arg2: i32) -> (i32, i32, i32) {
    %c0_i32 = arith.constant 0 : i32
    %c0_i32_0 = arith.constant 0 : i32
    %c0_i32_1 = arith.constant 0 : i32
    return %arg0, %c0_i32, %c0_i32_0 : i32, i32, i32
  }
}

</mosaic_0001>

<llo_original>
// kernel: tile.35
$region0: #{tile.35}
  #allocation0 [shape = 's32[1]{0}', space=sflag, size = 0x4, scoped, tag = 'scoped memory for tile.35']
  %s0 = inlined_call_operand.vmem [shape: f32[4], index: 0, kind: input, shape index: {}]
  %s1 = inlined_call_operand.vmem [shape: f32[8,4], index: 1, kind: output, shape index: {}]
  // Predicated region
  $region2: #{tile.35} parent=0 // pred_check
    _
  $region3: #{tile.35} parent=0 // pred_check_branch
    %3 = sbr.rel (0) target = $region5
  $region4: #{tile.35} parent=0 // pred_region
    _
  $region5: #{tile.35} parent=0 // pred_fallthru
    _
  %v4 = vld [vmem:[%s0] ss:$0 sm:$0xff]
  %5 = vst [vmem:[%s1] sm:$0xff] %v4

// kernel: tile.42
$region0: #{tile.42}
  %s0 = inlined_call_operand.vmem [shape: f32[8,4], index: 0, kind: input, shape index: {}]
  %s1 = inlined_call_operand.vmem [shape: f32[32], index: 1, kind: output, shape index: {}]
  $region1: #{tile.42} parent=0
    #allocation0 [shape = 'u8[4096]{0}', space=vmem, size = 0x1000, scoped, tag = 'scoped mem for output reshape']
    %v2 = vld [vmem:[%s0] sm:$0x1]
    %vm3 = vcmask 31744
    %4 = vst.msk [vmem:[#allocation0] sm:$0x1] %vm3, %v2
    %s5 = scalar_lea.vmem %s0, 7
    %v6 = vld [vmem:[%s5] sm:$0x1]
    %7 = vrot.lane.b32.xlu0 %v6, 28
    %v8 = vpop.permute.xlu0 %7
    %vm9 = vcmask 261344
    %10 = vst.msk [vmem:[#allocation0] sm:$0x1] %vm9, %v8
    %s11 = scalar_lea.vmem %s0, 6
    %v12 = vld [vmem:[%s11] sm:$0x1]
    %13 = vrot.lane.b32.xlu0 %v12, 24
    %v14 = vpop.permute.xlu0 %13
    %vm15 = vcmask 228544
    %16 = vst.msk [vmem:[#allocation0] sm:$0x1] %vm15, %v14
    %s17 = scalar_lea.vmem %s0, 5
    %v18 = vld [vmem:[%s17] sm:$0x1]
    %19 = vrot.lane.b32.xlu0 %v18, 20
    %v20 = vpop.permute.xlu0 %19
    %vm21 = vcmask 195744
    %22 = vst.msk [vmem:[#allocation0] sm:$0x1] %vm21, %v20
    %s23 = scalar_lea.vmem %s0, 4
    %v24 = vld [vmem:[%s23] sm:$0x1]
    %25 = vrot.lane.b32.xlu0 %v24, 16
    %v26 = vpop.permute.xlu0 %25
    %vm27 = vcmask 162944
    %28 = vst.msk [vmem:[#allocation0] sm:$0x1] %vm27, %v26
    %s29 = scalar_lea.vmem %s0, 3
    %v30 = vld [vmem:[%s29] sm:$0x1]
    %31 = vrot.lane.b32.xlu0 %v30, 12
    %v32 = vpop.permute.xlu0 %31
    %vm33 = vcmask 130144
    %34 = vst.msk [vmem:[#allocation0] sm:$0x1] %vm33, %v32
    %s35 = scalar_lea.vmem %s0, 2
    %v36 = vld [vmem:[%s35] sm:$0x1]
    %37 = vrot.lane.b32.xlu0 %v36, 8
    %v38 = vpop.permute.xlu0 %37
    %vm39 = vcmask 97344
    %40 = vst.msk [vmem:[#allocation0] sm:$0x1] %vm39, %v38
    %s41 = scalar_lea.vmem %s0, 1
    %v42 = vld [vmem:[%s41] sm:$0x1]
    %43 = vrot.lane.b32.xlu0 %v42, 4
    %v44 = vpop.permute.xlu0 %43
    %vm45 = vcmask 64544
    %46 = vst.msk [vmem:[#allocation0] sm:$0x1] %vm45, %v44
    %s48 = sshll.u32 1, 1
    %s49 = ssub.s32 %s48, 1
    %v51 = vld [vmem:[#allocation0] sm:%s49]
    %s52 = sshll.u32 1, 1
    %s53 = ssub.s32 %s52, 1
    %54 = vst [vmem:[%s1] sm:%s53] %v51

// kernel: tile.43
$region0: #{tile.43}
  #allocation0 [shape = 's32[1]{0}', space=sflag, size = 0x4, scoped, tag = 'scoped memory for tile.43']
  %s0 = inlined_call_operand.vmem [shape: f32[32], index: 0, kind: input, shape index: {}]
  %s1 = inlined_call_operand.vmem [shape: f32[4,32], index: 1, kind: output, shape index: {}]
  // Predicated region
  $region2: #{tile.43} parent=0 // pred_check
    _
  $region3: #{tile.43} parent=0 // pred_check_branch
    %3 = sbr.rel (0) target = $region5
  $region4: #{tile.43} parent=0 // pred_region
    _
  $region5: #{tile.43} parent=0 // pred_fallthru
    _
  %v4 = vld [vmem:[%s0] ss:$0 sm:$0xff]
  %5 = vst [vmem:[%s1] sm:$0xf] %v4

// kernel: tile.45
$region0: #{tile.45}
  %s0 = inlined_call_operand.vmem [shape: f32[4,32], index: 0, kind: input, shape index: {}]
  %s1 = inlined_call_operand.vmem [shape: f32[1,128], index: 1, kind: output, shape index: {}]
  $region1: #{tile.45} parent=0
    #allocation0 [shape = 'u8[4096]{0}', space=vmem, size = 0x1000, scoped, tag = 'scoped mem for output reshape']
    #allocation1 [shape = 'u8[4096]{0}', space=vmem, size = 0x1000, scoped, tag = 'scoped mem for input reshape']
    %s3 = sshll.u32 1, 4
    %s4 = ssub.s32 %s3, 1
    %v5 = vld [vmem:[%s0] sm:%s4]
    %6 = vst [vmem:[#allocation1] sm:%s4] %v5
    %v7 = vld [vmem:[#allocation1] sm:$0x1]
    %vm8 = vcmask 261120
    %9 = vst.msk [vmem:[#allocation0] sm:$0x1] %vm8, %v7
    %s10 = scalar_lea.vmem [#allocation1], 3
    %v11 = vld [vmem:[%s10] sm:$0x1]
    %12 = vrot.lane.b32.xlu0 %v11, 96
    %v13 = vpop.permute.xlu0 %12
    %vm14 = vcmask 1048320
    %15 = vst.msk [vmem:[#allocation0] sm:$0x1] %vm14, %v13
    %s16 = scalar_lea.vmem [#allocation1], 2
    %v17 = vld [vmem:[%s16] sm:$0x1]
    %18 = vrot.lane.b32.xlu0 %v17, 64
    %v19 = vpop.permute.xlu0 %18
    %vm20 = vcmask 785920
    %21 = vst.msk [vmem:[#allocation0] sm:$0x1] %vm20, %v19
    %s22 = scalar_lea.vmem [#allocation1], 1
    %v23 = vld [vmem:[%s22] sm:$0x1]
    %24 = vrot.lane.b32.xlu0 %v23, 32
    %v25 = vpop.permute.xlu0 %24
    %vm26 = vcmask 523520
    %27 = vst.msk [vmem:[#allocation0] sm:$0x1] %vm26, %v25
    %s29 = sshll.u32 1, 1
    %s30 = ssub.s32 %s29, 1
    %v32 = vld [vmem:[#allocation0] sm:%s30]
    %s33 = sshll.u32 1, 1
    %s34 = ssub.s32 %s33, 1
    %35 = vst [vmem:[%s1] sm:%s34] %v32

// kernel: decoder_block_forward.5
$region0: #{decoder_block_forward.5}
  #allocation0 [shape = 'u32[]', space=smem, size = 0x4, offset = 0x4, fixed_abs, tag = 'smem constant byte address 0x4 - core index']
  #allocation1 [shape = 'u32[144,128]{1,0:T(1,128)}', space=vmem, size = 0x12000, scoped, tag = 'internal scratch']
  %s0 = inlined_call_operand.vmem [shape: f32[32,128], index: 0, kind: input, shape index: {}]
  %s1 = inlined_call_operand.vmem [shape: f32[1,128], index: 1, kind: input, shape index: {}]
  %s2 = inlined_call_operand.vmem [shape: f32[1,128], index: 2, kind: input, shape index: {}]
  %s3 = inlined_call_operand.vmem [shape: f32[32,128], index: 3, kind: output, shape index: {}]
  %s4 = sld [smem:[#allocation0]]
  $region22: #{decoder_block_forward.5} parent=0
    _
  %s6 = ssub.s32 1, %s4
  %s7 = scalar_select 0, %s6, %s4
  // Predicated region
  $region2: #{decoder_block_forward.5} parent=0 // pred_check
    _
  $region3: #{decoder_block_forward.5} parent=0 // pred_check_branch
    %9 = sbr.rel (0) target = $region5
  $region4: #{decoder_block_forward.5} parent=0 // pred_region
    _
  $region5: #{decoder_block_forward.5} parent=0 // pred_fallthru
    _
  // Predicated region
  $region6: #{decoder_block_forward.5} parent=0 // pred_check
    _
  $region7: #{decoder_block_forward.5} parent=0 // pred_check_branch
    %11 = sbr.rel (0) target = $region9
  $region8: #{decoder_block_forward.5} parent=0 // pred_region
    _
  $region9: #{decoder_block_forward.5} parent=0 // pred_fallthru
    _
  // Predicated region
  $region10: #{decoder_block_forward.5} parent=0 // pred_check
    _
  $region11: #{decoder_block_forward.5} parent=0 // pred_check_branch
    %13 = sbr.rel (0) target = $region13
  $region12: #{decoder_block_forward.5} parent=0 // pred_region
    _
  $region13: #{decoder_block_forward.5} parent=0 // pred_fallthru
    _
  %v14 = vld [vmem:[%s0] sm:$0xff]
  %v15 = vld [vmem:[%s0 + $0x8] sm:$0xff]
  %v16 = vld [vmem:[%s0 + $0x10] sm:$0xff]
  %v17 = vld [vmem:[%s0 + $0x18] sm:$0xff]
  %v18 = vld [vmem:[%s1] sm:$0x1]
  %v20 = vlaneseq
  %v21 = vshrl.u32 %v20, 7
  %v22 = vsub.s32 0, %v21
  %v23 = vrot.slane %v18, %v22
  %v25 = vmul.f32 %v14, %v23
  %v26 = vmul.f32 %v15, %v23
  %v27 = vmul.f32 %v16, %v23
  %v28 = vmul.f32 %v17, %v23
  %v29 = vld [vmem:[%s2] sm:$0x1]
  %v31 = vlaneseq
  %v32 = vshrl.u32 %v31, 7
  %v33 = vsub.s32 0, %v32
  %v34 = vrot.slane %v29, %v33
  %v36 = vadd.f32 %v25, %v34
  %v37 = vadd.f32 %v26, %v34
  %v38 = vadd.f32 %v27, %v34
  %v39 = vadd.f32 %v28, %v34
  %v40 = vmax.f32 %v36, 0.0
  %v41 = vmax.f32 %v37, 0.0
  %v42 = vmax.f32 %v38, 0.0
  %v43 = vmax.f32 %v39, 0.0
  %44 = vst [vmem:[%s3] sm:$0xff] %v40
  %45 = vst [vmem:[%s3 + $0x8] sm:$0xff] %v41
  %46 = vst [vmem:[%s3 + $0x10] sm:$0xff] %v42
  %47 = vst [vmem:[%s3 + $0x18] sm:$0xff] %v43
  // Predicated region
  $region14: #{decoder_block_forward.5} parent=0 // pred_check
    _
  $region15: #{decoder_block_forward.5} parent=0 // pred_check_branch
    %49 = sbr.rel (0) target = $region17
  $region16: #{decoder_block_forward.5} parent=0 // pred_region
    _
  $region17: #{decoder_block_forward.5} parent=0 // pred_fallthru
    _
  // Predicated region
  $region18: #{decoder_block_forward.5} parent=0 // pred_check
    _
  $region19: #{decoder_block_forward.5} parent=0 // pred_check_branch
    %51 = sbr.rel (0) target = $region21
  $region20: #{decoder_block_forward.5} parent=0 // pred_region
    _
  $region21: #{decoder_block_forward.5} parent=0 // pred_fallthru
    _

// kernel: decoder_block_forward.4
$region0: #{decoder_block_forward.4}
  #allocation0 [shape = 'u32[]', space=smem, size = 0x4, offset = 0x4, fixed_abs, tag = 'smem constant byte address 0x4 - core index']
  #allocation1 [shape = 'u32[144,128]{1,0:T(1,128)}', space=vmem, size = 0x12000, scoped, tag = 'internal scratch']
  %s0 = inlined_call_operand.vmem [shape: bf16[128,8], index: 0, kind: input, shape index: {}]
  %s1 = inlined_call_operand.vmem [shape: bf16[8,32], index: 1, kind: input, shape index: {}]
  %s2 = inlined_call_operand.vmem [shape: f32[128,32], index: 2, kind: output, shape index: {0}]
  %s3 = inlined_call_operand.vmem [shape: f32[1,1,32], index: 3, kind: output, shape index: {1}]
  %s4 = inlined_call_operand.vmem [shape: f32[1,1,32], index: 4, kind: output, shape index: {2}]
  %5 = xla_tuple %s2, %s3, %s4
  %s6 = sld [smem:[#allocation0]]
  $region34: #{decoder_block_forward.4} parent=0
    _
  %s8 = ssub.s32 1, %s6
  %s9 = scalar_select 0, %s8, %s6
  // Predicated region
  $region2: #{decoder_block_forward.4} parent=0 // pred_check
    _
  $region3: #{decoder_block_forward.4} parent=0 // pred_check_branch
    %11 = sbr.rel (0) target = $region5
  $region4: #{decoder_block_forward.4} parent=0 // pred_region
    _
  $region5: #{decoder_block_forward.4} parent=0 // pred_fallthru
    _
  // Predicated region
  $region6: #{decoder_block_forward.4} parent=0 // pred_check
    _
  $region7: #{decoder_block_forward.4} parent=0 // pred_check_branch
    %13 = sbr.rel (0) target = $region9
  $region8: #{decoder_block_forward.4} parent=0 // pred_region
    _
  $region9: #{decoder_block_forward.4} parent=0 // pred_fallthru
    _
  %v15 = vld [vmem:[%s0] sm:$0xf]
  %v16 = vld [vmem:[%s0 + $0x4] sm:$0xf]
  %v17 = vld [vmem:[%s0 + $0x8] sm:$0xf]
  %v18 = vld [vmem:[%s0 + $0xc] sm:$0xf]
  %v19 = vld [vmem:[%s0 + $0x10] sm:$0xf]
  %v20 = vld [vmem:[%s0 + $0x14] sm:$0xf]
  %v21 = vld [vmem:[%s0 + $0x18] sm:$0xf]
  %v22 = vld [vmem:[%s0 + $0x1c] sm:$0xf]
  %v23 = vld [vmem:[%s0 + $0x20] sm:$0xf]
  %v24 = vld [vmem:[%s0 + $0x24] sm:$0xf]
  %v25 = vld [vmem:[%s0 + $0x28] sm:$0xf]
  %v26 = vld [vmem:[%s0 + $0x2c] sm:$0xf]
  %v27 = vld [vmem:[%s0 + $0x30] sm:$0xf]
  %v28 = vld [vmem:[%s0 + $0x34] sm:$0xf]
  %v29 = vld [vmem:[%s0 + $0x38] sm:$0xf]
  %v30 = vld [vmem:[%s0 + $0x3c] sm:$0xf]
  %v31 = vld [vmem:[%s1] sm:$0xf]
  %v48 = vunpack.c.l.b16 %v15
  %v49 = vunpack.c.l.b16 %v16
  %v50 = vunpack.c.l.b16 %v17
  %v51 = vunpack.c.l.b16 %v18
  %v52 = vunpack.c.l.b16 %v19
  %v53 = vunpack.c.l.b16 %v20
  %v54 = vunpack.c.l.b16 %v21
  %v55 = vunpack.c.l.b16 %v22
  %v56 = vunpack.c.l.b16 %v23
  %v57 = vunpack.c.l.b16 %v24
  %v58 = vunpack.c.l.b16 %v25
  %v59 = vunpack.c.l.b16 %v26
  %v60 = vunpack.c.l.b16 %v27
  %v61 = vunpack.c.l.b16 %v28
  %v62 = vunpack.c.l.b16 %v29
  %v63 = vunpack.c.l.b16 %v30
  %v64 = vpack.c.b16 %v49, %v48
  %v65 = vpack.c.b16 %v51, %v50
  %v66 = vpack.c.b16 %v53, %v52
  %v67 = vpack.c.b16 %v55, %v54
  %v68 = vpack.c.b16 %v57, %v56
  %v69 = vpack.c.b16 %v59, %v58
  %v70 = vpack.c.b16 %v61, %v60
  %v71 = vpack.c.b16 %v63, %v62
  %vm72 = vcmask 64512
  %v74 = vsel %vm72, %v64, 0
  %v77 = vsel %vm72, %v65, 0
  %v80 = vsel %vm72, %v66, 0
  %v83 = vsel %vm72, %v67, 0
  %v86 = vsel %vm72, %v68, 0
  %v89 = vsel %vm72, %v69, 0
  %v92 = vsel %vm72, %v70, 0
  %v95 = vsel %vm72, %v71, 0
  %vm97 = vcmask 1043456
  %v99 = vsel %vm97, %v31, 0
  %101 = vmatprep.subr.bf16.mxu0 0
  %102 = vmatpush1.bf16.msra.mxu0 0
  %103 = vmatprep.subr.bf16.mxu0 0
  %104 = vmatpush1.bf16.msra.mxu0 0
  %105 = vmatprep.subr.bf16.mxu0 0
  %106 = vmatpush1.bf16.msra.mxu0 0
  %107 = vmatprep.subr.bf16.mxu0 0
  %108 = vmatpush1.bf16.msra.mxu0 0
  %109 = vmatprep.subr.bf16.mxu0 0
  %110 = vmatpush1.bf16.msra.mxu0 0
  %111 = vmatprep.subr.bf16.mxu0 0
  %112 = vmatpush1.bf16.msra.mxu0 0
  %113 = vmatprep.subr.bf16.mxu0 0
  %114 = vmatpush1.bf16.msra.mxu0 0
  %115 = vmatprep.subr.bf16.mxu0 0
  %116 = vmatpush1.bf16.msra.mxu0 %v99
  %117 = vmatprep.subr.bf16.mxu0 0
  %118 = vmatpush2.bf16.msra.mxu0 0
  %119 = vmatprep.subr.bf16.mxu0 0
  %120 = vmatpush2.bf16.msra.mxu0 0
  %121 = vmatprep.subr.bf16.mxu0 0
  %122 = vmatpush2.bf16.msra.mxu0 0
  %123 = vmatprep.subr.bf16.mxu0 0
  %124 = vmatpush2.bf16.msra.mxu0 0
  %125 = vmatprep.subr.bf16.mxu0 0
  %126 = vmatpush2.bf16.msra.mxu0 0
  %127 = vmatprep.subr.bf16.mxu0 0
  %128 = vmatpush2.bf16.msra.mxu0 0
  %129 = vmatprep.subr.bf16.mxu0 0
  %130 = vmatpush2.bf16.msra.mxu0 0
  %131 = vmatprep.subr.bf16.mxu0 0
  %132 = vmatpush2.bf16.msra.mxu0 0
  %133 = vmatprep.mubr.bf16.mxu0 0
  %134 = vmatmul.mubr.bf16.gmra.mxu0 %v74
  %v135 = vpop.f32.mrf.mxu0
  %v136 = vadd.f32 0.0, %v135
  %v137 = vpop.f32.mrf.mxu0
  %v138 = vpop.f32.mrf.mxu0
  %v139 = vadd.f32 0.0, %v138
  %v140 = vpop.f32.mrf.mxu0
  %141 = vmatprep.mubr.bf16.mxu0 0
  %142 = vmatmul.mubr.bf16.gmra.mxu0 %v77
  %v143 = vpop.f32.mrf.mxu0
  %v144 = vadd.f32 0.0, %v143
  %v145 = vpop.f32.mrf.mxu0
  %v146 = vpop.f32.mrf.mxu0
  %v147 = vadd.f32 0.0, %v146
  %v148 = vpop.f32.mrf.mxu0
  %149 = vmatprep.mubr.bf16.mxu0 0
  %150 = vmatmul.mubr.bf16.gmra.mxu0 %v80
  %v151 = vpop.f32.mrf.mxu0
  %v152 = vadd.f32 0.0, %v151
  %v153 = vpop.f32.mrf.mxu0
  %v154 = vpop.f32.mrf.mxu0
  %v155 = vadd.f32 0.0, %v154
  %v156 = vpop.f32.mrf.mxu0
  %157 = vmatprep.mubr.bf16.mxu0 0
  %158 = vmatmul.mubr.bf16.gmra.mxu0 %v83
  %v159 = vpop.f32.mrf.mxu0
  %v160 = vadd.f32 0.0, %v159
  %v161 = vpop.f32.mrf.mxu0
  %v162 = vpop.f32.mrf.mxu0
  %v163 = vadd.f32 0.0, %v162
  %v164 = vpop.f32.mrf.mxu0
  %165 = vmatprep.mubr.bf16.mxu0 0
  %166 = vmatmul.mubr.bf16.gmra.mxu0 %v86
  %v167 = vpop.f32.mrf.mxu0
  %v168 = vadd.f32 0.0, %v167
  %v169 = vpop.f32.mrf.mxu0
  %v170 = vpop.f32.mrf.mxu0
  %v171 = vadd.f32 0.0, %v170
  %v172 = vpop.f32.mrf.mxu0
  %173 = vmatprep.mubr.bf16.mxu0 0
  %174 = vmatmul.mubr.bf16.gmra.mxu0 %v89
  %v175 = vpop.f32.mrf.mxu0
  %v176 = vadd.f32 0.0, %v175
  %v177 = vpop.f32.mrf.mxu0
  %v178 = vpop.f32.mrf.mxu0
  %v179 = vadd.f32 0.0, %v178
  %v180 = vpop.f32.mrf.mxu0
  %181 = vmatprep.mubr.bf16.mxu0 0
  %182 = vmatmul.mubr.bf16.gmra.mxu0 %v92
  %v183 = vpop.f32.mrf.mxu0
  %v184 = vadd.f32 0.0, %v183
  %v185 = vpop.f32.mrf.mxu0
  %v186 = vpop.f32.mrf.mxu0
  %v187 = vadd.f32 0.0, %v186
  %v188 = vpop.f32.mrf.mxu0
  %189 = vmatprep.mubr.bf16.mxu0 0
  %190 = vmatmul.mubr.bf16.gmra.mxu0 %v95
  %v191 = vpop.f32.mrf.mxu0
  %v192 = vadd.f32 0.0, %v191
  %v193 = vpop.f32.mrf.mxu0
  %v194 = vpop.f32.mrf.mxu0
  %v195 = vadd.f32 0.0, %v194
  %v196 = vpop.f32.mrf.mxu0
  %197 = vdwg.mxu0
  %vm198 = vcmask 261120
  %199 = vst.msk [vmem:[%s2] sm:$0xff] %vm198, %v136
  %200 = vst.msk [vmem:[%s2 + $0x8] sm:$0xff] %vm198, %v139
  %201 = vst.msk [vmem:[%s2 + $0x10] sm:$0xff] %vm198, %v144
  %202 = vst.msk [vmem:[%s2 + $0x18] sm:$0xff] %vm198, %v147
  %203 = vst.msk [vmem:[%s2 + $0x20] sm:$0xff] %vm198, %v152
  %204 = vst.msk [vmem:[%s2 + $0x28] sm:$0xff] %vm198, %v155
  %205 = vst.msk [vmem:[%s2 + $0x30] sm:$0xff] %vm198, %v160
  %206 = vst.msk [vmem:[%s2 + $0x38] sm:$0xff] %vm198, %v163
  %207 = vst.msk [vmem:[%s2 + $0x40] sm:$0xff] %vm198, %v168
  %208 = vst.msk [vmem:[%s2 + $0x48] sm:$0xff] %vm198, %v171
  %209 = vst.msk [vmem:[%s2 + $0x50] sm:$0xff] %vm198, %v176
  %210 = vst.msk [vmem:[%s2 + $0x58] sm:$0xff] %vm198, %v179
  %211 = vst.msk [vmem:[%s2 + $0x60] sm:$0xff] %vm198, %v184
  %212 = vst.msk [vmem:[%s2 + $0x68] sm:$0xff] %vm198, %v187
  %213 = vst.msk [vmem:[%s2 + $0x70] sm:$0xff] %vm198, %v192
  %214 = vst.msk [vmem:[%s2 + $0x78] sm:$0xff] %vm198, %v195
  %v215 = vsel %vm198, %v136, 0.0
  %v216 = vsel %vm198, %v139, 0.0
  %v217 = vadd.f32 %v215, %v216
  %v218 = vsel %vm198, %v144, 0.0
  %v219 = vadd.f32 %v217, %v218
  %v220 = vsel %vm198, %v147, 0.0
  %v221 = vadd.f32 %v219, %v220
  %v222 = vsel %vm198, %v152, 0.0
  %v223 = vadd.f32 %v221, %v222
  %v224 = vsel %vm198, %v155, 0.0
  %v225 = vadd.f32 %v223, %v224
  %v226 = vsel %vm198, %v160, 0.0
  %v227 = vadd.f32 %v225, %v226
  %v228 = vsel %vm198, %v163, 0.0
  %v229 = vadd.f32 %v227, %v228
  %v230 = vsel %vm198, %v168, 0.0
  %v231 = vadd.f32 %v229, %v230
  %v232 = vsel %vm198, %v171, 0.0
  %v233 = vadd.f32 %v231, %v232
  %v234 = vsel %vm198, %v176, 0.0
  %v235 = vadd.f32 %v233, %v234
  %v236 = vsel %vm198, %v179, 0.0
  %v237 = vadd.f32 %v235, %v236
  %v238 = vsel %vm198, %v184, 0.0
  %v239 = vadd.f32 %v237, %v238
  %v240 = vsel %vm198, %v187, 0.0
  %v241 = vadd.f32 %v239, %v240
  %v242 = vsel %vm198, %v192, 0.0
  %v243 = vadd.f32 %v241, %v242
  %v244 = vsel %vm198, %v195, 0.0
  %v245 = vadd.f32 %v243, %v244
  %v246 = vrot.slane %v245, 4
  %v247 = vadd.f32 %v245, %v246
  %v248 = vrot.slane %v247, 2
  %v249 = vadd.f32 %v247, %v248
  %v250 = vrot.slane %v249, 1
  %v251 = vadd.f32 %v249, %v250
  %vm252 = vcmask 253952
  %253 = vst.msk [vmem:[%s3] sm:$0x1] %vm252, %v251
  %v254 = vmul.f32 %v136, %v136
  %v255 = vmul.f32 %v139, %v139
  %v256 = vmul.f32 %v144, %v144
  %v257 = vmul.f32 %v147, %v147
  %v258 = vmul.f32 %v152, %v152
  %v259 = vmul.f32 %v155, %v155
  %v260 = vmul.f32 %v160, %v160
  %v261 = vmul.f32 %v163, %v163
  %v262 = vmul.f32 %v168, %v168
  %v263 = vmul.f32 %v171, %v171
  %v264 = vmul.f32 %v176, %v176
  %v265 = vmul.f32 %v179, %v179
  %v266 = vmul.f32 %v184, %v184
  %v267 = vmul.f32 %v187, %v187
  %v268 = vmul.f32 %v192, %v192
  %v269 = vmul.f32 %v195, %v195
  %v270 = vsel %vm198, %v254, 0.0
  %v271 = vsel %vm198, %v255, 0.0
  %v272 = vadd.f32 %v270, %v271
  %v273 = vsel %vm198, %v256, 0.0
  %v274 = vadd.f32 %v272, %v273
  %v275 = vsel %vm198, %v257, 0.0
  %v276 = vadd.f32 %v274, %v275
  %v277 = vsel %vm198, %v258, 0.0
  %v278 = vadd.f32 %v276, %v277
  %v279 = vsel %vm198, %v259, 0.0
  %v280 = vadd.f32 %v278, %v279
  %v281 = vsel %vm198, %v260, 0.0
  %v282 = vadd.f32 %v280, %v281
  %v283 = vsel %vm198, %v261, 0.0
  %v284 = vadd.f32 %v282, %v283
  %v285 = vsel %vm198, %v262, 0.0
  %v286 = vadd.f32 %v284, %v285
  %v287 = vsel %vm198, %v263, 0.0
  %v288 = vadd.f32 %v286, %v287
  %v289 = vsel %vm198, %v264, 0.0
  %v290 = vadd.f32 %v288, %v289
  %v291 = vsel %vm198, %v265, 0.0
  %v292 = vadd.f32 %v290, %v291
  %v293 = vsel %vm198, %v266, 0.0
  %v294 = vadd.f32 %v292, %v293
  %v295 = vsel %vm198, %v267, 0.0
  %v296 = vadd.f32 %v294, %v295
  %v297 = vsel %vm198, %v268, 0.0
  %v298 = vadd.f32 %v296, %v297
  %v299 = vsel %vm198, %v269, 0.0
  %v300 = vadd.f32 %v298, %v299
  %v301 = vrot.slane %v300, 4
  %v302 = vadd.f32 %v300, %v301
  %v303 = vrot.slane %v302, 2
  %v304 = vadd.f32 %v302, %v303
  %v305 = vrot.slane %v304, 1
  %v306 = vadd.f32 %v304, %v305
  %307 = vst.msk [vmem:[%s4] sm:$0x1] %vm252, %v306
  // Predicated region
  $region10: #{decoder_block_forward.4} parent=0 // pred_check
    _
  $region11: #{decoder_block_forward.4} parent=0 // pred_check_branch
    %309 = sbr.rel (0) target = $region13
  $region12: #{decoder_block_forward.4} parent=0 // pred_region
    _
  $region13: #{decoder_block_forward.4} parent=0 // pred_fallthru
    _
  // Predicated region
  $region14: #{decoder_block_forward.4} parent=0 // pred_check
    _
  $region15: #{decoder_block_forward.4} parent=0 // pred_check_branch
    %311 = sbr.rel (0) target = $region17
  $region16: #{decoder_block_forward.4} parent=0 // pred_region
    _
  $region17: #{decoder_block_forward.4} parent=0 // pred_fallthru
    _
  // Predicated region
  $region18: #{decoder_block_forward.4} parent=0 // pred_check
    _
  $region19: #{decoder_block_forward.4} parent=0 // pred_check_branch
    %313 = sbr.rel (0) target = $region21
  $region20: #{decoder_block_forward.4} parent=0 // pred_region
    _
  $region21: #{decoder_block_forward.4} parent=0 // pred_fallthru
    _
  // Predicated region
  $region22: #{decoder_block_forward.4} parent=0 // pred_check
    _
  $region23: #{decoder_block_forward.4} parent=0 // pred_check_branch
    %315 = sbr.rel (0) target = $region25
  $region24: #{decoder_block_forward.4} parent=0 // pred_region
    _
  $region25: #{decoder_block_forward.4} parent=0 // pred_fallthru
    _
  // Predicated region
  $region26: #{decoder_block_forward.4} parent=0 // pred_check
    _
  $region27: #{decoder_block_forward.4} parent=0 // pred_check_branch
    %317 = sbr.rel (0) target = $region29
  $region28: #{decoder_block_forward.4} parent=0 // pred_region
    _
  $region29: #{decoder_block_forward.4} parent=0 // pred_fallthru
    _
  // Predicated region
  $region30: #{decoder_block_forward.4} parent=0 // pred_check
    _
  $region31: #{decoder_block_forward.4} parent=0 // pred_check_branch
    %319 = sbr.rel (0) target = $region33
  $region32: #{decoder_block_forward.4} parent=0 // pred_region
    _
  $region33: #{decoder_block_forward.4} parent=0 // pred_fallthru
    _

// kernel: tile.53
$region0: #{tile.53}
  #allocation0 [shape = 's32[1]{0}', space=sflag, size = 0x4, scoped, tag = 'scoped memory for tile.53']
  %s0 = inlined_call_operand.vmem [shape: f32[4], index: 0, kind: input, shape index: {}]
  %s1 = inlined_call_operand.vmem [shape: f32[32,4], index: 1, kind: output, shape index: {}]
  // Predicated region
  $region2: #{tile.53} parent=0 // pred_check
    _
  $region3: #{tile.53} parent=0 // pred_check_branch
    %3 = sbr.rel (0) target = $region5
  $region4: #{tile.53} parent=0 // pred_region
    _
  $region5: #{tile.53} parent=0 // pred_fallthru
    _
  %v4 = vld [vmem:[%s0] ss:$0 sm:$0xff]
  %5 = vst [vmem:[%s1] sm:$0xff] %v4
  %s6 = scalar_lea.vmem %s1, 8
  %7 = vst [vmem:[%s6] sm:$0xff] %v4
  %s8 = scalar_lea.vmem %s1, 16
  %9 = vst [vmem:[%s8] sm:$0xff] %v4
  %s10 = scalar_lea.vmem %s1, 24
  %11 = vst [vmem:[%s10] sm:$0xff] %v4

// kernel: tile.55
$region0: #{tile.55}
  %s0 = inlined_call_operand.vmem [shape: f32[32,4], index: 0, kind: input, shape index: {}]
  %s1 = inlined_call_operand.vmem [shape: f32[1,128], index: 1, kind: output, shape index: {}]
  $region1: #{tile.55} parent=0
    #allocation0 [shape = 'u8[4096]{0}', space=vmem, size = 0x1000, scoped, tag = 'scoped mem for output reshape']
    %v2 = vld [vmem:[%s0] sm:$0x1]
    %vm3 = vcmask 31744
    %4 = vst.msk [vmem:[#allocation0] sm:$0x1] %vm3, %v2
    %s5 = scalar_lea.vmem %s0, 31
    %v6 = vld [vmem:[%s5] sm:$0x1]
    %7 = vrot.lane.b32.xlu0 %v6, 124
    %v8 = vpop.permute.xlu0 %7
    %vm9 = vcmask 1048544
    %10 = vst.msk [vmem:[#allocation0] sm:$0x1] %vm9, %v8
    %s11 = scalar_lea.vmem %s0, 30
    %v12 = vld [vmem:[%s11] sm:$0x1]
    %13 = vrot.lane.b32.xlu0 %v12, 120
    %v14 = vpop.permute.xlu0 %13
    %vm15 = vcmask 1015744
    %16 = vst.msk [vmem:[#allocation0] sm:$0x1] %vm15, %v14
    %s17 = scalar_lea.vmem %s0, 29
    %v18 = vld [vmem:[%s17] sm:$0x1]
    %19 = vrot.lane.b32.xlu0 %v18, 116
    %v20 = vpop.permute.xlu0 %19
    %vm21 = vcmask 982944
    %22 = vst.msk [vmem:[#allocation0] sm:$0x1] %vm21, %v20
    %s23 = scalar_lea.vmem %s0, 28
    %v24 = vld [vmem:[%s23] sm:$0x1]
    %25 = vrot.lane.b32.xlu0 %v24, 112
    %v26 = vpop.permute.xlu0 %25
    %vm27 = vcmask 950144
    %28 = vst.msk [vmem:[#allocation0] sm:$0x1] %vm27, %v26
    %s29 = scalar_lea.vmem %s0, 27
    %v30 = vld [vmem:[%s29] sm:$0x1]
    %31 = vrot.lane.b32.xlu0 %v30, 108
    %v32 = vpop.permute.xlu0 %31
    %vm33 = vcmask 917344
    %34 = vst.msk [vmem:[#allocation0] sm:$0x1] %vm33, %v32
    %s35 = scalar_lea.vmem %s0, 26
    %v36 = vld [vmem:[%s35] sm:$0x1]
    %37 = vrot.lane.b32.xlu0 %v36, 104
    %v38 = vpop.permute.xlu0 %37
    %vm39 = vcmask 884544
    %40 = vst.msk [vmem:[#allocation0] sm:$0x1] %vm39, %v38
    %s41 = scalar_lea.vmem %s0, 25
    %v42 = vld [vmem:[%s41] sm:$0x1]
    %43 = vrot.lane.b32.xlu0 %v42, 100
    %v44 = vpop.permute.xlu0 %43
    %vm45 = vcmask 851744
    %46 = vst.msk [vmem:[#allocation0] sm:$0x1] %vm45, %v44
    %s47 = scalar_lea.vmem %s0, 24
    %v48 = vld [vmem:[%s47] sm:$0x1]
    %49 = vrot.lane.b32.xlu0 %v48, 96
    %v50 = vpop.permute.xlu0 %49
    %vm51 = vcmask 818944
    %52 = vst.msk [vmem:[#allocation0] sm:$0x1] %vm51, %v50
    %s53 = scalar_lea.vmem %s0, 23
    %v54 = vld [vmem:[%s53] sm:$0x1]
    %55 = vrot.lane.b32.xlu0 %v54, 92
    %v56 = vpop.permute.xlu0 %55
    %vm57 = vcmask 786144
    %58 = vst.msk [vmem:[#allocation0] sm:$0x1] %vm57, %v56
    %s59 = scalar_lea.vmem %s0, 22
    %v60 = vld [vmem:[%s59] sm:$0x1]
    %61 = vrot.lane.b32.xlu0 %v60, 88
    %v62 = vpop.permute.xlu0 %61
    %vm63 = vcmask 753344
    %64 = vst.msk [vmem:[#allocation0] sm:$0x1] %vm63, %v62
    %s65 = scalar_lea.vmem %s0, 21
    %v66 = vld [vmem:[%s65] sm:$0x1]
    %67 = vrot.lane.b32.xlu0 %v66, 84
    %v68 = vpop.permute.xlu0 %67
    %vm69 = vcmask 720544
    %70 = vst.msk [vmem:[#allocation0] sm:$0x1] %vm69, %v68
    %s71 = scalar_lea.vmem %s0, 20
    %v72 = vld [vmem:[%s71] sm:$0x1]
    %73 = vrot.lane.b32.xlu0 %v72, 80
    %v74 = vpop.permute.xlu0 %73
    %vm75 = vcmask 687744
    %76 = vst.msk [vmem:[#allocation0] sm:$0x1] %vm75, %v74
    %s77 = scalar_lea.vmem %s0, 19
    %v78 = vld [vmem:[%s77] sm:$0x1]
    %79 = vrot.lane.b32.xlu0 %v78, 76
    %v80 = vpop.permute.xlu0 %79
    %vm81 = vcmask 654944
    %82 = vst.msk [vmem:[#allocation0] sm:$0x1] %vm81, %v80
    %s83 = scalar_lea.vmem %s0, 18
    %v84 = vld [vmem:[%s83] sm:$0x1]
    %85 = vrot.lane.b32.xlu0 %v84, 72
    %v86 = vpop.permute.xlu0 %85
    %vm87 = vcmask 622144
    %88 = vst.msk [vmem:[#allocation0] sm:$0x1] %vm87, %v86
    %s89 = scalar_lea.vmem %s0, 17
    %v90 = vld [vmem:[%s89] sm:$0x1]
    %91 = vrot.lane.b32.xlu0 %v90, 68
    %v92 = vpop.permute.xlu0 %91
    %vm93 = vcmask 589344
    %94 = vst.msk [vmem:[#allocation0] sm:$0x1] %vm93, %v92
    %s95 = scalar_lea.vmem %s0, 16
    %v96 = vld [vmem:[%s95] sm:$0x1]
    %97 = vrot.lane.b32.xlu0 %v96, 64
    %v98 = vpop.permute.xlu0 %97
    %vm99 = vcmask 556544
    %100 = vst.msk [vmem:[#allocation0] sm:$0x1] %vm99, %v98
    %s101 = scalar_lea.vmem %s0, 15
    %v102 = vld [vmem:[%s101] sm:$0x1]
    %103 = vrot.lane.b32.xlu0 %v102, 60
    %v104 = vpop.permute.xlu0 %103
    %vm105 = vcmask 523744
    %106 = vst.msk [vmem:[#allocation0] sm:$0x1] %vm105, %v104
    %s107 = scalar_lea.vmem %s0, 14
    %v108 = vld [vmem:[%s107] sm:$0x1]
    %109 = vrot.lane.b32.xlu0 %v108, 56
    %v110 = vpop.permute.xlu0 %109
    %vm111 = vcmask 490944
    %112 = vst.msk [vmem:[#allocation0] sm:$0x1] %vm111, %v110
    %s113 = scalar_lea.vmem %s0, 13
    %v114 = vld [vmem:[%s113] sm:$0x1]
    %115 = vrot.lane.b32.xlu0 %v114, 52
    %v116 = vpop.permute.xlu0 %115
    %vm117 = vcmask 458144
    %118 = vst.msk [vmem:[#allocation0] sm:$0x1] %vm117, %v116
    %s119 = scalar_lea.vmem %s0, 12
    %v120 = vld [vmem:[%s119] sm:$0x1]
    %121 = vrot.lane.b32.xlu0 %v120, 48
    %v122 = vpop.permute.xlu0 %121
    %vm123 = vcmask 425344
    %124 = vst.msk [vmem:[#allocation0] sm:$0x1] %vm123, %v122
    %s125 = scalar_lea.vmem %s0, 11
    %v126 = vld [vmem:[%s125] sm:$0x1]
    %127 = vrot.lane.b32.xlu0 %v126, 44
    %v128 = vpop.permute.xlu0 %127
    %vm129 = vcmask 392544
    %130 = vst.msk [vmem:[#allocation0] sm:$0x1] %vm129, %v128
    %s131 = scalar_lea.vmem %s0, 10
    %v132 = vld [vmem:[%s131] sm:$0x1]
    %133 = vrot.lane.b32.xlu0 %v132, 40
    %v134 = vpop.permute.xlu0 %133
    %vm135 = vcmask 359744
    %136 = vst.msk [vmem:[#allocation0] sm:$0x1] %vm135, %v134
    %s137 = scalar_lea.vmem %s0, 9
    %v138 = vld [vmem:[%s137] sm:$0x1]
    %139 = vrot.lane.b32.xlu0 %v138, 36
    %v140 = vpop.permute.xlu0 %139
    %vm141 = vcmask 326944
    %142 = vst.msk [vmem:[#allocation0] sm:$0x1] %vm141, %v140
    %s143 = scalar_lea.vmem %s0, 8
    %v144 = vld [vmem:[%s143] sm:$0x1]
    %145 = vrot.lane.b32.xlu0 %v144, 32
    %v146 = vpop.permute.xlu0 %145
    %vm147 = vcmask 294144
    %148 = vst.msk [vmem:[#allocation0] sm:$0x1] %vm147, %v146
    %s149 = scalar_lea.vmem %s0, 7
    %v150 = vld [vmem:[%s149] sm:$0x1]
    %151 = vrot.lane.b32.xlu0 %v150, 28
    %v152 = vpop.permute.xlu0 %151
    %vm153 = vcmask 261344
    %154 = vst.msk [vmem:[#allocation0] sm:$0x1] %vm153, %v152
    %s155 = scalar_lea.vmem %s0, 6
    %v156 = vld [vmem:[%s155] sm:$0x1]
    %157 = vrot.lane.b32.xlu0 %v156, 24
    %v158 = vpop.permute.xlu0 %157
    %vm159 = vcmask 228544
    %160 = vst.msk [vmem:[#allocation0] sm:$0x1] %vm159, %v158
    %s161 = scalar_lea.vmem %s0, 5
    %v162 = vld [vmem:[%s161] sm:$0x1]
    %163 = vrot.lane.b32.xlu0 %v162, 20
    %v164 = vpop.permute.xlu0 %163
    %vm165 = vcmask 195744
    %166 = vst.msk [vmem:[#allocation0] sm:$0x1] %vm165, %v164
    %s167 = scalar_lea.vmem %s0, 4
    %v168 = vld [vmem:[%s167] sm:$0x1]
    %169 = vrot.lane.b32.xlu0 %v168, 16
    %v170 = vpop.permute.xlu0 %169
    %vm171 = vcmask 162944
    %172 = vst.msk [vmem:[#allocation0] sm:$0x1] %vm171, %v170
    %s173 = scalar_lea.vmem %s0, 3
    %v174 = vld [vmem:[%s173] sm:$0x1]
    %175 = vrot.lane.b32.xlu0 %v174, 12
    %v176 = vpop.permute.xlu0 %175
    %vm177 = vcmask 130144
    %178 = vst.msk [vmem:[#allocation0] sm:$0x1] %vm177, %v176
    %s179 = scalar_lea.vmem %s0, 2
    %v180 = vld [vmem:[%s179] sm:$0x1]
    %181 = vrot.lane.b32.xlu0 %v180, 8
    %v182 = vpop.permute.xlu0 %181
    %vm183 = vcmask 97344
    %184 = vst.msk [vmem:[#allocation0] sm:$0x1] %vm183, %v182
    %s185 = scalar_lea.vmem %s0, 1
    %v186 = vld [vmem:[%s185] sm:$0x1]
    %187 = vrot.lane.b32.xlu0 %v186, 4
    %v188 = vpop.permute.xlu0 %187
    %vm189 = vcmask 64544
    %190 = vst.msk [vmem:[#allocation0] sm:$0x1] %vm189, %v188
    %s192 = sshll.u32 1, 1
    %s193 = ssub.s32 %s192, 1
    %v195 = vld [vmem:[#allocation0] sm:%s193]
    %s196 = sshll.u32 1, 1
    %s197 = ssub.s32 %s196, 1
    %198 = vst [vmem:[%s1] sm:%s197] %v195

// kernel: decoder_block_forward.6
$region0: #{decoder_block_forward.6}
  #allocation0 [shape = 'u32[]', space=smem, size = 0x4, offset = 0x4, fixed_abs, tag = 'smem constant byte address 0x4 - core index']
  #allocation1 [shape = 'u32[144,128]{1,0:T(1,128)}', space=vmem, size = 0x12000, scoped, tag = 'internal scratch']
  #allocation2 [shape = 'f32[64,4]{1,0:T(8,128)}', space=vmem, size = 0x8000, scoped, tag = 'scratch operand']
  %s0 = inlined_call_operand.vmem [shape: f32[20,10,10,4], index: 0, kind: input, shape index: {}]
  %s1 = inlined_call_operand.vmem [shape: f32[20,10,10,4], index: 1, kind: input, shape index: {}]
  %s2 = inlined_call_operand.vmem [shape: f32[3,36,4], index: 2, kind: input, shape index: {}]
  %s3 = inlined_call_operand.vmem [shape: f32[3,36,4], index: 3, kind: input, shape index: {}]
  %s4 = inlined_call_operand.vmem [shape: f32[16,64,4], index: 4, kind: output, shape index: {0}]
  %s5 = inlined_call_operand.vmem [shape: f32[2,1,4], index: 5, kind: output, shape index: {1}]
  %s6 = inlined_call_operand.vmem [shape: f32[2,1,4], index: 6, kind: output, shape index: {2}]
  %7 = xla_tuple %s4, %s5, %s6
  %s8 = sld [smem:[#allocation0]]
  $region77: #{decoder_block_forward.6} parent=0
    _
  %s10 = ssub.s32 1, %s8
  %s11 = scalar_select 0, %s10, %s8
  loop: start=0, step=1, limit=50
  $region2: #{decoder_block_forward.6} parent=0 // loop_pre_header
    _
  $region3: #{decoder_block_forward.6} parent=0 // loop_header
    %s13 = sphi 0, %s17
    %p14 = scmp.ge.s32.totalorder %s13, 50
    %s20 = sphi 0, %s39
    %s21 = sphi 0, %s35
    %s22 = sphi 0, %s31
    %s23 = sphi 0, %s20
    %s24 = sphi 0, %s21
    %s25 = sphi 0, %s22
    %s26 = sphi 0, %s23
    %s27 = sphi 0, %s24
    %s28 = sphi 0, %s25
    %s48 = sphi 0, %s50
    %s51 = sphi 0, %s48
    %s52 = sphi 0, %s51
    %s68 = sphi 0, %s52
    %s80 = sphi 0, %s82
    %s83 = sphi 0, %s80
    %s84 = sphi 0, %s83
    %s100 = sphi 0, %s84
    %s106 = sphi 0, %s108
    %s109 = sphi 0, %s106
    %s110 = sphi 0, %s109
    %s126 = sphi 0, %s110
    %s132 = sphi 0, %s134
    %s135 = sphi 0, %s132
    %s136 = sphi 0, %s135
    %s152 = sphi 0, %s136
    %s162 = sphi 0, %s164
    %s165 = sphi 0, %s162
    %s166 = sphi 0, %s165
    %s182 = sphi 0, %s166
    %s188 = sphi 0, %s190
    %s191 = sphi 0, %s188
    %s192 = sphi 0, %s191
    %s208 = sphi 0, %s192
    %s214 = sphi 0, %s216
    %s217 = sphi 0, %s214
    %s218 = sphi 0, %s217
    %s234 = sphi 0, %s218
  $region4: #{decoder_block_forward.6} parent=0 // loop_header_branch
    %16 = sbr.rel (%p14) target = $region8
  $region5: #{decoder_block_forward.6} parent=0 // loop_body
    %s18 = ssub.s32 %s13, 1
    %s19 = ssub.s32 %s13, 2
    %s29 = sadd.s32 1, %s22
    %p30 = scmp.ge.s32.totalorder %s29, 3
    %s31 = scalar_select %p30, 0, %s29
    %s32 = sadd.s32 1, %s21
    %s33 = scalar_select %p30, %s32, %s21
    %p34 = scmp.ge.s32.totalorder %s33, 8
    %s35 = scalar_select %p34, 0, %s33
    %s36 = sadd.s32 1, %s20
    %s37 = scalar_select %p34, %s36, %s20
    %p38 = scmp.ge.s32.totalorder %s37, 2
    %s39 = scalar_select %p38, 0, %s37
    %s40 = smul.u32 %s20, 10
    %s41 = sadd.s32 %s40, %s21
    %s42 = sadd.s32 %s41, %s22
    %s43 = smul.u32 %s39, 10
    %s44 = sadd.s32 %s43, %s35
    %s45 = sadd.s32 %s44, %s31
    %s46 = ssub.s32 %s42, %s45
    %p47 = scmp.eq.s32.totalorder %s46, 0
    %s49 = sadd.s32 %s48, 1
    %s50 = scalar_select %p47, %s48, %s49
    %p53 = pneg %p47
    %p54 = scmp.eq.s32.totalorder %s13, 47
    %p55 = por %p53, %p54
    %p56 = scmp.ne.s32.totalorder %s48, %s51
    %p57 = scmp.eq.s32.totalorder %s13, 0
    %p58 = por %p56, %p57
    %p59 = scmp.ne.s32.totalorder %s48, %s51
    %p60 = scmp.eq.s32.totalorder %s18, 47
    %p61 = por %p59, %p60
    %p62 = scmp.ne.s32.totalorder %s51, %s52
    %p63 = scmp.eq.s32.totalorder %s18, 0
    %p64 = por %p62, %p63
    %p65 = scmp.ne.s32.totalorder %s51, %s52
    %p66 = scmp.eq.s32.totalorder %s19, 47
    %p67 = por %p65, %p66
    %p69 = scmp.ne.s32.totalorder %s52, %s68
    %p70 = scmp.eq.s32.totalorder %s19, 0
    %p71 = por %p69, %p70
    %s72 = smul.u32 %s20, 10
    %s73 = sadd.s32 %s72, %s21
    %s74 = sadd.s32 %s73, %s22
    %s75 = smul.u32 %s39, 10
    %s76 = sadd.s32 %s75, %s35
    %s77 = sadd.s32 %s76, %s31
    %s78 = ssub.s32 %s74, %s77
    %p79 = scmp.eq.s32.totalorder %s78, 0
    %s81 = sadd.s32 %s80, 1
    %s82 = scalar_select %p79, %s80, %s81
    %p85 = pneg %p79
    %p86 = scmp.eq.s32.totalorder %s13, 47
    %p87 = por %p85, %p86
    %p88 = scmp.ne.s32.totalorder %s80, %s83
    %p89 = scmp.eq.s32.totalorder %s13, 0
    %p90 = por %p88, %p89
    %p91 = scmp.ne.s32.totalorder %s80, %s83
    %p92 = scmp.eq.s32.totalorder %s18, 47
    %p93 = por %p91, %p92
    %p94 = scmp.ne.s32.totalorder %s83, %s84
    %p95 = scmp.eq.s32.totalorder %s18, 0
    %p96 = por %p94, %p95
    %p97 = scmp.ne.s32.totalorder %s83, %s84
    %p98 = scmp.eq.s32.totalorder %s19, 47
    %p99 = por %p97, %p98
    %p101 = scmp.ne.s32.totalorder %s84, %s100
    %p102 = scmp.eq.s32.totalorder %s19, 0
    %p103 = por %p101, %p102
    %s104 = ssub.s32 %s22, %s31
    %p105 = scmp.eq.s32.totalorder %s104, 0
    %s107 = sadd.s32 %s106, 1
    %s108 = scalar_select %p105, %s106, %s107
    %p111 = pneg %p105
    %p112 = scmp.eq.s32.totalorder %s13, 47
    %p113 = por %p111, %p112
    %p114 = scmp.ne.s32.totalorder %s106, %s109
    %p115 = scmp.eq.s32.totalorder %s13, 0
    %p116 = por %p114, %p115
    %p117 = scmp.ne.s32.totalorder %s106, %s109
    %p118 = scmp.eq.s32.totalorder %s18, 47
    %p119 = por %p117, %p118
    %p120 = scmp.ne.s32.totalorder %s109, %s110
    %p121 = scmp.eq.s32.totalorder %s18, 0
    %p122 = por %p120, %p121
    %p123 = scmp.ne.s32.totalorder %s109, %s110
    %p124 = scmp.eq.s32.totalorder %s19, 47
    %p125 = por %p123, %p124
    %p127 = scmp.ne.s32.totalorder %s110, %s126
    %p128 = scmp.eq.s32.totalorder %s19, 0
    %p129 = por %p127, %p128
    %s130 = ssub.s32 %s22, %s31
    %p131 = scmp.eq.s32.totalorder %s130, 0
    %s133 = sadd.s32 %s132, 1
    %s134 = scalar_select %p131, %s132, %s133
    %p137 = pneg %p131
    %p138 = scmp.eq.s32.totalorder %s13, 47
    %p139 = por %p137, %p138
    %p140 = scmp.ne.s32.totalorder %s132, %s135
    %p141 = scmp.eq.s32.totalorder %s13, 0
    %p142 = por %p140, %p141
    %p143 = scmp.ne.s32.totalorder %s132, %s135
    %p144 = scmp.eq.s32.totalorder %s18, 47
    %p145 = por %p143, %p144
    %p146 = scmp.ne.s32.totalorder %s135, %s136
    %p147 = scmp.eq.s32.totalorder %s18, 0
    %p148 = por %p146, %p147
    %p149 = scmp.ne.s32.totalorder %s135, %s136
    %p150 = scmp.eq.s32.totalorder %s19, 47
    %p151 = por %p149, %p150
    %p153 = scmp.ne.s32.totalorder %s136, %s152
    %p154 = scmp.eq.s32.totalorder %s19, 0
    %p155 = por %p153, %p154
    %s156 = smul.u32 %s20, 8
    %s157 = sadd.s32 %s156, %s21
    %s158 = smul.u32 %s39, 8
    %s159 = sadd.s32 %s158, %s35
    %s160 = ssub.s32 %s157, %s159
    %p161 = scmp.eq.s32.totalorder %s160, 0
    %s163 = sadd.s32 %s162, 1
    %s164 = scalar_select %p161, %s162, %s163
    %p167 = pneg %p161
    %p168 = scmp.eq.s32.totalorder %s13, 47
    %p169 = por %p167, %p168
    %p170 = scmp.ne.s32.totalorder %s162, %s165
    %p171 = scmp.eq.s32.totalorder %s13, 0
    %p172 = por %p170, %p171
    %p173 = scmp.ne.s32.totalorder %s162, %s165
    %p174 = scmp.eq.s32.totalorder %s18, 47
    %p175 = por %p173, %p174
    %p176 = scmp.ne.s32.totalorder %s165, %s166
    %p177 = scmp.eq.s32.totalorder %s18, 0
    %p178 = por %p176, %p177
    %p179 = scmp.ne.s32.totalorder %s165, %s166
    %p180 = scmp.eq.s32.totalorder %s19, 47
    %p181 = por %p179, %p180
    %p183 = scmp.ne.s32.totalorder %s166, %s182
    %p184 = scmp.eq.s32.totalorder %s19, 0
    %p185 = por %p183, %p184
    %s186 = ssub.s32 %s20, %s39
    %p187 = scmp.eq.s32.totalorder %s186, 0
    %s189 = sadd.s32 %s188, 1
    %s190 = scalar_select %p187, %s188, %s189
    %p193 = pneg %p187
    %p194 = scmp.eq.s32.totalorder %s13, 47
    %p195 = por %p193, %p194
    %p196 = scmp.ne.s32.totalorder %s188, %s191
    %p197 = scmp.eq.s32.totalorder %s13, 0
    %p198 = por %p196, %p197
    %p199 = scmp.ne.s32.totalorder %s188, %s191
    %p200 = scmp.eq.s32.totalorder %s18, 47
    %p201 = por %p199, %p200
    %p202 = scmp.ne.s32.totalorder %s191, %s192
    %p203 = scmp.eq.s32.totalorder %s18, 0
    %p204 = por %p202, %p203
    %p205 = scmp.ne.s32.totalorder %s191, %s192
    %p206 = scmp.eq.s32.totalorder %s19, 47
    %p207 = por %p205, %p206
    %p209 = scmp.ne.s32.totalorder %s192, %s208
    %p210 = scmp.eq.s32.totalorder %s19, 0
    %p211 = por %p209, %p210
    %s212 = ssub.s32 %s20, %s39
    %p213 = scmp.eq.s32.totalorder %s212, 0
    %s215 = sadd.s32 %s214, 1
    %s216 = scalar_select %p213, %s214, %s215
    %p219 = pneg %p213
    %p220 = scmp.eq.s32.totalorder %s13, 47
    %p221 = por %p219, %p220
    %p222 = scmp.ne.s32.totalorder %s214, %s217
    %p223 = scmp.eq.s32.totalorder %s13, 0
    %p224 = por %p222, %p223
    %p225 = scmp.ne.s32.totalorder %s214, %s217
    %p226 = scmp.eq.s32.totalorder %s18, 47
    %p227 = por %p225, %p226
    %p228 = scmp.ne.s32.totalorder %s217, %s218
    %p229 = scmp.eq.s32.totalorder %s18, 0
    %p230 = por %p228, %p229
    %p231 = scmp.ne.s32.totalorder %s217, %s218
    %p232 = scmp.eq.s32.totalorder %s19, 47
    %p233 = por %p231, %p232
    %p235 = scmp.ne.s32.totalorder %s218, %s234
    %p236 = scmp.eq.s32.totalorder %s19, 0
    %p237 = por %p235, %p236
    %p238 = scmp.le.s32.totalorder 1, %s13
    %p239 = scmp.lt.s32.totalorder %s13, 49
    %p240 = pnand %p238, %p239
    %p241 = pneg %p240
    // Predicated region
    $region9: #{decoder_block_forward.6} parent=5 // pred_check
      _
    $region10: #{decoder_block_forward.6} parent=5 // pred_check_branch
      %243 = sbr.rel (%p240) target = $region12
    $region11: #{decoder_block_forward.6} parent=5 // pred_region
      %s244 = ssub.s32 %s13, 1
    $region12: #{decoder_block_forward.6} parent=5 // pred_fallthru
      _
    %p245 = scmp.lt.s32.totalorder %s13, 48
    // Predicated region
    $region13: #{decoder_block_forward.6} parent=5 // pred_check
      %p246 = pneg %p245
    $region14: #{decoder_block_forward.6} parent=5 // pred_check_branch
      %248 = sbr.rel (%p246) target = $region16
    $region15: #{decoder_block_forward.6} parent=5 // pred_region
      // Predicated region
      $region17: #{decoder_block_forward.6} parent=15 // pred_check
        %p249 = pneg %p58
      $region18: #{decoder_block_forward.6} parent=15 // pred_check_branch
        %251 = sbr.rel (%p249) target = $region20
      $region19: #{decoder_block_forward.6} parent=15 // pred_region
        %s252 = smul.u32 %s20, 10
        %s253 = sadd.s32 %s252, %s21
        %s254 = sadd.s32 %s253, %s22
        %p255 = scmp.lt.s32.totalorder %s254, 19
        %s256 = scalar_select %p255, %s254, 19
        %s257 = smul.addr %s256, 20
        %s258 = smul.addr %s257, 8
        %s259 = scalar_lea.vmem %s0, %s258
        %s260 = smul.u32 %s20, 10
        %s261 = sadd.s32 %s260, %s21
        %s262 = sadd.s32 %s261, %s22
      $region20: #{decoder_block_forward.6} parent=15 // pred_fallthru
        _
      // Predicated region
      $region21: #{decoder_block_forward.6} parent=15 // pred_check
        %p263 = pneg %p90
      $region22: #{decoder_block_forward.6} parent=15 // pred_check_branch
        %265 = sbr.rel (%p263) target = $region24
      $region23: #{decoder_block_forward.6} parent=15 // pred_region
        %s266 = smul.u32 %s20, 10
        %s267 = sadd.s32 %s266, %s21
        %s268 = sadd.s32 %s267, %s22
        %p269 = scmp.lt.s32.totalorder %s268, 19
        %s270 = scalar_select %p269, %s268, 19
        %s271 = smul.addr %s270, 20
        %s272 = smul.addr %s271, 8
        %s273 = scalar_lea.vmem %s1, %s272
        %s274 = smul.u32 %s20, 10
        %s275 = sadd.s32 %s274, %s21
        %s276 = sadd.s32 %s275, %s22
      $region24: #{decoder_block_forward.6} parent=15 // pred_fallthru
        _
      // Predicated region
      $region25: #{decoder_block_forward.6} parent=15 // pred_check
        %p277 = pneg %p116
      $region26: #{decoder_block_forward.6} parent=15 // pred_check_branch
        %279 = sbr.rel (%p277) target = $region28
      $region27: #{decoder_block_forward.6} parent=15 // pred_region
        %p280 = scmp.lt.s32.totalorder %s22, 2
        %s281 = scalar_select %p280, %s22, 2
        %s282 = smul.addr %s281, 5
        %s283 = smul.addr %s282, 8
        %s284 = scalar_lea.vmem %s2, %s283
      $region28: #{decoder_block_forward.6} parent=15 // pred_fallthru
        _
      // Predicated region
      $region29: #{decoder_block_forward.6} parent=15 // pred_check
        %p285 = pneg %p142
      $region30: #{decoder_block_forward.6} parent=15 // pred_check_branch
        %287 = sbr.rel (%p285) target = $region32
      $region31: #{decoder_block_forward.6} parent=15 // pred_region
        %p288 = scmp.lt.s32.totalorder %s22, 2
        %s289 = scalar_select %p288, %s22, 2
        %s290 = smul.addr %s289, 5
        %s291 = smul.addr %s290, 8
        %s292 = scalar_lea.vmem %s3, %s291
      $region32: #{decoder_block_forward.6} parent=15 // pred_fallthru
        _
    $region16: #{decoder_block_forward.6} parent=5 // pred_fallthru
      _
    %p293 = scmp.le.s32.totalorder 1, %s13
    %p294 = scmp.lt.s32.totalorder %s13, 49
    %p295 = pnand %p293, %p294
    %p296 = pneg %p295
    // Predicated region
    $region33: #{decoder_block_forward.6} parent=5 // pred_check
      _
    $region34: #{decoder_block_forward.6} parent=5 // pred_check_branch
      %298 = sbr.rel (%p295) target = $region36
    $region35: #{decoder_block_forward.6} parent=5 // pred_region
      %s299 = ssub.s32 %s13, 1
      %s300 = smul.u32 %s23, 10
      %s301 = sadd.s32 %s300, %s24
      %s302 = sadd.s32 %s301, %s25
      %p303 = scmp.lt.s32.totalorder %s302, 19
      %s304 = scalar_select %p303, %s302, 19
      %s305 = smul.addr %s304, 20
      %s306 = smul.addr %s305, 8
      %s307 = scalar_lea.vmem %s0, %s306
      %p308 = pneg %p64
      %p309 = pneg %p61
      %s310 = smul.u32 %s23, 10
      %s311 = sadd.s32 %s310, %s24
      %s312 = sadd.s32 %s311, %s25
      %p313 = scmp.lt.s32.totalorder %s312, 19
      %s314 = scalar_select %p313, %s312, 19
      %s315 = smul.addr %s314, 20
      %s316 = smul.addr %s315, 8
      %s317 = scalar_lea.vmem %s1, %s316
      %p318 = pneg %p96
      %p319 = pneg %p93
      %p320 = scmp.lt.s32.totalorder %s25, 2
      %s321 = scalar_select %p320, %s25, 2
      %s322 = smul.addr %s321, 5
      %s323 = smul.addr %s322, 8
      %s324 = scalar_lea.vmem %s2, %s323
      %p325 = pneg %p122
      %p326 = pneg %p119
      %p327 = scmp.lt.s32.totalorder %s25, 2
      %s328 = scalar_select %p327, %s25, 2
      %s329 = smul.addr %s328, 5
      %s330 = smul.addr %s329, 8
      %s331 = scalar_lea.vmem %s3, %s330
      %p332 = pneg %p148
      %p333 = pneg %p145
      %p334 = pneg %p178
      %p335 = pneg %p175
      %s336 = smul.u32 %s23, 8
      %s337 = sadd.s32 %s336, %s24
      %p338 = scmp.lt.s32.totalorder %s337, 15
      %s339 = scalar_select %p338, %s337, 15
      %s340 = smul.addr %s339, 8
      %s341 = smul.addr %s340, 8
      %s342 = scalar_lea.vmem %s4, %s341
      %p343 = pneg %p204
      %p344 = pneg %p201
      %p345 = scmp.lt.s32.totalorder %s23, 1
      %s346 = scalar_select %p345, %s23, 1
      %s347 = scalar_lea.vmem %s5, %s346
      %p348 = pneg %p230
      %p349 = pneg %p227
      %p350 = scmp.lt.s32.totalorder %s23, 1
      %s351 = scalar_select %p350, %s23, 1
      %s352 = scalar_lea.vmem %s6, %s351
      %s353 = smul.u32 %s23, 10
      %s354 = sadd.s32 %s353, %s24
      %s355 = sadd.s32 %s354, %s25
      %p356 = scmp.lt.s32.totalorder %s355, 19
      %s357 = scalar_select %p356, %s355, 19
      %s358 = smul.addr %s357, 20
      %s359 = smul.addr %s358, 8
      %s360 = scalar_lea.vmem %s0, %s359
      %s361 = smul.u32 %s23, 10
      %s362 = sadd.s32 %s361, %s24
      %s363 = sadd.s32 %s362, %s25
      %s364 = smul.u32 %s23, 10
      %s365 = sadd.s32 %s364, %s24
      %s366 = sadd.s32 %s365, %s25
      %p367 = scmp.lt.s32.totalorder %s366, 19
      %s368 = scalar_select %p367, %s366, 19
      %s369 = smul.addr %s368, 20
      %s370 = smul.addr %s369, 8
      %s371 = scalar_lea.vmem %s1, %s370
      %s372 = smul.u32 %s23, 10
      %s373 = sadd.s32 %s372, %s24
      %s374 = sadd.s32 %s373, %s25
      %p375 = scmp.lt.s32.totalorder %s25, 2
      %s376 = scalar_select %p375, %s25, 2
      %s377 = smul.addr %s376, 5
      %s378 = smul.addr %s377, 8
      %s379 = scalar_lea.vmem %s2, %s378
      %p380 = scmp.lt.s32.totalorder %s25, 2
      %s381 = scalar_select %p380, %s25, 2
      %s382 = smul.addr %s381, 5
      %s383 = smul.addr %s382, 8
      %s384 = scalar_lea.vmem %s3, %s383
      %s385 = smul.u32 %s23, 8
      %s386 = sadd.s32 %s385, %s24
      %p387 = scmp.lt.s32.totalorder %s386, 15
      %s388 = scalar_select %p387, %s386, 15
      %s389 = smul.addr %s388, 8
      %s390 = smul.addr %s389, 8
      %s391 = scalar_lea.vmem %s4, %s390
      %s392 = smul.u32 %s23, 8
      %s393 = sadd.s32 %s392, %s24
      %p394 = scmp.lt.s32.totalorder %s23, 1
      %s395 = scalar_select %p394, %s23, 1
      %s396 = scalar_lea.vmem %s5, %s395
      %p397 = scmp.lt.s32.totalorder %s23, 1
      %s398 = scalar_select %p397, %s23, 1
      %s399 = scalar_lea.vmem %s6, %s398
      %p400 = scmp.eq.s32.totalorder %s25, 0
      // Predicated region
      $region37: #{decoder_block_forward.6} parent=35 // pred_check
        %p401 = pneg %p400
      $region38: #{decoder_block_forward.6} parent=35 // pred_check_branch
        %403 = sbr.rel (%p401) target = $region40
      $region39: #{decoder_block_forward.6} parent=35 // pred_region
        %vm404 = vcmask 31744
        %405 = vst.msk [vmem:[#allocation2] sm:$0xff] %vm404, 0.0
        %406 = vst.msk [vmem:[#allocation2 + $0x8] sm:$0xff] %vm404, 0.0
        %407 = vst.msk [vmem:[#allocation2 + $0x10] sm:$0xff] %vm404, 0.0
        %408 = vst.msk [vmem:[#allocation2 + $0x18] sm:$0xff] %vm404, 0.0
        %409 = vst.msk [vmem:[#allocation2 + $0x20] sm:$0xff] %vm404, 0.0
        %410 = vst.msk [vmem:[#allocation2 + $0x28] sm:$0xff] %vm404, 0.0
        %411 = vst.msk [vmem:[#allocation2 + $0x30] sm:$0xff] %vm404, 0.0
        %412 = vst.msk [vmem:[#allocation2 + $0x38] sm:$0xff] %vm404, 0.0
      $region40: #{decoder_block_forward.6} parent=35 // pred_fallthru
        _
      %p413 = scmp.eq.s32.totalorder %s24, 0
      %p414 = pnand %p413, %p400
      %p415 = pneg %p414
      // Predicated region
      $region41: #{decoder_block_forward.6} parent=35 // pred_check
        _
      $region42: #{decoder_block_forward.6} parent=35 // pred_check_branch
        %417 = sbr.rel (%p414) target = $region44
      $region43: #{decoder_block_forward.6} parent=35 // pred_region
        %vm418 = vcmask 24576
        %419 = vst.msk [vmem:[%s396] sm:$0x1] %vm418, 0.0
        %420 = vst.msk [vmem:[%s399] sm:$0x1] %vm418, 0.0
      $region44: #{decoder_block_forward.6} parent=35 // pred_fallthru
        _
      %v421 = vld [vmem:[%s379] sm:$0xff]
      %v422 = vld [vmem:[%s379 + $0x8] sm:$0xff]
      %v423 = vld [vmem:[%s379 + $0x10] sm:$0xff]
      %v424 = vld [vmem:[%s379 + $0x18] sm:$0xff]
      %v425 = vld [vmem:[%s379 + $0x20] sm:$0xf]
      %v426 = vld [vmem:[%s384] sm:$0xff]
      %v427 = vld [vmem:[%s384 + $0x8] sm:$0xff]
      %v428 = vld [vmem:[%s384 + $0x10] sm:$0xff]
      %v429 = vld [vmem:[%s384 + $0x18] sm:$0xff]
      %v430 = vld [vmem:[%s384 + $0x20] sm:$0xf]
      %v431 = vld [vmem:[#allocation2] sm:$0xff]
      %v432 = vld [vmem:[#allocation2 + $0x8] sm:$0xff]
      %v433 = vld [vmem:[#allocation2 + $0x10] sm:$0xff]
      %v434 = vld [vmem:[#allocation2 + $0x18] sm:$0xff]
      %v435 = vld [vmem:[#allocation2 + $0x20] sm:$0xff]
      %v436 = vld [vmem:[#allocation2 + $0x28] sm:$0xff]
      %v437 = vld [vmem:[#allocation2 + $0x30] sm:$0xff]
      %v438 = vld [vmem:[#allocation2 + $0x38] sm:$0xff]
      %v439 = vld [vmem:[%s360] sm:$0xff]
      %v440 = vld [vmem:[%s360 + $0x10] sm:$0xff]
      %v441 = vld [vmem:[%s360 + $0x20] sm:$0xff]
      %v442 = vld [vmem:[%s360 + $0x30] sm:$0xff]
      %v443 = vld [vmem:[%s360 + $0x40] sm:$0xff]
      %v444 = vld [vmem:[%s360 + $0x50] sm:$0xff]
      %v445 = vld [vmem:[%s360 + $0x60] sm:$0xff]
      %v446 = vld [vmem:[%s360 + $0x70] sm:$0xff]
      %v447 = vld [vmem:[%s371] sm:$0xff]
      %v448 = vld [vmem:[%s371 + $0x10] sm:$0xff]
      %v449 = vld [vmem:[%s371 + $0x20] sm:$0xff]
      %v450 = vld [vmem:[%s371 + $0x30] sm:$0xff]
      %v451 = vld [vmem:[%s371 + $0x40] sm:$0xff]
      %v452 = vld [vmem:[%s371 + $0x50] sm:$0xff]
      %v453 = vld [vmem:[%s371 + $0x60] sm:$0xff]
      %v454 = vld [vmem:[%s371 + $0x70] sm:$0xff]
      %vm455 = vcmask 31744
      %v457 = vsel %vm455, %v439, 0
      %v460 = vsel %vm455, %v440, 0
      %v463 = vsel %vm455, %v441, 0
      %v466 = vsel %vm455, %v442, 0
      %v469 = vsel %vm455, %v443, 0
      %v472 = vsel %vm455, %v444, 0
      %v475 = vsel %vm455, %v445, 0
      %v478 = vsel %vm455, %v446, 0
      %vm480 = vcmask 1043456
      %v482 = vsel %vm480, %v421, 0
      %484 = vmatprep.subr.mxu0 0.0
      %485 = vmatpush1.msra.mxu0 0.0
      %486 = vmatprep.subr.mxu0 0.0
      %487 = vmatpush1.msra.mxu0 0.0
      %488 = vmatprep.subr.mxu0 0.0
      %489 = vmatpush1.msra.mxu0 0.0
      %490 = vmatprep.subr.mxu0 0.0
      %491 = vmatpush1.msra.mxu0 0.0
      %492 = vmatprep.subr.mxu0 0.0
      %493 = vmatpush1.msra.mxu0 0.0
      %494 = vmatprep.subr.mxu0 0.0
      %495 = vmatpush1.msra.mxu0 0.0
      %496 = vmatprep.subr.mxu0 0.0
      %497 = vmatpush1.msra.mxu0 0.0
      %498 = vmatprep.subr.mxu0 0.0
      %499 = vmatpush1.msra.mxu0 0.0
      %500 = vmatprep.subr.mxu0 0.0
      %501 = vmatpush1.msra.mxu0 0.0
      %502 = vmatprep.subr.mxu0 0.0
      %503 = vmatpush1.msra.mxu0 0.0
      %504 = vmatprep.subr.mxu0 0.0
      %505 = vmatpush1.msra.mxu0 0.0
      %506 = vmatprep.subr.mxu0 0.0
      %507 = vmatpush1.msra.mxu0 0.0
      %508 = vmatprep.subr.mxu0 0.0
      %509 = vmatpush1.msra.mxu0 0.0
      %510 = vmatprep.subr.mxu0 0.0
      %511 = vmatpush1.msra.mxu0 0.0
      %512 = vmatprep.subr.mxu0 0.0
      %513 = vmatpush1.msra.mxu0 0.0
      %514 = vmatprep.subr.mxu0 0.0
      %515 = vmatpush1.msra.mxu0 %v482
      %516 = vmatprep.subr.mxu0 0.0
      %517 = vmatpush2.msra.mxu0 0.0
      %518 = vmatprep.subr.mxu0 0.0
      %519 = vmatpush2.msra.mxu0 0.0
      %520 = vmatprep.subr.mxu0 0.0
      %521 = vmatpush2.msra.mxu0 0.0
      %522 = vmatprep.subr.mxu0 0.0
      %523 = vmatpush2.msra.mxu0 0.0
      %524 = vmatprep.subr.mxu0 0.0
      %525 = vmatpush2.msra.mxu0 0.0
      %526 = vmatprep.subr.mxu0 0.0
      %527 = vmatpush2.msra.mxu0 0.0
      %528 = vmatprep.subr.mxu0 0.0
      %529 = vmatpush2.msra.mxu0 0.0
      %530 = vmatprep.subr.mxu0 0.0
      %531 = vmatpush2.msra.mxu0 0.0
      %532 = vmatprep.subr.mxu0 0.0
      %533 = vmatpush2.msra.mxu0 0.0
      %534 = vmatprep.subr.mxu0 0.0
      %535 = vmatpush2.msra.mxu0 0.0
      %536 = vmatprep.subr.mxu0 0.0
      %537 = vmatpush2.msra.mxu0 0.0
      %538 = vmatprep.subr.mxu0 0.0
      %539 = vmatpush2.msra.mxu0 0.0
      %540 = vmatprep.subr.mxu0 0.0
      %541 = vmatpush2.msra.mxu0 0.0
      %542 = vmatprep.subr.mxu0 0.0
      %543 = vmatpush2.msra.mxu0 0.0
      %544 = vmatprep.subr.mxu0 0.0
      %545 = vmatpush2.msra.mxu0 0.0
      %546 = vmatprep.subr.mxu0 0.0
      %547 = vmatpush2.msra.mxu0 0.0
      %548 = vmatprep.mubr.f32.mxu0 0.0
      %549 = vmatmul.mubr.f32.gmra.mxu0 %v457
      %v550 = vpop.f32.mrf.mxu0
      %v551 = vadd.f32 0.0, %v550
      %v552 = vpop.f32.mrf.mxu0
      %553 = vmatprep.mubr.f32.mxu0 0.0
      %554 = vmatmul.mubr.f32.gmra.mxu0 %v460
      %v555 = vpop.f32.mrf.mxu0
      %v556 = vadd.f32 0.0, %v555
      %v557 = vpop.f32.mrf.mxu0
      %558 = vmatprep.mubr.f32.mxu0 0.0
      %559 = vmatmul.mubr.f32.gmra.mxu0 %v463
      %v560 = vpop.f32.mrf.mxu0
      %v561 = vadd.f32 0.0, %v560
      %v562 = vpop.f32.mrf.mxu0
      %563 = vmatprep.mubr.f32.mxu0 0.0
      %564 = vmatmul.mubr.f32.gmra.mxu0 %v466
      %v565 = vpop.f32.mrf.mxu0
      %v566 = vadd.f32 0.0, %v565
      %v567 = vpop.f32.mrf.mxu0
      %568 = vmatprep.mubr.f32.mxu0 0.0
      %569 = vmatmul.mubr.f32.gmra.mxu0 %v469
      %v570 = vpop.f32.mrf.mxu0
      %v571 = vadd.f32 0.0, %v570
      %v572 = vpop.f32.mrf.mxu0
      %573 = vmatprep.mubr.f32.mxu0 0.0
      %574 = vmatmul.mubr.f32.gmra.mxu0 %v472
      %v575 = vpop.f32.mrf.mxu0
      %v576 = vadd.f32 0.0, %v575
      %v577 = vpop.f32.mrf.mxu0
      %578 = vmatprep.mubr.f32.mxu0 0.0
      %579 = vmatmul.mubr.f32.gmra.mxu0 %v475
      %v580 = vpop.f32.mrf.mxu0
      %v581 = vadd.f32 0.0, %v580
      %v582 = vpop.f32.mrf.mxu0
      %583 = vmatprep.mubr.f32.mxu0 0.0
      %584 = vmatmul.mubr.f32.gmra.mxu0 %v478
      %v585 = vpop.f32.mrf.mxu0
      %v586 = vadd.f32 0.0, %v585
      %v587 = vpop.f32.mrf.mxu0
      %588 = vdwg.mxu0
      %v589 = vadd.f32 %v431, %v551
      %v590 = vadd.f32 %v432, %v556
      %v591 = vadd.f32 %v433, %v561
      %v592 = vadd.f32 %v434, %v566
      %v593 = vadd.f32 %v435, %v571
      %v594 = vadd.f32 %v436, %v576
      %v595 = vadd.f32 %v437, %v581
      %v596 = vadd.f32 %v438, %v586
      %v598 = vsel %vm455, %v447, 0
      %v601 = vsel %vm455, %v448, 0
      %v604 = vsel %vm455, %v449, 0
      %v607 = vsel %vm455, %v450, 0
      %v610 = vsel %vm455, %v451, 0
      %v613 = vsel %vm455, %v452, 0
      %v616 = vsel %vm455, %v453, 0
      %v619 = vsel %vm455, %v454, 0
      %v622 = vsel %vm480, %v426, 0
      %624 = vmatprep.subr.mxu0 0.0
      %625 = vmatpush1.msra.mxu0 0.0
      %626 = vmatprep.subr.mxu0 0.0
      %627 = vmatpush1.msra.mxu0 0.0
      %628 = vmatprep.subr.mxu0 0.0
      %629 = vmatpush1.msra.mxu0 0.0
      %630 = vmatprep.subr.mxu0 0.0
      %631 = vmatpush1.msra.mxu0 0.0
      %632 = vmatprep.subr.mxu0 0.0
      %633 = vmatpush1.msra.mxu0 0.0
      %634 = vmatprep.subr.mxu0 0.0
      %635 = vmatpush1.msra.mxu0 0.0
      %636 = vmatprep.subr.mxu0 0.0
      %637 = vmatpush1.msra.mxu0 0.0
      %638 = vmatprep.subr.mxu0 0.0
      %639 = vmatpush1.msra.mxu0 0.0
      %640 = vmatprep.subr.mxu0 0.0
      %641 = vmatpush1.msra.mxu0 0.0
      %642 = vmatprep.subr.mxu0 0.0
      %643 = vmatpush1.msra.mxu0 0.0
      %644 = vmatprep.subr.mxu0 0.0
      %645 = vmatpush1.msra.mxu0 0.0
      %646 = vmatprep.subr.mxu0 0.0
      %647 = vmatpush1.msra.mxu0 0.0
      %648 = vmatprep.subr.mxu0 0.0
      %649 = vmatpush1.msra.mxu0 0.0
      %650 = vmatprep.subr.mxu0 0.0
      %651 = vmatpush1.msra.mxu0 0.0
      %652 = vmatprep.subr.mxu0 0.0
      %653 = vmatpush1.msra.mxu0 0.0
      %654 = vmatprep.subr.mxu0 0.0
      %655 = vmatpush1.msra.mxu0 %v622
      %656 = vmatprep.subr.mxu0 0.0
      %657 = vmatpush2.msra.mxu0 0.0
      %658 = vmatprep.subr.mxu0 0.0
      %659 = vmatpush2.msra.mxu0 0.0
      %660 = vmatprep.subr.mxu0 0.0
      %661 = vmatpush2.msra.mxu0 0.0
      %662 = vmatprep.subr.mxu0 0.0
      %663 = vmatpush2.msra.mxu0 0.0
      %664 = vmatprep.subr.mxu0 0.0
      %665 = vmatpush2.msra.mxu0 0.0
      %666 = vmatprep.subr.mxu0 0.0
      %667 = vmatpush2.msra.mxu0 0.0
      %668 = vmatprep.subr.mxu0 0.0
      %669 = vmatpush2.msra.mxu0 0.0
      %670 = vmatprep.subr.mxu0 0.0
      %671 = vmatpush2.msra.mxu0 0.0
      %672 = vmatprep.subr.mxu0 0.0
      %673 = vmatpush2.msra.mxu0 0.0
      %674 = vmatprep.subr.mxu0 0.0
      %675 = vmatpush2.msra.mxu0 0.0
      %676 = vmatprep.subr.mxu0 0.0
      %677 = vmatpush2.msra.mxu0 0.0
      %678 = vmatprep.subr.mxu0 0.0
      %679 = vmatpush2.msra.mxu0 0.0
      %680 = vmatprep.subr.mxu0 0.0
      %681 = vmatpush2.msra.mxu0 0.0
      %682 = vmatprep.subr.mxu0 0.0
      %683 = vmatpush2.msra.mxu0 0.0
      %684 = vmatprep.subr.mxu0 0.0
      %685 = vmatpush2.msra.mxu0 0.0
      %686 = vmatprep.subr.mxu0 0.0
      %687 = vmatpush2.msra.mxu0 0.0
      %688 = vmatprep.mubr.f32.mxu0 0.0
      %689 = vmatmul.mubr.f32.gmra.mxu0 %v598
      %v690 = vpop.f32.mrf.mxu0
      %v691 = vadd.f32 0.0, %v690
      %v692 = vpop.f32.mrf.mxu0
      %693 = vmatprep.mubr.f32.mxu0 0.0
      %694 = vmatmul.mubr.f32.gmra.mxu0 %v601
      %v695 = vpop.f32.mrf.mxu0
      %v696 = vadd.f32 0.0, %v695
      %v697 = vpop.f32.mrf.mxu0
      %698 = vmatprep.mubr.f32.mxu0 0.0
      %699 = vmatmul.mubr.f32.gmra.mxu0 %v604
      %v700 = vpop.f32.mrf.mxu0
      %v701 = vadd.f32 0.0, %v700
      %v702 = vpop.f32.mrf.mxu0
      %703 = vmatprep.mubr.f32.mxu0 0.0
      %704 = vmatmul.mubr.f32.gmra.mxu0 %v607
      %v705 = vpop.f32.mrf.mxu0
      %v706 = vadd.f32 0.0, %v705
      %v707 = vpop.f32.mrf.mxu0
      %708 = vmatprep.mubr.f32.mxu0 0.0
      %709 = vmatmul.mubr.f32.gmra.mxu0 %v610
      %v710 = vpop.f32.mrf.mxu0
      %v711 = vadd.f32 0.0, %v710
      %v712 = vpop.f32.mrf.mxu0
      %713 = vmatprep.mubr.f32.mxu0 0.0
      %714 = vmatmul.mubr.f32.gmra.mxu0 %v613
      %v715 = vpop.f32.mrf.mxu0
      %v716 = vadd.f32 0.0, %v715
      %v717 = vpop.f32.mrf.mxu0
      %718 = vmatprep.mubr.f32.mxu0 0.0
      %719 = vmatmul.mubr.f32.gmra.mxu0 %v616
      %v720 = vpop.f32.mrf.mxu0
      %v721 = vadd.f32 0.0, %v720
      %v722 = vpop.f32.mrf.mxu0
      %723 = vmatprep.mubr.f32.mxu0 0.0
      %724 = vmatmul.mubr.f32.gmra.mxu0 %v619
      %v725 = vpop.f32.mrf.mxu0
      %v726 = vadd.f32 0.0, %v725
      %v727 = vpop.f32.mrf.mxu0
      %728 = vdwg.mxu0
      %v729 = vadd.f32 %v589, %v691
      %v730 = vadd.f32 %v590, %v696
      %v731 = vadd.f32 %v591, %v701
      %v732 = vadd.f32 %v592, %v706
      %v733 = vadd.f32 %v593, %v711
      %v734 = vadd.f32 %v594, %v716
      %v735 = vadd.f32 %v595, %v721
      %v736 = vadd.f32 %v596, %v726
      %v737 = vld [vmem:[%s360 + $0x1] sm:$0xff]
      %v738 = vld [vmem:[%s360 + $0x11] sm:$0xff]
      %v739 = vld [vmem:[%s360 + $0x21] sm:$0xff]
      %v740 = vld [vmem:[%s360 + $0x31] sm:$0xff]
      %v741 = vld [vmem:[%s360 + $0x41] sm:$0xff]
      %v742 = vld [vmem:[%s360 + $0x51] sm:$0xff]
      %v743 = vld [vmem:[%s360 + $0x61] sm:$0xff]
      %v744 = vld [vmem:[%s360 + $0x71] sm:$0xff]
      %v745 = vld [vmem:[%s371 + $0x1] sm:$0xff]
      %v746 = vld [vmem:[%s371 + $0x11] sm:$0xff]
      %v747 = vld [vmem:[%s371 + $0x21] sm:$0xff]
      %v748 = vld [vmem:[%s371 + $0x31] sm:$0xff]
      %v749 = vld [vmem:[%s371 + $0x41] sm:$0xff]
      %v750 = vld [vmem:[%s371 + $0x51] sm:$0xff]
      %v751 = vld [vmem:[%s371 + $0x61] sm:$0xff]
      %v752 = vld [vmem:[%s371 + $0x71] sm:$0xff]
      %v753 = vrot.slane %v421, 4
      %v755 = vsel %vm455, %v737, 0
      %v758 = vsel %vm455, %v738, 0
      %v761 = vsel %vm455, %v739, 0
      %v764 = vsel %vm455, %v740, 0
      %v767 = vsel %vm455, %v741, 0
      %v770 = vsel %vm455, %v742, 0
      %v773 = vsel %vm455, %v743, 0
      %v776 = vsel %vm455, %v744, 0
      %v778 = vsel %vm480, %v753, 0
      %780 = vmatprep.subr.mxu0 0.0
      %781 = vmatpush1.msra.mxu0 0.0
      %782 = vmatprep.subr.mxu0 0.0
      %783 = vmatpush1.msra.mxu0 0.0
      %784 = vmatprep.subr.mxu0 0.0
      %785 = vmatpush1.msra.mxu0 0.0
      %786 = vmatprep.subr.mxu0 0.0
      %787 = vmatpush1.msra.mxu0 0.0
      %788 = vmatprep.subr.mxu0 0.0
      %789 = vmatpush1.msra.mxu0 0.0
      %790 = vmatprep.subr.mxu0 0.0
      %791 = vmatpush1.msra.mxu0 0.0
      %792 = vmatprep.subr.mxu0 0.0
      %793 = vmatpush1.msra.mxu0 0.0
      %794 = vmatprep.subr.mxu0 0.0
      %795 = vmatpush1.msra.mxu0 0.0
      %796 = vmatprep.subr.mxu0 0.0
      %797 = vmatpush1.msra.mxu0 0.0
      %798 = vmatprep.subr.mxu0 0.0
      %799 = vmatpush1.msra.mxu0 0.0
      %800 = vmatprep.subr.mxu0 0.0
      %801 = vmatpush1.msra.mxu0 0.0
      %802 = vmatprep.subr.mxu0 0.0
      %803 = vmatpush1.msra.mxu0 0.0
      %804 = vmatprep.subr.mxu0 0.0
      %805 = vmatpush1.msra.mxu0 0.0
      %806 = vmatprep.subr.mxu0 0.0
      %807 = vmatpush1.msra.mxu0 0.0
      %808 = vmatprep.subr.mxu0 0.0
      %809 = vmatpush1.msra.mxu0 0.0
      %810 = vmatprep.subr.mxu0 0.0
      %811 = vmatpush1.msra.mxu0 %v778
      %812 = vmatprep.subr.mxu0 0.0
      %813 = vmatpush2.msra.mxu0 0.0
      %814 = vmatprep.subr.mxu0 0.0
      %815 = vmatpush2.msra.mxu0 0.0
      %816 = vmatprep.subr.mxu0 0.0
      %817 = vmatpush2.msra.mxu0 0.0
      %818 = vmatprep.subr.mxu0 0.0
      %819 = vmatpush2.msra.mxu0 0.0
      %820 = vmatprep.subr.mxu0 0.0
      %821 = vmatpush2.msra.mxu0 0.0
      %822 = vmatprep.subr.mxu0 0.0
      %823 = vmatpush2.msra.mxu0 0.0
      %824 = vmatprep.subr.mxu0 0.0
      %825 = vmatpush2.msra.mxu0 0.0
      %826 = vmatprep.subr.mxu0 0.0
      %827 = vmatpush2.msra.mxu0 0.0
      %828 = vmatprep.subr.mxu0 0.0
      %829 = vmatpush2.msra.mxu0 0.0
      %830 = vmatprep.subr.mxu0 0.0
      %831 = vmatpush2.msra.mxu0 0.0
      %832 = vmatprep.subr.mxu0 0.0
      %833 = vmatpush2.msra.mxu0 0.0
      %834 = vmatprep.subr.mxu0 0.0
      %835 = vmatpush2.msra.mxu0 0.0
      %836 = vmatprep.subr.mxu0 0.0
      %837 = vmatpush2.msra.mxu0 0.0
      %838 = vmatprep.subr.mxu0 0.0
      %839 = vmatpush2.msra.mxu0 0.0
      %840 = vmatprep.subr.mxu0 0.0
      %841 = vmatpush2.msra.mxu0 0.0
      %842 = vmatprep.subr.mxu0 0.0
      %843 = vmatpush2.msra.mxu0 0.0
      %844 = vmatprep.mubr.f32.mxu0 0.0
      %845 = vmatmul.mubr.f32.gmra.mxu0 %v755
      %v846 = vpop.f32.mrf.mxu0
      %v847 = vadd.f32 0.0, %v846
      %v848 = vpop.f32.mrf.mxu0
      %849 = vmatprep.mubr.f32.mxu0 0.0
      %850 = vmatmul.mubr.f32.gmra.mxu0 %v758
      %v851 = vpop.f32.mrf.mxu0
      %v852 = vadd.f32 0.0, %v851
      %v853 = vpop.f32.mrf.mxu0
      %854 = vmatprep.mubr.f32.mxu0 0.0
      %855 = vmatmul.mubr.f32.gmra.mxu0 %v761
      %v856 = vpop.f32.mrf.mxu0
      %v857 = vadd.f32 0.0, %v856
      %v858 = vpop.f32.mrf.mxu0
      %859 = vmatprep.mubr.f32.mxu0 0.0
      %860 = vmatmul.mubr.f32.gmra.mxu0 %v764
      %v861 = vpop.f32.mrf.mxu0
      %v862 = vadd.f32 0.0, %v861
      %v863 = vpop.f32.mrf.mxu0
      %864 = vmatprep.mubr.f32.mxu0 0.0
      %865 = vmatmul.mubr.f32.gmra.mxu0 %v767
      %v866 = vpop.f32.mrf.mxu0
      %v867 = vadd.f32 0.0, %v866
      %v868 = vpop.f32.mrf.mxu0
      %869 = vmatprep.mubr.f32.mxu0 0.0
      %870 = vmatmul.mubr.f32.gmra.mxu0 %v770
      %v871 = vpop.f32.mrf.mxu0
      %v872 = vadd.f32 0.0, %v871
      %v873 = vpop.f32.mrf.mxu0
      %874 = vmatprep.mubr.f32.mxu0 0.0
      %875 = vmatmul.mubr.f32.gmra.mxu0 %v773
      %v876 = vpop.f32.mrf.mxu0
      %v877 = vadd.f32 0.0, %v876
      %v878 = vpop.f32.mrf.mxu0
      %879 = vmatprep.mubr.f32.mxu0 0.0
      %880 = vmatmul.mubr.f32.gmra.mxu0 %v776
      %v881 = vpop.f32.mrf.mxu0
      %v882 = vadd.f32 0.0, %v881
      %v883 = vpop.f32.mrf.mxu0
      %884 = vdwg.mxu0
      %v885 = vadd.f32 %v729, %v847
      %v886 = vadd.f32 %v730, %v852
      %v887 = vadd.f32 %v731, %v857
      %v888 = vadd.f32 %v732, %v862
      %v889 = vadd.f32 %v733, %v867
      %v890 = vadd.f32 %v734, %v872
      %v891 = vadd.f32 %v735, %v877
      %v892 = vadd.f32 %v736, %v882
      %v893 = vrot.slane %v426, 4
      %v895 = vsel %vm455, %v745, 0
      %v898 = vsel %vm455, %v746, 0
      %v901 = vsel %vm455, %v747, 0
      %v904 = vsel %vm455, %v748, 0
      %v907 = vsel %vm455, %v749, 0
      %v910 = vsel %vm455, %v750, 0
      %v913 = vsel %vm455, %v751, 0
      %v916 = vsel %vm455, %v752, 0
      %v918 = vsel %vm480, %v893, 0
      %920 = vmatprep.subr.mxu0 0.0
      %921 = vmatpush1.msra.mxu0 0.0
      %922 = vmatprep.subr.mxu0 0.0
      %923 = vmatpush1.msra.mxu0 0.0
      %924 = vmatprep.subr.mxu0 0.0
      %925 = vmatpush1.msra.mxu0 0.0
      %926 = vmatprep.subr.mxu0 0.0
      %927 = vmatpush1.msra.mxu0 0.0
      %928 = vmatprep.subr.mxu0 0.0
      %929 = vmatpush1.msra.mxu0 0.0
      %930 = vmatprep.subr.mxu0 0.0
      %931 = vmatpush1.msra.mxu0 0.0
      %932 = vmatprep.subr.mxu0 0.0
      %933 = vmatpush1.msra.mxu0 0.0
      %934 = vmatprep.subr.mxu0 0.0
      %935 = vmatpush1.msra.mxu0 0.0
      %936 = vmatprep.subr.mxu0 0.0
      %937 = vmatpush1.msra.mxu0 0.0
      %938 = vmatprep.subr.mxu0 0.0
      %939 = vmatpush1.msra.mxu0 0.0
      %940 = vmatprep.subr.mxu0 0.0
      %941 = vmatpush1.msra.mxu0 0.0
      %942 = vmatprep.subr.mxu0 0.0
      %943 = vmatpush1.msra.mxu0 0.0
      %944 = vmatprep.subr.mxu0 0.0
      %945 = vmatpush1.msra.mxu0 0.0
      %946 = vmatprep.subr.mxu0 0.0
      %947 = vmatpush1.msra.mxu0 0.0
      %948 = vmatprep.subr.mxu0 0.0
      %949 = vmatpush1.msra.mxu0 0.0
      %950 = vmatprep.subr.mxu0 0.0
      %951 = vmatpush1.msra.mxu0 %v918
      %952 = vmatprep.subr.mxu0 0.0
      %953 = vmatpush2.msra.mxu0 0.0
      %954 = vmatprep.subr.mxu0 0.0
      %955 = vmatpush2.msra.mxu0 0.0
      %956 = vmatprep.subr.mxu0 0.0
      %957 = vmatpush2.msra.mxu0 0.0
      %958 = vmatprep.subr.mxu0 0.0
      %959 = vmatpush2.msra.mxu0 0.0
      %960 = vmatprep.subr.mxu0 0.0
      %961 = vmatpush2.msra.mxu0 0.0
      %962 = vmatprep.subr.mxu0 0.0
      %963 = vmatpush2.msra.mxu0 0.0
      %964 = vmatprep.subr.mxu0 0.0
      %965 = vmatpush2.msra.mxu0 0.0
      %966 = vmatprep.subr.mxu0 0.0
      %967 = vmatpush2.msra.mxu0 0.0
      %968 = vmatprep.subr.mxu0 0.0
      %969 = vmatpush2.msra.mxu0 0.0
      %970 = vmatprep.subr.mxu0 0.0
      %971 = vmatpush2.msra.mxu0 0.0
      %972 = vmatprep.subr.mxu0 0.0
      %973 = vmatpush2.msra.mxu0 0.0
      %974 = vmatprep.subr.mxu0 0.0
      %975 = vmatpush2.msra.mxu0 0.0
      %976 = vmatprep.subr.mxu0 0.0
      %977 = vmatpush2.msra.mxu0 0.0
      %978 = vmatprep.subr.mxu0 0.0
      %979 = vmatpush2.msra.mxu0 0.0
      %980 = vmatprep.subr.mxu0 0.0
      %981 = vmatpush2.msra.mxu0 0.0
      %982 = vmatprep.subr.mxu0 0.0
      %983 = vmatpush2.msra.mxu0 0.0
      %984 = vmatprep.mubr.f32.mxu0 0.0
      %985 = vmatmul.mubr.f32.gmra.mxu0 %v895
      %v986 = vpop.f32.mrf.mxu0
      %v987 = vadd.f32 0.0, %v986
      %v988 = vpop.f32.mrf.mxu0
      %989 = vmatprep.mubr.f32.mxu0 0.0
      %990 = vmatmul.mubr.f32.gmra.mxu0 %v898
      %v991 = vpop.f32.mrf.mxu0
      %v992 = vadd.f32 0.0, %v991
      %v993 = vpop.f32.mrf.mxu0
      %994 = vmatprep.mubr.f32.mxu0 0.0
      %995 = vmatmul.mubr.f32.gmra.mxu0 %v901
      %v996 = vpop.f32.mrf.mxu0
      %v997 = vadd.f32 0.0, %v996
      %v998 = vpop.f32.mrf.mxu0
      %999 = vmatprep.mubr.f32.mxu0 0.0
      %1000 = vmatmul.mubr.f32.gmra.mxu0 %v904
      %v1001 = vpop.f32.mrf.mxu0
      %v1002 = vadd.f32 0.0, %v1001
      %v1003 = vpop.f32.mrf.mxu0
      %1004 = vmatprep.mubr.f32.mxu0 0.0
      %1005 = vmatmul.mubr.f32.gmra.mxu0 %v907
      %v1006 = vpop.f32.mrf.mxu0
      %v1007 = vadd.f32 0.0, %v1006
      %v1008 = vpop.f32.mrf.mxu0
      %1009 = vmatprep.mubr.f32.mxu0 0.0
      %1010 = vmatmul.mubr.f32.gmra.mxu0 %v910
      %v1011 = vpop.f32.mrf.mxu0
      %v1012 = vadd.f32 0.0, %v1011
      %v1013 = vpop.f32.mrf.mxu0
      %1014 = vmatprep.mubr.f32.mxu0 0.0
      %1015 = vmatmul.mubr.f32.gmra.mxu0 %v913
      %v1016 = vpop.f32.mrf.mxu0
      %v1017 = vadd.f32 0.0, %v1016
      %v1018 = vpop.f32.mrf.mxu0
      %1019 = vmatprep.mubr.f32.mxu0 0.0
      %1020 = vmatmul.mubr.f32.gmra.mxu0 %v916
      %v1021 = vpop.f32.mrf.mxu0
      %v1022 = vadd.f32 0.0, %v1021
      %v1023 = vpop.f32.mrf.mxu0
      %1024 = vdwg.mxu0
      %v1025 = vadd.f32 %v885, %v987
      %v1026 = vadd.f32 %v886, %v992
      %v1027 = vadd.f32 %v887, %v997
      %v1028 = vadd.f32 %v888, %v1002
      %v1029 = vadd.f32 %v889, %v1007
      %v1030 = vadd.f32 %v890, %v1012
      %v1031 = vadd.f32 %v891, %v1017
      %v1032 = vadd.f32 %v892, %v1022
      %v1033 = vld [vmem:[%s360 + $0x2] sm:$0xff]
      %v1034 = vld [vmem:[%s360 + $0x12] sm:$0xff]
      %v1035 = vld [vmem:[%s360 + $0x22] sm:$0xff]
      %v1036 = vld [vmem:[%s360 + $0x32] sm:$0xff]
      %v1037 = vld [vmem:[%s360 + $0x42] sm:$0xff]
      %v1038 = vld [vmem:[%s360 + $0x52] sm:$0xff]
      %v1039 = vld [vmem:[%s360 + $0x62] sm:$0xff]
      %v1040 = vld [vmem:[%s360 + $0x72] sm:$0xff]
      %v1041 = vld [vmem:[%s371 + $0x2] sm:$0xff]
      %v1042 = vld [vmem:[%s371 + $0x12] sm:$0xff]
      %v1043 = vld [vmem:[%s371 + $0x22] sm:$0xff]
      %v1044 = vld [vmem:[%s371 + $0x32] sm:$0xff]
      %v1045 = vld [vmem:[%s371 + $0x42] sm:$0xff]
      %v1046 = vld [vmem:[%s371 + $0x52] sm:$0xff]
      %v1047 = vld [vmem:[%s371 + $0x62] sm:$0xff]
      %v1048 = vld [vmem:[%s371 + $0x72] sm:$0xff]
      %v1050 = vsel %vm455, %v1033, 0
      %v1053 = vsel %vm455, %v1034, 0
      %v1056 = vsel %vm455, %v1035, 0
      %v1059 = vsel %vm455, %v1036, 0
      %v1062 = vsel %vm455, %v1037, 0
      %v1065 = vsel %vm455, %v1038, 0
      %v1068 = vsel %vm455, %v1039, 0
      %v1071 = vsel %vm455, %v1040, 0
      %v1074 = vsel %vm480, %v422, 0
      %1076 = vmatprep.subr.mxu0 0.0
      %1077 = vmatpush1.msra.mxu0 0.0
      %1078 = vmatprep.subr.mxu0 0.0
      %1079 = vmatpush1.msra.mxu0 0.0
      %1080 = vmatprep.subr.mxu0 0.0
      %1081 = vmatpush1.msra.mxu0 0.0
      %1082 = vmatprep.subr.mxu0 0.0
      %1083 = vmatpush1.msra.mxu0 0.0
      %1084 = vmatprep.subr.mxu0 0.0
      %1085 = vmatpush1.msra.mxu0 0.0
      %1086 = vmatprep.subr.mxu0 0.0
      %1087 = vmatpush1.msra.mxu0 0.0
      %1088 = vmatprep.subr.mxu0 0.0
      %1089 = vmatpush1.msra.mxu0 0.0
      %1090 = vmatprep.subr.mxu0 0.0
      %1091 = vmatpush1.msra.mxu0 0.0
      %1092 = vmatprep.subr.mxu0 0.0
      %1093 = vmatpush1.msra.mxu0 0.0
      %1094 = vmatprep.subr.mxu0 0.0
      %1095 = vmatpush1.msra.mxu0 0.0
      %1096 = vmatprep.subr.mxu0 0.0
      %1097 = vmatpush1.msra.mxu0 0.0
      %1098 = vmatprep.subr.mxu0 0.0
      %1099 = vmatpush1.msra.mxu0 0.0
      %1100 = vmatprep.subr.mxu0 0.0
      %1101 = vmatpush1.msra.mxu0 0.0
      %1102 = vmatprep.subr.mxu0 0.0
      %1103 = vmatpush1.msra.mxu0 0.0
      %1104 = vmatprep.subr.mxu0 0.0
      %1105 = vmatpush1.msra.mxu0 0.0
      %1106 = vmatprep.subr.mxu0 0.0
      %1107 = vmatpush1.msra.mxu0 %v1074
      %1108 = vmatprep.subr.mxu0 0.0
      %1109 = vmatpush2.msra.mxu0 0.0
      %1110 = vmatprep.subr.mxu0 0.0
      %1111 = vmatpush2.msra.mxu0 0.0
      %1112 = vmatprep.subr.mxu0 0.0
      %1113 = vmatpush2.msra.mxu0 0.0
      %1114 = vmatprep.subr.mxu0 0.0
      %1115 = vmatpush2.msra.mxu0 0.0
      %1116 = vmatprep.subr.mxu0 0.0
      %1117 = vmatpush2.msra.mxu0 0.0
      %1118 = vmatprep.subr.mxu0 0.0
      %1119 = vmatpush2.msra.mxu0 0.0
      %1120 = vmatprep.subr.mxu0 0.0
      %1121 = vmatpush2.msra.mxu0 0.0
      %1122 = vmatprep.subr.mxu0 0.0
      %1123 = vmatpush2.msra.mxu0 0.0
      %1124 = vmatprep.subr.mxu0 0.0
      %1125 = vmatpush2.msra.mxu0 0.0
      %1126 = vmatprep.subr.mxu0 0.0
      %1127 = vmatpush2.msra.mxu0 0.0
      %1128 = vmatprep.subr.mxu0 0.0
      %1129 = vmatpush2.msra.mxu0 0.0
      %1130 = vmatprep.subr.mxu0 0.0
      %1131 = vmatpush2.msra.mxu0 0.0
      %1132 = vmatprep.subr.mxu0 0.0
      %1133 = vmatpush2.msra.mxu0 0.0
      %1134 = vmatprep.subr.mxu0 0.0
      %1135 = vmatpush2.msra.mxu0 0.0
      %1136 = vmatprep.subr.mxu0 0.0
      %1137 = vmatpush2.msra.mxu0 0.0
      %1138 = vmatprep.subr.mxu0 0.0
      %1139 = vmatpush2.msra.mxu0 0.0
      %1140 = vmatprep.mubr.f32.mxu0 0.0
      %1141 = vmatmul.mubr.f32.gmra.mxu0 %v1050
      %v1142 = vpop.f32.mrf.mxu0
      %v1143 = vadd.f32 0.0, %v1142
      %v1144 = vpop.f32.mrf.mxu0
      %1145 = vmatprep.mubr.f32.mxu0 0.0
      %1146 = vmatmul.mubr.f32.gmra.mxu0 %v1053
      %v1147 = vpop.f32.mrf.mxu0
      %v1148 = vadd.f32 0.0, %v1147
      %v1149 = vpop.f32.mrf.mxu0
      %1150 = vmatprep.mubr.f32.mxu0 0.0
      %1151 = vmatmul.mubr.f32.gmra.mxu0 %v1056
      %v1152 = vpop.f32.mrf.mxu0
      %v1153 = vadd.f32 0.0, %v1152
      %v1154 = vpop.f32.mrf.mxu0
      %1155 = vmatprep.mubr.f32.mxu0 0.0
      %1156 = vmatmul.mubr.f32.gmra.mxu0 %v1059
      %v1157 = vpop.f32.mrf.mxu0
      %v1158 = vadd.f32 0.0, %v1157
      %v1159 = vpop.f32.mrf.mxu0
      %1160 = vmatprep.mubr.f32.mxu0 0.0
      %1161 = vmatmul.mubr.f32.gmra.mxu0 %v1062
      %v1162 = vpop.f32.mrf.mxu0
      %v1163 = vadd.f32 0.0, %v1162
      %v1164 = vpop.f32.mrf.mxu0
      %1165 = vmatprep.mubr.f32.mxu0 0.0
      %1166 = vmatmul.mubr.f32.gmra.mxu0 %v1065
      %v1167 = vpop.f32.mrf.mxu0
      %v1168 = vadd.f32 0.0, %v1167
      %v1169 = vpop.f32.mrf.mxu0
      %1170 = vmatprep.mubr.f32.mxu0 0.0
      %1171 = vmatmul.mubr.f32.gmra.mxu0 %v1068
      %v1172 = vpop.f32.mrf.mxu0
      %v1173 = vadd.f32 0.0, %v1172
      %v1174 = vpop.f32.mrf.mxu0
      %1175 = vmatprep.mubr.f32.mxu0 0.0
      %1176 = vmatmul.mubr.f32.gmra.mxu0 %v1071
      %v1177 = vpop.f32.mrf.mxu0
      %v1178 = vadd.f32 0.0, %v1177
      %v1179 = vpop.f32.mrf.mxu0
      %1180 = vdwg.mxu0
      %v1181 = vadd.f32 %v1025, %v1143
      %v1182 = vadd.f32 %v1026, %v1148
      %v1183 = vadd.f32 %v1027, %v1153
      %v1184 = vadd.f32 %v1028, %v1158
      %v1185 = vadd.f32 %v1029, %v1163
      %v1186 = vadd.f32 %v1030, %v1168
      %v1187 = vadd.f32 %v1031, %v1173
      %v1188 = vadd.f32 %v1032, %v1178
      %v1190 = vsel %vm455, %v1041, 0
      %v1193 = vsel %vm455, %v1042, 0
      %v1196 = vsel %vm455, %v1043, 0
      %v1199 = vsel %vm455, %v1044, 0
      %v1202 = vsel %vm455, %v1045, 0
      %v1205 = vsel %vm455, %v1046, 0
      %v1208 = vsel %vm455, %v1047, 0
      %v1211 = vsel %vm455, %v1048, 0
      %v1214 = vsel %vm480, %v427, 0
      %1216 = vmatprep.subr.mxu0 0.0
      %1217 = vmatpush1.msra.mxu0 0.0
      %1218 = vmatprep.subr.mxu0 0.0
      %1219 = vmatpush1.msra.mxu0 0.0
      %1220 = vmatprep.subr.mxu0 0.0
      %1221 = vmatpush1.msra.mxu0 0.0
      %1222 = vmatprep.subr.mxu0 0.0
      %1223 = vmatpush1.msra.mxu0 0.0
      %1224 = vmatprep.subr.mxu0 0.0
      %1225 = vmatpush1.msra.mxu0 0.0
      %1226 = vmatprep.subr.mxu0 0.0
      %1227 = vmatpush1.msra.mxu0 0.0
      %1228 = vmatprep.subr.mxu0 0.0
      %1229 = vmatpush1.msra.mxu0 0.0
      %1230 = vmatprep.subr.mxu0 0.0
      %1231 = vmatpush1.msra.mxu0 0.0
      %1232 = vmatprep.subr.mxu0 0.0
      %1233 = vmatpush1.msra.mxu0 0.0
      %1234 = vmatprep.subr.mxu0 0.0
      %1235 = vmatpush1.msra.mxu0 0.0
      %1236 = vmatprep.subr.mxu0 0.0
      %1237 = vmatpush1.msra.mxu0 0.0
      %1238 = vmatprep.subr.mxu0 0.0
      %1239 = vmatpush1.msra.mxu0 0.0
      %1240 = vmatprep.subr.mxu0 0.0
      %1241 = vmatpush1.msra.mxu0 0.0
      %1242 = vmatprep.subr.mxu0 0.0
      %1243 = vmatpush1.msra.mxu0 0.0
      %1244 = vmatprep.subr.mxu0 0.0
      %1245 = vmatpush1.msra.mxu0 0.0
      %1246 = vmatprep.subr.mxu0 0.0
      %1247 = vmatpush1.msra.mxu0 %v1214
      %1248 = vmatprep.subr.mxu0 0.0
      %1249 = vmatpush2.msra.mxu0 0.0
      %1250 = vmatprep.subr.mxu0 0.0
      %1251 = vmatpush2.msra.mxu0 0.0
      %1252 = vmatprep.subr.mxu0 0.0
      %1253 = vmatpush2.msra.mxu0 0.0
      %1254 = vmatprep.subr.mxu0 0.0
      %1255 = vmatpush2.msra.mxu0 0.0
      %1256 = vmatprep.subr.mxu0 0.0
      %1257 = vmatpush2.msra.mxu0 0.0
      %1258 = vmatprep.subr.mxu0 0.0
      %1259 = vmatpush2.msra.mxu0 0.0
      %1260 = vmatprep.subr.mxu0 0.0
      %1261 = vmatpush2.msra.mxu0 0.0
      %1262 = vmatprep.subr.mxu0 0.0
      %1263 = vmatpush2.msra.mxu0 0.0
      %1264 = vmatprep.subr.mxu0 0.0
      %1265 = vmatpush2.msra.mxu0 0.0
      %1266 = vmatprep.subr.mxu0 0.0
      %1267 = vmatpush2.msra.mxu0 0.0
      %1268 = vmatprep.subr.mxu0 0.0
      %1269 = vmatpush2.msra.mxu0 0.0
      %1270 = vmatprep.subr.mxu0 0.0
      %1271 = vmatpush2.msra.mxu0 0.0
      %1272 = vmatprep.subr.mxu0 0.0
      %1273 = vmatpush2.msra.mxu0 0.0
      %1274 = vmatprep.subr.mxu0 0.0
      %1275 = vmatpush2.msra.mxu0 0.0
      %1276 = vmatprep.subr.mxu0 0.0
      %1277 = vmatpush2.msra.mxu0 0.0
      %1278 = vmatprep.subr.mxu0 0.0
      %1279 = vmatpush2.msra.mxu0 0.0
      %1280 = vmatprep.mubr.f32.mxu0 0.0
      %1281 = vmatmul.mubr.f32.gmra.mxu0 %v1190
      %v1282 = vpop.f32.mrf.mxu0
      %v1283 = vadd.f32 0.0, %v1282
      %v1284 = vpop.f32.mrf.mxu0
      %1285 = vmatprep.mubr.f32.mxu0 0.0
      %1286 = vmatmul.mubr.f32.gmra.mxu0 %v1193
      %v1287 = vpop.f32.mrf.mxu0
      %v1288 = vadd.f32 0.0, %v1287
      %v1289 = vpop.f32.mrf.mxu0
      %1290 = vmatprep.mubr.f32.mxu0 0.0
      %1291 = vmatmul.mubr.f32.gmra.mxu0 %v1196
      %v1292 = vpop.f32.mrf.mxu0
      %v1293 = vadd.f32 0.0, %v1292
      %v1294 = vpop.f32.mrf.mxu0
      %1295 = vmatprep.mubr.f32.mxu0 0.0
      %1296 = vmatmul.mubr.f32.gmra.mxu0 %v1199
      %v1297 = vpop.f32.mrf.mxu0
      %v1298 = vadd.f32 0.0, %v1297
      %v1299 = vpop.f32.mrf.mxu0
      %1300 = vmatprep.mubr.f32.mxu0 0.0
      %1301 = vmatmul.mubr.f32.gmra.mxu0 %v1202
      %v1302 = vpop.f32.mrf.mxu0
      %v1303 = vadd.f32 0.0, %v1302
      %v1304 = vpop.f32.mrf.mxu0
      %1305 = vmatprep.mubr.f32.mxu0 0.0
      %1306 = vmatmul.mubr.f32.gmra.mxu0 %v1205
      %v1307 = vpop.f32.mrf.mxu0
      %v1308 = vadd.f32 0.0, %v1307
      %v1309 = vpop.f32.mrf.mxu0
      %1310 = vmatprep.mubr.f32.mxu0 0.0
      %1311 = vmatmul.mubr.f32.gmra.mxu0 %v1208
      %v1312 = vpop.f32.mrf.mxu0
      %v1313 = vadd.f32 0.0, %v1312
      %v1314 = vpop.f32.mrf.mxu0
      %1315 = vmatprep.mubr.f32.mxu0 0.0
      %1316 = vmatmul.mubr.f32.gmra.mxu0 %v1211
      %v1317 = vpop.f32.mrf.mxu0
      %v1318 = vadd.f32 0.0, %v1317
      %v1319 = vpop.f32.mrf.mxu0
      %1320 = vdwg.mxu0
      %v1321 = vadd.f32 %v1181, %v1283
      %v1322 = vadd.f32 %v1182, %v1288
      %v1323 = vadd.f32 %v1183, %v1293
      %v1324 = vadd.f32 %v1184, %v1298
      %v1325 = vadd.f32 %v1185, %v1303
      %v1326 = vadd.f32 %v1186, %v1308
      %v1327 = vadd.f32 %v1187, %v1313
      %v1328 = vadd.f32 %v1188, %v1318
      %s1329 = scalar_lea.vmem %s360, 16
      %v1330 = vld [vmem:[%s1329] sm:$0xff]
      %v1331 = vld [vmem:[%s1329 + $0x10] sm:$0xff]
      %v1332 = vld [vmem:[%s1329 + $0x20] sm:$0xff]
      %v1333 = vld [vmem:[%s1329 + $0x30] sm:$0xff]
      %v1334 = vld [vmem:[%s1329 + $0x40] sm:$0xff]
      %v1335 = vld [vmem:[%s1329 + $0x50] sm:$0xff]
      %v1336 = vld [vmem:[%s1329 + $0x60] sm:$0xff]
      %v1337 = vld [vmem:[%s1329 + $0x70] sm:$0xff]
      %s1338 = scalar_lea.vmem %s371, 16
      %v1339 = vld [vmem:[%s1338] sm:$0xff]
      %v1340 = vld [vmem:[%s1338 + $0x10] sm:$0xff]
      %v1341 = vld [vmem:[%s1338 + $0x20] sm:$0xff]
      %v1342 = vld [vmem:[%s1338 + $0x30] sm:$0xff]
      %v1343 = vld [vmem:[%s1338 + $0x40] sm:$0xff]
      %v1344 = vld [vmem:[%s1338 + $0x50] sm:$0xff]
      %v1345 = vld [vmem:[%s1338 + $0x60] sm:$0xff]
      %v1346 = vld [vmem:[%s1338 + $0x70] sm:$0xff]
      %v1347 = vrot.slane %v422, 4
      %v1349 = vsel %vm455, %v1330, 0
      %v1352 = vsel %vm455, %v1331, 0
      %v1355 = vsel %vm455, %v1332, 0
      %v1358 = vsel %vm455, %v1333, 0
      %v1361 = vsel %vm455, %v1334, 0
      %v1364 = vsel %vm455, %v1335, 0
      %v1367 = vsel %vm455, %v1336, 0
      %v1370 = vsel %vm455, %v1337, 0
      %v1372 = vsel %vm480, %v1347, 0
      %1374 = vmatprep.subr.mxu0 0.0
      %1375 = vmatpush1.msra.mxu0 0.0
      %1376 = vmatprep.subr.mxu0 0.0
      %1377 = vmatpush1.msra.mxu0 0.0
      %1378 = vmatprep.subr.mxu0 0.0
      %1379 = vmatpush1.msra.mxu0 0.0
      %1380 = vmatprep.subr.mxu0 0.0
      %1381 = vmatpush1.msra.mxu0 0.0
      %1382 = vmatprep.subr.mxu0 0.0
      %1383 = vmatpush1.msra.mxu0 0.0
      %1384 = vmatprep.subr.mxu0 0.0
      %1385 = vmatpush1.msra.mxu0 0.0
      %1386 = vmatprep.subr.mxu0 0.0
      %1387 = vmatpush1.msra.mxu0 0.0
      %1388 = vmatprep.subr.mxu0 0.0
      %1389 = vmatpush1.msra.mxu0 0.0
      %1390 = vmatprep.subr.mxu0 0.0
      %1391 = vmatpush1.msra.mxu0 0.0
      %1392 = vmatprep.subr.mxu0 0.0
      %1393 = vmatpush1.msra.mxu0 0.0
      %1394 = vmatprep.subr.mxu0 0.0
      %1395 = vmatpush1.msra.mxu0 0.0
      %1396 = vmatprep.subr.mxu0 0.0
      %1397 = vmatpush1.msra.mxu0 0.0
      %1398 = vmatprep.subr.mxu0 0.0
      %1399 = vmatpush1.msra.mxu0 0.0
      %1400 = vmatprep.subr.mxu0 0.0
      %1401 = vmatpush1.msra.mxu0 0.0
      %1402 = vmatprep.subr.mxu0 0.0
      %1403 = vmatpush1.msra.mxu0 0.0
      %1404 = vmatprep.subr.mxu0 0.0
      %1405 = vmatpush1.msra.mxu0 %v1372
      %1406 = vmatprep.subr.mxu0 0.0
      %1407 = vmatpush2.msra.mxu0 0.0
      %1408 = vmatprep.subr.mxu0 0.0
      %1409 = vmatpush2.msra.mxu0 0.0
      %1410 = vmatprep.subr.mxu0 0.0
      %1411 = vmatpush2.msra.mxu0 0.0
      %1412 = vmatprep.subr.mxu0 0.0
      %1413 = vmatpush2.msra.mxu0 0.0
      %1414 = vmatprep.subr.mxu0 0.0
      %1415 = vmatpush2.msra.mxu0 0.0
      %1416 = vmatprep.subr.mxu0 0.0
      %1417 = vmatpush2.msra.mxu0 0.0
      %1418 = vmatprep.subr.mxu0 0.0
      %1419 = vmatpush2.msra.mxu0 0.0
      %1420 = vmatprep.subr.mxu0 0.0
      %1421 = vmatpush2.msra.mxu0 0.0
      %1422 = vmatprep.subr.mxu0 0.0
      %1423 = vmatpush2.msra.mxu0 0.0
      %1424 = vmatprep.subr.mxu0 0.0
      %1425 = vmatpush2.msra.mxu0 0.0
      %1426 = vmatprep.subr.mxu0 0.0
      %1427 = vmatpush2.msra.mxu0 0.0
      %1428 = vmatprep.subr.mxu0 0.0
      %1429 = vmatpush2.msra.mxu0 0.0
      %1430 = vmatprep.subr.mxu0 0.0
      %1431 = vmatpush2.msra.mxu0 0.0
      %1432 = vmatprep.subr.mxu0 0.0
      %1433 = vmatpush2.msra.mxu0 0.0
      %1434 = vmatprep.subr.mxu0 0.0
      %1435 = vmatpush2.msra.mxu0 0.0
      %1436 = vmatprep.subr.mxu0 0.0
      %1437 = vmatpush2.msra.mxu0 0.0
      %1438 = vmatprep.mubr.f32.mxu0 0.0
      %1439 = vmatmul.mubr.f32.gmra.mxu0 %v1349
      %v1440 = vpop.f32.mrf.mxu0
      %v1441 = vadd.f32 0.0, %v1440
      %v1442 = vpop.f32.mrf.mxu0
      %1443 = vmatprep.mubr.f32.mxu0 0.0
      %1444 = vmatmul.mubr.f32.gmra.mxu0 %v1352
      %v1445 = vpop.f32.mrf.mxu0
      %v1446 = vadd.f32 0.0, %v1445
      %v1447 = vpop.f32.mrf.mxu0
      %1448 = vmatprep.mubr.f32.mxu0 0.0
      %1449 = vmatmul.mubr.f32.gmra.mxu0 %v1355
      %v1450 = vpop.f32.mrf.mxu0
      %v1451 = vadd.f32 0.0, %v1450
      %v1452 = vpop.f32.mrf.mxu0
      %1453 = vmatprep.mubr.f32.mxu0 0.0
      %1454 = vmatmul.mubr.f32.gmra.mxu0 %v1358
      %v1455 = vpop.f32.mrf.mxu0
      %v1456 = vadd.f32 0.0, %v1455
      %v1457 = vpop.f32.mrf.mxu0
      %1458 = vmatprep.mubr.f32.mxu0 0.0
      %1459 = vmatmul.mubr.f32.gmra.mxu0 %v1361
      %v1460 = vpop.f32.mrf.mxu0
      %v1461 = vadd.f32 0.0, %v1460
      %v1462 = vpop.f32.mrf.mxu0
      %1463 = vmatprep.mubr.f32.mxu0 0.0
      %1464 = vmatmul.mubr.f32.gmra.mxu0 %v1364
      %v1465 = vpop.f32.mrf.mxu0
      %v1466 = vadd.f32 0.0, %v1465
      %v1467 = vpop.f32.mrf.mxu0
      %1468 = vmatprep.mubr.f32.mxu0 0.0
      %1469 = vmatmul.mubr.f32.gmra.mxu0 %v1367
      %v1470 = vpop.f32.mrf.mxu0
      %v1471 = vadd.f32 0.0, %v1470
      %v1472 = vpop.f32.mrf.mxu0
      %1473 = vmatprep.mubr.f32.mxu0 0.0
      %1474 = vmatmul.mubr.f32.gmra.mxu0 %v1370
      %v1475 = vpop.f32.mrf.mxu0
      %v1476 = vadd.f32 0.0, %v1475
      %v1477 = vpop.f32.mrf.mxu0
      %1478 = vdwg.mxu0
      %v1479 = vadd.f32 %v1321, %v1441
      %v1480 = vadd.f32 %v1322, %v1446
      %v1481 = vadd.f32 %v1323, %v1451
      %v1482 = vadd.f32 %v1324, %v1456
      %v1483 = vadd.f32 %v1325, %v1461
      %v1484 = vadd.f32 %v1326, %v1466
      %v1485 = vadd.f32 %v1327, %v1471
      %v1486 = vadd.f32 %v1328, %v1476
      %v1487 = vrot.slane %v427, 4
      %v1489 = vsel %vm455, %v1339, 0
      %v1492 = vsel %vm455, %v1340, 0
      %v1495 = vsel %vm455, %v1341, 0
      %v1498 = vsel %vm455, %v1342, 0
      %v1501 = vsel %vm455, %v1343, 0
      %v1504 = vsel %vm455, %v1344, 0
      %v1507 = vsel %vm455, %v1345, 0
      %v1510 = vsel %vm455, %v1346, 0
      %v1512 = vsel %vm480, %v1487, 0
      %1514 = vmatprep.subr.mxu0 0.0
      %1515 = vmatpush1.msra.mxu0 0.0
      %1516 = vmatprep.subr.mxu0 0.0
      %1517 = vmatpush1.msra.mxu0 0.0
      %1518 = vmatprep.subr.mxu0 0.0
      %1519 = vmatpush1.msra.mxu0 0.0
      %1520 = vmatprep.subr.mxu0 0.0
      %1521 = vmatpush1.msra.mxu0 0.0
      %1522 = vmatprep.subr.mxu0 0.0
      %1523 = vmatpush1.msra.mxu0 0.0
      %1524 = vmatprep.subr.mxu0 0.0
      %1525 = vmatpush1.msra.mxu0 0.0
      %1526 = vmatprep.subr.mxu0 0.0
      %1527 = vmatpush1.msra.mxu0 0.0
      %1528 = vmatprep.subr.mxu0 0.0
      %1529 = vmatpush1.msra.mxu0 0.0
      %1530 = vmatprep.subr.mxu0 0.0
      %1531 = vmatpush1.msra.mxu0 0.0
      %1532 = vmatprep.subr.mxu0 0.0
      %1533 = vmatpush1.msra.mxu0 0.0
      %1534 = vmatprep.subr.mxu0 0.0
      %1535 = vmatpush1.msra.mxu0 0.0
      %1536 = vmatprep.subr.mxu0 0.0
      %1537 = vmatpush1.msra.mxu0 0.0
      %1538 = vmatprep.subr.mxu0 0.0
      %1539 = vmatpush1.msra.mxu0 0.0
      %1540 = vmatprep.subr.mxu0 0.0
      %1541 = vmatpush1.msra.mxu0 0.0
      %1542 = vmatprep.subr.mxu0 0.0
      %1543 = vmatpush1.msra.mxu0 0.0
      %1544 = vmatprep.subr.mxu0 0.0
      %1545 = vmatpush1.msra.mxu0 %v1512
      %1546 = vmatprep.subr.mxu0 0.0
      %1547 = vmatpush2.msra.mxu0 0.0
      %1548 = vmatprep.subr.mxu0 0.0
      %1549 = vmatpush2.msra.mxu0 0.0
      %1550 = vmatprep.subr.mxu0 0.0
      %1551 = vmatpush2.msra.mxu0 0.0
      %1552 = vmatprep.subr.mxu0 0.0
      %1553 = vmatpush2.msra.mxu0 0.0
      %1554 = vmatprep.subr.mxu0 0.0
      %1555 = vmatpush2.msra.mxu0 0.0
      %1556 = vmatprep.subr.mxu0 0.0
      %1557 = vmatpush2.msra.mxu0 0.0
      %1558 = vmatprep.subr.mxu0 0.0
      %1559 = vmatpush2.msra.mxu0 0.0
      %1560 = vmatprep.subr.mxu0 0.0
      %1561 = vmatpush2.msra.mxu0 0.0
      %1562 = vmatprep.subr.mxu0 0.0
      %1563 = vmatpush2.msra.mxu0 0.0
      %1564 = vmatprep.subr.mxu0 0.0
      %1565 = vmatpush2.msra.mxu0 0.0
      %1566 = vmatprep.subr.mxu0 0.0
      %1567 = vmatpush2.msra.mxu0 0.0
      %1568 = vmatprep.subr.mxu0 0.0
      %1569 = vmatpush2.msra.mxu0 0.0
      %1570 = vmatprep.subr.mxu0 0.0
      %1571 = vmatpush2.msra.mxu0 0.0
      %1572 = vmatprep.subr.mxu0 0.0
      %1573 = vmatpush2.msra.mxu0 0.0
      %1574 = vmatprep.subr.mxu0 0.0
      %1575 = vmatpush2.msra.mxu0 0.0
      %1576 = vmatprep.subr.mxu0 0.0
      %1577 = vmatpush2.msra.mxu0 0.0
      %1578 = vmatprep.mubr.f32.mxu0 0.0
      %1579 = vmatmul.mubr.f32.gmra.mxu0 %v1489
      %v1580 = vpop.f32.mrf.mxu0
      %v1581 = vadd.f32 0.0, %v1580
      %v1582 = vpop.f32.mrf.mxu0
      %1583 = vmatprep.mubr.f32.mxu0 0.0
      %1584 = vmatmul.mubr.f32.gmra.mxu0 %v1492
      %v1585 = vpop.f32.mrf.mxu0
      %v1586 = vadd.f32 0.0, %v1585
      %v1587 = vpop.f32.mrf.mxu0
      %1588 = vmatprep.mubr.f32.mxu0 0.0
      %1589 = vmatmul.mubr.f32.gmra.mxu0 %v1495
      %v1590 = vpop.f32.mrf.mxu0
      %v1591 = vadd.f32 0.0, %v1590
      %v1592 = vpop.f32.mrf.mxu0
      %1593 = vmatprep.mubr.f32.mxu0 0.0
      %1594 = vmatmul.mubr.f32.gmra.mxu0 %v1498
      %v1595 = vpop.f32.mrf.mxu0
      %v1596 = vadd.f32 0.0, %v1595
      %v1597 = vpop.f32.mrf.mxu0
      %1598 = vmatprep.mubr.f32.mxu0 0.0
      %1599 = vmatmul.mubr.f32.gmra.mxu0 %v1501
      %v1600 = vpop.f32.mrf.mxu0
      %v1601 = vadd.f32 0.0, %v1600
      %v1602 = vpop.f32.mrf.mxu0
      %1603 = vmatprep.mubr.f32.mxu0 0.0
      %1604 = vmatmul.mubr.f32.gmra.mxu0 %v1504
      %v1605 = vpop.f32.mrf.mxu0
      %v1606 = vadd.f32 0.0, %v1605
      %v1607 = vpop.f32.mrf.mxu0
      %1608 = vmatprep.mubr.f32.mxu0 0.0
      %1609 = vmatmul.mubr.f32.gmra.mxu0 %v1507
      %v1610 = vpop.f32.mrf.mxu0
      %v1611 = vadd.f32 0.0, %v1610
      %v1612 = vpop.f32.mrf.mxu0
      %1613 = vmatprep.mubr.f32.mxu0 0.0
      %1614 = vmatmul.mubr.f32.gmra.mxu0 %v1510
      %v1615 = vpop.f32.mrf.mxu0
      %v1616 = vadd.f32 0.0, %v1615
      %v1617 = vpop.f32.mrf.mxu0
      %1618 = vdwg.mxu0
      %v1619 = vadd.f32 %v1479, %v1581
      %v1620 = vadd.f32 %v1480, %v1586
      %v1621 = vadd.f32 %v1481, %v1591
      %v1622 = vadd.f32 %v1482, %v1596
      %v1623 = vadd.f32 %v1483, %v1601
      %v1624 = vadd.f32 %v1484, %v1606
      %v1625 = vadd.f32 %v1485, %v1611
      %v1626 = vadd.f32 %v1486, %v1616
      %v1627 = vld [vmem:[%s1329 + $0x1] sm:$0xff]
      %v1628 = vld [vmem:[%s1329 + $0x11] sm:$0xff]
      %v1629 = vld [vmem:[%s1329 + $0x21] sm:$0xff]
      %v1630 = vld [vmem:[%s1329 + $0x31] sm:$0xff]
      %v1631 = vld [vmem:[%s1329 + $0x41] sm:$0xff]
      %v1632 = vld [vmem:[%s1329 + $0x51] sm:$0xff]
      %v1633 = vld [vmem:[%s1329 + $0x61] sm:$0xff]
      %v1634 = vld [vmem:[%s1329 + $0x71] sm:$0xff]
      %v1635 = vld [vmem:[%s1338 + $0x1] sm:$0xff]
      %v1636 = vld [vmem:[%s1338 + $0x11] sm:$0xff]
      %v1637 = vld [vmem:[%s1338 + $0x21] sm:$0xff]
      %v1638 = vld [vmem:[%s1338 + $0x31] sm:$0xff]
      %v1639 = vld [vmem:[%s1338 + $0x41] sm:$0xff]
      %v1640 = vld [vmem:[%s1338 + $0x51] sm:$0xff]
      %v1641 = vld [vmem:[%s1338 + $0x61] sm:$0xff]
      %v1642 = vld [vmem:[%s1338 + $0x71] sm:$0xff]
      %v1644 = vsel %vm455, %v1627, 0
      %v1647 = vsel %vm455, %v1628, 0
      %v1650 = vsel %vm455, %v1629, 0
      %v1653 = vsel %vm455, %v1630, 0
      %v1656 = vsel %vm455, %v1631, 0
      %v1659 = vsel %vm455, %v1632, 0
      %v1662 = vsel %vm455, %v1633, 0
      %v1665 = vsel %vm455, %v1634, 0
      %v1668 = vsel %vm480, %v423, 0
      %1670 = vmatprep.subr.mxu0 0.0
      %1671 = vmatpush1.msra.mxu0 0.0
      %1672 = vmatprep.subr.mxu0 0.0
      %1673 = vmatpush1.msra.mxu0 0.0
      %1674 = vmatprep.subr.mxu0 0.0
      %1675 = vmatpush1.msra.mxu0 0.0
      %1676 = vmatprep.subr.mxu0 0.0
      %1677 = vmatpush1.msra.mxu0 0.0
      %1678 = vmatprep.subr.mxu0 0.0
      %1679 = vmatpush1.msra.mxu0 0.0
      %1680 = vmatprep.subr.mxu0 0.0
      %1681 = vmatpush1.msra.mxu0 0.0
      %1682 = vmatprep.subr.mxu0 0.0
      %1683 = vmatpush1.msra.mxu0 0.0
      %1684 = vmatprep.subr.mxu0 0.0
      %1685 = vmatpush1.msra.mxu0 0.0
      %1686 = vmatprep.subr.mxu0 0.0
      %1687 = vmatpush1.msra.mxu0 0.0
      %1688 = vmatprep.subr.mxu0 0.0
      %1689 = vmatpush1.msra.mxu0 0.0
      %1690 = vmatprep.subr.mxu0 0.0
      %1691 = vmatpush1.msra.mxu0 0.0
      %1692 = vmatprep.subr.mxu0 0.0
      %1693 = vmatpush1.msra.mxu0 0.0
      %1694 = vmatprep.subr.mxu0 0.0
      %1695 = vmatpush1.msra.mxu0 0.0
      %1696 = vmatprep.subr.mxu0 0.0
      %1697 = vmatpush1.msra.mxu0 0.0
      %1698 = vmatprep.subr.mxu0 0.0
      %1699 = vmatpush1.msra.mxu0 0.0
      %1700 = vmatprep.subr.mxu0 0.0
      %1701 = vmatpush1.msra.mxu0 %v1668
      %1702 = vmatprep.subr.mxu0 0.0
      %1703 = vmatpush2.msra.mxu0 0.0
      %1704 = vmatprep.subr.mxu0 0.0
      %1705 = vmatpush2.msra.mxu0 0.0
      %1706 = vmatprep.subr.mxu0 0.0
      %1707 = vmatpush2.msra.mxu0 0.0
      %1708 = vmatprep.subr.mxu0 0.0
      %1709 = vmatpush2.msra.mxu0 0.0
      %1710 = vmatprep.subr.mxu0 0.0
      %1711 = vmatpush2.msra.mxu0 0.0
      %1712 = vmatprep.subr.mxu0 0.0
      %1713 = vmatpush2.msra.mxu0 0.0
      %1714 = vmatprep.subr.mxu0 0.0
      %1715 = vmatpush2.msra.mxu0 0.0
      %1716 = vmatprep.subr.mxu0 0.0
      %1717 = vmatpush2.msra.mxu0 0.0
      %1718 = vmatprep.subr.mxu0 0.0
      %1719 = vmatpush2.msra.mxu0 0.0
      %1720 = vmatprep.subr.mxu0 0.0
      %1721 = vmatpush2.msra.mxu0 0.0
      %1722 = vmatprep.subr.mxu0 0.0
      %1723 = vmatpush2.msra.mxu0 0.0
      %1724 = vmatprep.subr.mxu0 0.0
      %1725 = vmatpush2.msra.mxu0 0.0
      %1726 = vmatprep.subr.mxu0 0.0
      %1727 = vmatpush2.msra.mxu0 0.0
      %1728 = vmatprep.subr.mxu0 0.0
      %1729 = vmatpush2.msra.mxu0 0.0
      %1730 = vmatprep.subr.mxu0 0.0
      %1731 = vmatpush2.msra.mxu0 0.0
      %1732 = vmatprep.subr.mxu0 0.0
      %1733 = vmatpush2.msra.mxu0 0.0
      %1734 = vmatprep.mubr.f32.mxu0 0.0
      %1735 = vmatmul.mubr.f32.gmra.mxu0 %v1644
      %v1736 = vpop.f32.mrf.mxu0
      %v1737 = vadd.f32 0.0, %v1736
      %v1738 = vpop.f32.mrf.mxu0
      %1739 = vmatprep.mubr.f32.mxu0 0.0
      %1740 = vmatmul.mubr.f32.gmra.mxu0 %v1647
      %v1741 = vpop.f32.mrf.mxu0
      %v1742 = vadd.f32 0.0, %v1741
      %v1743 = vpop.f32.mrf.mxu0
      %1744 = vmatprep.mubr.f32.mxu0 0.0
      %1745 = vmatmul.mubr.f32.gmra.mxu0 %v1650
      %v1746 = vpop.f32.mrf.mxu0
      %v1747 = vadd.f32 0.0, %v1746
      %v1748 = vpop.f32.mrf.mxu0
      %1749 = vmatprep.mubr.f32.mxu0 0.0
      %1750 = vmatmul.mubr.f32.gmra.mxu0 %v1653
      %v1751 = vpop.f32.mrf.mxu0
      %v1752 = vadd.f32 0.0, %v1751
      %v1753 = vpop.f32.mrf.mxu0
      %1754 = vmatprep.mubr.f32.mxu0 0.0
      %1755 = vmatmul.mubr.f32.gmra.mxu0 %v1656
      %v1756 = vpop.f32.mrf.mxu0
      %v1757 = vadd.f32 0.0, %v1756
      %v1758 = vpop.f32.mrf.mxu0
      %1759 = vmatprep.mubr.f32.mxu0 0.0
      %1760 = vmatmul.mubr.f32.gmra.mxu0 %v1659
      %v1761 = vpop.f32.mrf.mxu0
      %v1762 = vadd.f32 0.0, %v1761
      %v1763 = vpop.f32.mrf.mxu0
      %1764 = vmatprep.mubr.f32.mxu0 0.0
      %1765 = vmatmul.mubr.f32.gmra.mxu0 %v1662
      %v1766 = vpop.f32.mrf.mxu0
      %v1767 = vadd.f32 0.0, %v1766
      %v1768 = vpop.f32.mrf.mxu0
      %1769 = vmatprep.mubr.f32.mxu0 0.0
      %1770 = vmatmul.mubr.f32.gmra.mxu0 %v1665
      %v1771 = vpop.f32.mrf.mxu0
      %v1772 = vadd.f32 0.0, %v1771
      %v1773 = vpop.f32.mrf.mxu0
      %1774 = vdwg.mxu0
      %v1775 = vadd.f32 %v1619, %v1737
      %v1776 = vadd.f32 %v1620, %v1742
      %v1777 = vadd.f32 %v1621, %v1747
      %v1778 = vadd.f32 %v1622, %v1752
      %v1779 = vadd.f32 %v1623, %v1757
      %v1780 = vadd.f32 %v1624, %v1762
      %v1781 = vadd.f32 %v1625, %v1767
      %v1782 = vadd.f32 %v1626, %v1772
      %v1784 = vsel %vm455, %v1635, 0
      %v1787 = vsel %vm455, %v1636, 0
      %v1790 = vsel %vm455, %v1637, 0
      %v1793 = vsel %vm455, %v1638, 0
      %v1796 = vsel %vm455, %v1639, 0
      %v1799 = vsel %vm455, %v1640, 0
      %v1802 = vsel %vm455, %v1641, 0
      %v1805 = vsel %vm455, %v1642, 0
      %v1808 = vsel %vm480, %v428, 0
      %1810 = vmatprep.subr.mxu0 0.0
      %1811 = vmatpush1.msra.mxu0 0.0
      %1812 = vmatprep.subr.mxu0 0.0
      %1813 = vmatpush1.msra.mxu0 0.0
      %1814 = vmatprep.subr.mxu0 0.0
      %1815 = vmatpush1.msra.mxu0 0.0
      %1816 = vmatprep.subr.mxu0 0.0
      %1817 = vmatpush1.msra.mxu0 0.0
      %1818 = vmatprep.subr.mxu0 0.0
      %1819 = vmatpush1.msra.mxu0 0.0
      %1820 = vmatprep.subr.mxu0 0.0
      %1821 = vmatpush1.msra.mxu0 0.0
      %1822 = vmatprep.subr.mxu0 0.0
      %1823 = vmatpush1.msra.mxu0 0.0
      %1824 = vmatprep.subr.mxu0 0.0
      %1825 = vmatpush1.msra.mxu0 0.0
      %1826 = vmatprep.subr.mxu0 0.0
      %1827 = vmatpush1.msra.mxu0 0.0
      %1828 = vmatprep.subr.mxu0 0.0
      %1829 = vmatpush1.msra.mxu0 0.0
      %1830 = vmatprep.subr.mxu0 0.0
      %1831 = vmatpush1.msra.mxu0 0.0
      %1832 = vmatprep.subr.mxu0 0.0
      %1833 = vmatpush1.msra.mxu0 0.0
      %1834 = vmatprep.subr.mxu0 0.0
      %1835 = vmatpush1.msra.mxu0 0.0
      %1836 = vmatprep.subr.mxu0 0.0
      %1837 = vmatpush1.msra.mxu0 0.0
      %1838 = vmatprep.subr.mxu0 0.0
      %1839 = vmatpush1.msra.mxu0 0.0
      %1840 = vmatprep.subr.mxu0 0.0
      %1841 = vmatpush1.msra.mxu0 %v1808
      %1842 = vmatprep.subr.mxu0 0.0
      %1843 = vmatpush2.msra.mxu0 0.0
      %1844 = vmatprep.subr.mxu0 0.0
      %1845 = vmatpush2.msra.mxu0 0.0
      %1846 = vmatprep.subr.mxu0 0.0
      %1847 = vmatpush2.msra.mxu0 0.0
      %1848 = vmatprep.subr.mxu0 0.0
      %1849 = vmatpush2.msra.mxu0 0.0
      %1850 = vmatprep.subr.mxu0 0.0
      %1851 = vmatpush2.msra.mxu0 0.0
      %1852 = vmatprep.subr.mxu0 0.0
      %1853 = vmatpush2.msra.mxu0 0.0
      %1854 = vmatprep.subr.mxu0 0.0
      %1855 = vmatpush2.msra.mxu0 0.0
      %1856 = vmatprep.subr.mxu0 0.0
      %1857 = vmatpush2.msra.mxu0 0.0
      %1858 = vmatprep.subr.mxu0 0.0
      %1859 = vmatpush2.msra.mxu0 0.0
      %1860 = vmatprep.subr.mxu0 0.0
      %1861 = vmatpush2.msra.mxu0 0.0
      %1862 = vmatprep.subr.mxu0 0.0
      %1863 = vmatpush2.msra.mxu0 0.0
      %1864 = vmatprep.subr.mxu0 0.0
      %1865 = vmatpush2.msra.mxu0 0.0
      %1866 = vmatprep.subr.mxu0 0.0
      %1867 = vmatpush2.msra.mxu0 0.0
      %1868 = vmatprep.subr.mxu0 0.0
      %1869 = vmatpush2.msra.mxu0 0.0
      %1870 = vmatprep.subr.mxu0 0.0
      %1871 = vmatpush2.msra.mxu0 0.0
      %1872 = vmatprep.subr.mxu0 0.0
      %1873 = vmatpush2.msra.mxu0 0.0
      %1874 = vmatprep.mubr.f32.mxu0 0.0
      %1875 = vmatmul.mubr.f32.gmra.mxu0 %v1784
      %v1876 = vpop.f32.mrf.mxu0
      %v1877 = vadd.f32 0.0, %v1876
      %v1878 = vpop.f32.mrf.mxu0
      %1879 = vmatprep.mubr.f32.mxu0 0.0
      %1880 = vmatmul.mubr.f32.gmra.mxu0 %v1787
      %v1881 = vpop.f32.mrf.mxu0
      %v1882 = vadd.f32 0.0, %v1881
      %v1883 = vpop.f32.mrf.mxu0
      %1884 = vmatprep.mubr.f32.mxu0 0.0
      %1885 = vmatmul.mubr.f32.gmra.mxu0 %v1790
      %v1886 = vpop.f32.mrf.mxu0
      %v1887 = vadd.f32 0.0, %v1886
      %v1888 = vpop.f32.mrf.mxu0
      %1889 = vmatprep.mubr.f32.mxu0 0.0
      %1890 = vmatmul.mubr.f32.gmra.mxu0 %v1793
      %v1891 = vpop.f32.mrf.mxu0
      %v1892 = vadd.f32 0.0, %v1891
      %v1893 = vpop.f32.mrf.mxu0
      %1894 = vmatprep.mubr.f32.mxu0 0.0
      %1895 = vmatmul.mubr.f32.gmra.mxu0 %v1796
      %v1896 = vpop.f32.mrf.mxu0
      %v1897 = vadd.f32 0.0, %v1896
      %v1898 = vpop.f32.mrf.mxu0
      %1899 = vmatprep.mubr.f32.mxu0 0.0
      %1900 = vmatmul.mubr.f32.gmra.mxu0 %v1799
      %v1901 = vpop.f32.mrf.mxu0
      %v1902 = vadd.f32 0.0, %v1901
      %v1903 = vpop.f32.mrf.mxu0
      %1904 = vmatprep.mubr.f32.mxu0 0.0
      %1905 = vmatmul.mubr.f32.gmra.mxu0 %v1802
      %v1906 = vpop.f32.mrf.mxu0
      %v1907 = vadd.f32 0.0, %v1906
      %v1908 = vpop.f32.mrf.mxu0
      %1909 = vmatprep.mubr.f32.mxu0 0.0
      %1910 = vmatmul.mubr.f32.gmra.mxu0 %v1805
      %v1911 = vpop.f32.mrf.mxu0
      %v1912 = vadd.f32 0.0, %v1911
      %v1913 = vpop.f32.mrf.mxu0
      %1914 = vdwg.mxu0
      %v1915 = vadd.f32 %v1775, %v1877
      %v1916 = vadd.f32 %v1776, %v1882
      %v1917 = vadd.f32 %v1777, %v1887
      %v1918 = vadd.f32 %v1778, %v1892
      %v1919 = vadd.f32 %v1779, %v1897
      %v1920 = vadd.f32 %v1780, %v1902
      %v1921 = vadd.f32 %v1781, %v1907
      %v1922 = vadd.f32 %v1782, %v1912
      %v1923 = vld [vmem:[%s1329 + $0x2] sm:$0xff]
      %v1924 = vld [vmem:[%s1329 + $0x12] sm:$0xff]
      %v1925 = vld [vmem:[%s1329 + $0x22] sm:$0xff]
      %v1926 = vld [vmem:[%s1329 + $0x32] sm:$0xff]
      %v1927 = vld [vmem:[%s1329 + $0x42] sm:$0xff]
      %v1928 = vld [vmem:[%s1329 + $0x52] sm:$0xff]
      %v1929 = vld [vmem:[%s1329 + $0x62] sm:$0xff]
      %v1930 = vld [vmem:[%s1329 + $0x72] sm:$0xff]
      %v1931 = vld [vmem:[%s1338 + $0x2] sm:$0xff]
      %v1932 = vld [vmem:[%s1338 + $0x12] sm:$0xff]
      %v1933 = vld [vmem:[%s1338 + $0x22] sm:$0xff]
      %v1934 = vld [vmem:[%s1338 + $0x32] sm:$0xff]
      %v1935 = vld [vmem:[%s1338 + $0x42] sm:$0xff]
      %v1936 = vld [vmem:[%s1338 + $0x52] sm:$0xff]
      %v1937 = vld [vmem:[%s1338 + $0x62] sm:$0xff]
      %v1938 = vld [vmem:[%s1338 + $0x72] sm:$0xff]
      %v1939 = vrot.slane %v423, 4
      %v1941 = vsel %vm455, %v1923, 0
      %v1944 = vsel %vm455, %v1924, 0
      %v1947 = vsel %vm455, %v1925, 0
      %v1950 = vsel %vm455, %v1926, 0
      %v1953 = vsel %vm455, %v1927, 0
      %v1956 = vsel %vm455, %v1928, 0
      %v1959 = vsel %vm455, %v1929, 0
      %v1962 = vsel %vm455, %v1930, 0
      %v1964 = vsel %vm480, %v1939, 0
      %1966 = vmatprep.subr.mxu0 0.0
      %1967 = vmatpush1.msra.mxu0 0.0
      %1968 = vmatprep.subr.mxu0 0.0
      %1969 = vmatpush1.msra.mxu0 0.0
      %1970 = vmatprep.subr.mxu0 0.0
      %1971 = vmatpush1.msra.mxu0 0.0
      %1972 = vmatprep.subr.mxu0 0.0
      %1973 = vmatpush1.msra.mxu0 0.0
      %1974 = vmatprep.subr.mxu0 0.0
      %1975 = vmatpush1.msra.mxu0 0.0
      %1976 = vmatprep.subr.mxu0 0.0
      %1977 = vmatpush1.msra.mxu0 0.0
      %1978 = vmatprep.subr.mxu0 0.0
      %1979 = vmatpush1.msra.mxu0 0.0
      %1980 = vmatprep.subr.mxu0 0.0
      %1981 = vmatpush1.msra.mxu0 0.0
      %1982 = vmatprep.subr.mxu0 0.0
      %1983 = vmatpush1.msra.mxu0 0.0
      %1984 = vmatprep.subr.mxu0 0.0
      %1985 = vmatpush1.msra.mxu0 0.0
      %1986 = vmatprep.subr.mxu0 0.0
      %1987 = vmatpush1.msra.mxu0 0.0
      %1988 = vmatprep.subr.mxu0 0.0
      %1989 = vmatpush1.msra.mxu0 0.0
      %1990 = vmatprep.subr.mxu0 0.0
      %1991 = vmatpush1.msra.mxu0 0.0
      %1992 = vmatprep.subr.mxu0 0.0
      %1993 = vmatpush1.msra.mxu0 0.0
      %1994 = vmatprep.subr.mxu0 0.0
      %1995 = vmatpush1.msra.mxu0 0.0
      %1996 = vmatprep.subr.mxu0 0.0
      %1997 = vmatpush1.msra.mxu0 %v1964
      %1998 = vmatprep.subr.mxu0 0.0
      %1999 = vmatpush2.msra.mxu0 0.0
      %2000 = vmatprep.subr.mxu0 0.0
      %2001 = vmatpush2.msra.mxu0 0.0
      %2002 = vmatprep.subr.mxu0 0.0
      %2003 = vmatpush2.msra.mxu0 0.0
      %2004 = vmatprep.subr.mxu0 0.0
      %2005 = vmatpush2.msra.mxu0 0.0
      %2006 = vmatprep.subr.mxu0 0.0
      %2007 = vmatpush2.msra.mxu0 0.0
      %2008 = vmatprep.subr.mxu0 0.0
      %2009 = vmatpush2.msra.mxu0 0.0
      %2010 = vmatprep.subr.mxu0 0.0
      %2011 = vmatpush2.msra.mxu0 0.0
      %2012 = vmatprep.subr.mxu0 0.0
      %2013 = vmatpush2.msra.mxu0 0.0
      %2014 = vmatprep.subr.mxu0 0.0
      %2015 = vmatpush2.msra.mxu0 0.0
      %2016 = vmatprep.subr.mxu0 0.0
      %2017 = vmatpush2.msra.mxu0 0.0
      %2018 = vmatprep.subr.mxu0 0.0
      %2019 = vmatpush2.msra.mxu0 0.0
      %2020 = vmatprep.subr.mxu0 0.0
      %2021 = vmatpush2.msra.mxu0 0.0
      %2022 = vmatprep.subr.mxu0 0.0
      %2023 = vmatpush2.msra.mxu0 0.0
      %2024 = vmatprep.subr.mxu0 0.0
      %2025 = vmatpush2.msra.mxu0 0.0
      %2026 = vmatprep.subr.mxu0 0.0
      %2027 = vmatpush2.msra.mxu0 0.0
      %2028 = vmatprep.subr.mxu0 0.0
      %2029 = vmatpush2.msra.mxu0 0.0
      %2030 = vmatprep.mubr.f32.mxu0 0.0
      %2031 = vmatmul.mubr.f32.gmra.mxu0 %v1941
      %v2032 = vpop.f32.mrf.mxu0
      %v2033 = vadd.f32 0.0, %v2032
      %v2034 = vpop.f32.mrf.mxu0
      %2035 = vmatprep.mubr.f32.mxu0 0.0
      %2036 = vmatmul.mubr.f32.gmra.mxu0 %v1944
      %v2037 = vpop.f32.mrf.mxu0
      %v2038 = vadd.f32 0.0, %v2037
      %v2039 = vpop.f32.mrf.mxu0
      %2040 = vmatprep.mubr.f32.mxu0 0.0
      %2041 = vmatmul.mubr.f32.gmra.mxu0 %v1947
      %v2042 = vpop.f32.mrf.mxu0
      %v2043 = vadd.f32 0.0, %v2042
      %v2044 = vpop.f32.mrf.mxu0
      %2045 = vmatprep.mubr.f32.mxu0 0.0
      %2046 = vmatmul.mubr.f32.gmra.mxu0 %v1950
      %v2047 = vpop.f32.mrf.mxu0
      %v2048 = vadd.f32 0.0, %v2047
      %v2049 = vpop.f32.mrf.mxu0
      %2050 = vmatprep.mubr.f32.mxu0 0.0
      %2051 = vmatmul.mubr.f32.gmra.mxu0 %v1953
      %v2052 = vpop.f32.mrf.mxu0
      %v2053 = vadd.f32 0.0, %v2052
      %v2054 = vpop.f32.mrf.mxu0
      %2055 = vmatprep.mubr.f32.mxu0 0.0
      %2056 = vmatmul.mubr.f32.gmra.mxu0 %v1956
      %v2057 = vpop.f32.mrf.mxu0
      %v2058 = vadd.f32 0.0, %v2057
      %v2059 = vpop.f32.mrf.mxu0
      %2060 = vmatprep.mubr.f32.mxu0 0.0
      %2061 = vmatmul.mubr.f32.gmra.mxu0 %v1959
      %v2062 = vpop.f32.mrf.mxu0
      %v2063 = vadd.f32 0.0, %v2062
      %v2064 = vpop.f32.mrf.mxu0
      %2065 = vmatprep.mubr.f32.mxu0 0.0
      %2066 = vmatmul.mubr.f32.gmra.mxu0 %v1962
      %v2067 = vpop.f32.mrf.mxu0
      %v2068 = vadd.f32 0.0, %v2067
      %v2069 = vpop.f32.mrf.mxu0
      %2070 = vdwg.mxu0
      %v2071 = vadd.f32 %v1915, %v2033
      %v2072 = vadd.f32 %v1916, %v2038
      %v2073 = vadd.f32 %v1917, %v2043
      %v2074 = vadd.f32 %v1918, %v2048
      %v2075 = vadd.f32 %v1919, %v2053
      %v2076 = vadd.f32 %v1920, %v2058
      %v2077 = vadd.f32 %v1921, %v2063
      %v2078 = vadd.f32 %v1922, %v2068
      %v2079 = vrot.slane %v428, 4
      %v2081 = vsel %vm455, %v1931, 0
      %v2084 = vsel %vm455, %v1932, 0
      %v2087 = vsel %vm455, %v1933, 0
      %v2090 = vsel %vm455, %v1934, 0
      %v2093 = vsel %vm455, %v1935, 0
      %v2096 = vsel %vm455, %v1936, 0
      %v2099 = vsel %vm455, %v1937, 0
      %v2102 = vsel %vm455, %v1938, 0
      %v2104 = vsel %vm480, %v2079, 0
      %2106 = vmatprep.subr.mxu0 0.0
      %2107 = vmatpush1.msra.mxu0 0.0
      %2108 = vmatprep.subr.mxu0 0.0
      %2109 = vmatpush1.msra.mxu0 0.0
      %2110 = vmatprep.subr.mxu0 0.0
      %2111 = vmatpush1.msra.mxu0 0.0
      %2112 = vmatprep.subr.mxu0 0.0
      %2113 = vmatpush1.msra.mxu0 0.0
      %2114 = vmatprep.subr.mxu0 0.0
      %2115 = vmatpush1.msra.mxu0 0.0
      %2116 = vmatprep.subr.mxu0 0.0
      %2117 = vmatpush1.msra.mxu0 0.0
      %2118 = vmatprep.subr.mxu0 0.0
      %2119 = vmatpush1.msra.mxu0 0.0
      %2120 = vmatprep.subr.mxu0 0.0
      %2121 = vmatpush1.msra.mxu0 0.0
      %2122 = vmatprep.subr.mxu0 0.0
      %2123 = vmatpush1.msra.mxu0 0.0
      %2124 = vmatprep.subr.mxu0 0.0
      %2125 = vmatpush1.msra.mxu0 0.0
      %2126 = vmatprep.subr.mxu0 0.0
      %2127 = vmatpush1.msra.mxu0 0.0
      %2128 = vmatprep.subr.mxu0 0.0
      %2129 = vmatpush1.msra.mxu0 0.0
      %2130 = vmatprep.subr.mxu0 0.0
      %2131 = vmatpush1.msra.mxu0 0.0
      %2132 = vmatprep.subr.mxu0 0.0
      %2133 = vmatpush1.msra.mxu0 0.0
      %2134 = vmatprep.subr.mxu0 0.0
      %2135 = vmatpush1.msra.mxu0 0.0
      %2136 = vmatprep.subr.mxu0 0.0
      %2137 = vmatpush1.msra.mxu0 %v2104
      %2138 = vmatprep.subr.mxu0 0.0
      %2139 = vmatpush2.msra.mxu0 0.0
      %2140 = vmatprep.subr.mxu0 0.0
      %2141 = vmatpush2.msra.mxu0 0.0
      %2142 = vmatprep.subr.mxu0 0.0
      %2143 = vmatpush2.msra.mxu0 0.0
      %2144 = vmatprep.subr.mxu0 0.0
      %2145 = vmatpush2.msra.mxu0 0.0
      %2146 = vmatprep.subr.mxu0 0.0
      %2147 = vmatpush2.msra.mxu0 0.0
      %2148 = vmatprep.subr.mxu0 0.0
      %2149 = vmatpush2.msra.mxu0 0.0
      %2150 = vmatprep.subr.mxu0 0.0
      %2151 = vmatpush2.msra.mxu0 0.0
      %2152 = vmatprep.subr.mxu0 0.0
      %2153 = vmatpush2.msra.mxu0 0.0
      %2154 = vmatprep.subr.mxu0 0.0
      %2155 = vmatpush2.msra.mxu0 0.0
      %2156 = vmatprep.subr.mxu0 0.0
      %2157 = vmatpush2.msra.mxu0 0.0
      %2158 = vmatprep.subr.mxu0 0.0
      %2159 = vmatpush2.msra.mxu0 0.0
      %2160 = vmatprep.subr.mxu0 0.0
      %2161 = vmatpush2.msra.mxu0 0.0
      %2162 = vmatprep.subr.mxu0 0.0
      %2163 = vmatpush2.msra.mxu0 0.0
      %2164 = vmatprep.subr.mxu0 0.0
      %2165 = vmatpush2.msra.mxu0 0.0
      %2166 = vmatprep.subr.mxu0 0.0
      %2167 = vmatpush2.msra.mxu0 0.0
      %2168 = vmatprep.subr.mxu0 0.0
      %2169 = vmatpush2.msra.mxu0 0.0
      %2170 = vmatprep.mubr.f32.mxu0 0.0
      %2171 = vmatmul.mubr.f32.gmra.mxu0 %v2081
      %v2172 = vpop.f32.mrf.mxu0
      %v2173 = vadd.f32 0.0, %v2172
      %v2174 = vpop.f32.mrf.mxu0
      %2175 = vmatprep.mubr.f32.mxu0 0.0
      %2176 = vmatmul.mubr.f32.gmra.mxu0 %v2084
      %v2177 = vpop.f32.mrf.mxu0
      %v2178 = vadd.f32 0.0, %v2177
      %v2179 = vpop.f32.mrf.mxu0
      %2180 = vmatprep.mubr.f32.mxu0 0.0
      %2181 = vmatmul.mubr.f32.gmra.mxu0 %v2087
      %v2182 = vpop.f32.mrf.mxu0
      %v2183 = vadd.f32 0.0, %v2182
      %v2184 = vpop.f32.mrf.mxu0
      %2185 = vmatprep.mubr.f32.mxu0 0.0
      %2186 = vmatmul.mubr.f32.gmra.mxu0 %v2090
      %v2187 = vpop.f32.mrf.mxu0
      %v2188 = vadd.f32 0.0, %v2187
      %v2189 = vpop.f32.mrf.mxu0
      %2190 = vmatprep.mubr.f32.mxu0 0.0
      %2191 = vmatmul.mubr.f32.gmra.mxu0 %v2093
      %v2192 = vpop.f32.mrf.mxu0
      %v2193 = vadd.f32 0.0, %v2192
      %v2194 = vpop.f32.mrf.mxu0
      %2195 = vmatprep.mubr.f32.mxu0 0.0
      %2196 = vmatmul.mubr.f32.gmra.mxu0 %v2096
      %v2197 = vpop.f32.mrf.mxu0
      %v2198 = vadd.f32 0.0, %v2197
      %v2199 = vpop.f32.mrf.mxu0
      %2200 = vmatprep.mubr.f32.mxu0 0.0
      %2201 = vmatmul.mubr.f32.gmra.mxu0 %v2099
      %v2202 = vpop.f32.mrf.mxu0
      %v2203 = vadd.f32 0.0, %v2202
      %v2204 = vpop.f32.mrf.mxu0
      %2205 = vmatprep.mubr.f32.mxu0 0.0
      %2206 = vmatmul.mubr.f32.gmra.mxu0 %v2102
      %v2207 = vpop.f32.mrf.mxu0
      %v2208 = vadd.f32 0.0, %v2207
      %v2209 = vpop.f32.mrf.mxu0
      %2210 = vdwg.mxu0
      %v2211 = vadd.f32 %v2071, %v2173
      %v2212 = vadd.f32 %v2072, %v2178
      %v2213 = vadd.f32 %v2073, %v2183
      %v2214 = vadd.f32 %v2074, %v2188
      %v2215 = vadd.f32 %v2075, %v2193
      %v2216 = vadd.f32 %v2076, %v2198
      %v2217 = vadd.f32 %v2077, %v2203
      %v2218 = vadd.f32 %v2078, %v2208
      %s2219 = scalar_lea.vmem %s360, 32
      %v2220 = vld [vmem:[%s2219] sm:$0xff]
      %v2221 = vld [vmem:[%s2219 + $0x10] sm:$0xff]
      %v2222 = vld [vmem:[%s2219 + $0x20] sm:$0xff]
      %v2223 = vld [vmem:[%s2219 + $0x30] sm:$0xff]
      %v2224 = vld [vmem:[%s2219 + $0x40] sm:$0xff]
      %v2225 = vld [vmem:[%s2219 + $0x50] sm:$0xff]
      %v2226 = vld [vmem:[%s2219 + $0x60] sm:$0xff]
      %v2227 = vld [vmem:[%s2219 + $0x70] sm:$0xff]
      %s2228 = scalar_lea.vmem %s371, 32
      %v2229 = vld [vmem:[%s2228] sm:$0xff]
      %v2230 = vld [vmem:[%s2228 + $0x10] sm:$0xff]
      %v2231 = vld [vmem:[%s2228 + $0x20] sm:$0xff]
      %v2232 = vld [vmem:[%s2228 + $0x30] sm:$0xff]
      %v2233 = vld [vmem:[%s2228 + $0x40] sm:$0xff]
      %v2234 = vld [vmem:[%s2228 + $0x50] sm:$0xff]
      %v2235 = vld [vmem:[%s2228 + $0x60] sm:$0xff]
      %v2236 = vld [vmem:[%s2228 + $0x70] sm:$0xff]
      %v2238 = vsel %vm455, %v2220, 0
      %v2241 = vsel %vm455, %v2221, 0
      %v2244 = vsel %vm455, %v2222, 0
      %v2247 = vsel %vm455, %v2223, 0
      %v2250 = vsel %vm455, %v2224, 0
      %v2253 = vsel %vm455, %v2225, 0
      %v2256 = vsel %vm455, %v2226, 0
      %v2259 = vsel %vm455, %v2227, 0
      %v2262 = vsel %vm480, %v424, 0
      %2264 = vmatprep.subr.mxu0 0.0
      %2265 = vmatpush1.msra.mxu0 0.0
      %2266 = vmatprep.subr.mxu0 0.0
      %2267 = vmatpush1.msra.mxu0 0.0
      %2268 = vmatprep.subr.mxu0 0.0
      %2269 = vmatpush1.msra.mxu0 0.0
      %2270 = vmatprep.subr.mxu0 0.0
      %2271 = vmatpush1.msra.mxu0 0.0
      %2272 = vmatprep.subr.mxu0 0.0
      %2273 = vmatpush1.msra.mxu0 0.0
      %2274 = vmatprep.subr.mxu0 0.0
      %2275 = vmatpush1.msra.mxu0 0.0
      %2276 = vmatprep.subr.mxu0 0.0
      %2277 = vmatpush1.msra.mxu0 0.0
      %2278 = vmatprep.subr.mxu0 0.0
      %2279 = vmatpush1.msra.mxu0 0.0
      %2280 = vmatprep.subr.mxu0 0.0
      %2281 = vmatpush1.msra.mxu0 0.0
      %2282 = vmatprep.subr.mxu0 0.0
      %2283 = vmatpush1.msra.mxu0 0.0
      %2284 = vmatprep.subr.mxu0 0.0
      %2285 = vmatpush1.msra.mxu0 0.0
      %2286 = vmatprep.subr.mxu0 0.0
      %2287 = vmatpush1.msra.mxu0 0.0
      %2288 = vmatprep.subr.mxu0 0.0
      %2289 = vmatpush1.msra.mxu0 0.0
      %2290 = vmatprep.subr.mxu0 0.0
      %2291 = vmatpush1.msra.mxu0 0.0
      %2292 = vmatprep.subr.mxu0 0.0
      %2293 = vmatpush1.msra.mxu0 0.0
      %2294 = vmatprep.subr.mxu0 0.0
      %2295 = vmatpush1.msra.mxu0 %v2262
      %2296 = vmatprep.subr.mxu0 0.0
      %2297 = vmatpush2.msra.mxu0 0.0
      %2298 = vmatprep.subr.mxu0 0.0
      %2299 = vmatpush2.msra.mxu0 0.0
      %2300 = vmatprep.subr.mxu0 0.0
      %2301 = vmatpush2.msra.mxu0 0.0
      %2302 = vmatprep.subr.mxu0 0.0
      %2303 = vmatpush2.msra.mxu0 0.0
      %2304 = vmatprep.subr.mxu0 0.0
      %2305 = vmatpush2.msra.mxu0 0.0
      %2306 = vmatprep.subr.mxu0 0.0
      %2307 = vmatpush2.msra.mxu0 0.0
      %2308 = vmatprep.subr.mxu0 0.0
      %2309 = vmatpush2.msra.mxu0 0.0
      %2310 = vmatprep.subr.mxu0 0.0
      %2311 = vmatpush2.msra.mxu0 0.0
      %2312 = vmatprep.subr.mxu0 0.0
      %2313 = vmatpush2.msra.mxu0 0.0
      %2314 = vmatprep.subr.mxu0 0.0
      %2315 = vmatpush2.msra.mxu0 0.0
      %2316 = vmatprep.subr.mxu0 0.0
      %2317 = vmatpush2.msra.mxu0 0.0
      %2318 = vmatprep.subr.mxu0 0.0
      %2319 = vmatpush2.msra.mxu0 0.0
      %2320 = vmatprep.subr.mxu0 0.0
      %2321 = vmatpush2.msra.mxu0 0.0
      %2322 = vmatprep.subr.mxu0 0.0
      %2323 = vmatpush2.msra.mxu0 0.0
      %2324 = vmatprep.subr.mxu0 0.0
      %2325 = vmatpush2.msra.mxu0 0.0
      %2326 = vmatprep.subr.mxu0 0.0
      %2327 = vmatpush2.msra.mxu0 0.0
      %2328 = vmatprep.mubr.f32.mxu0 0.0
      %2329 = vmatmul.mubr.f32.gmra.mxu0 %v2238
      %v2330 = vpop.f32.mrf.mxu0
      %v2331 = vadd.f32 0.0, %v2330
      %v2332 = vpop.f32.mrf.mxu0
      %2333 = vmatprep.mubr.f32.mxu0 0.0
      %2334 = vmatmul.mubr.f32.gmra.mxu0 %v2241
      %v2335 = vpop.f32.mrf.mxu0
      %v2336 = vadd.f32 0.0, %v2335
      %v2337 = vpop.f32.mrf.mxu0
      %2338 = vmatprep.mubr.f32.mxu0 0.0
      %2339 = vmatmul.mubr.f32.gmra.mxu0 %v2244
      %v2340 = vpop.f32.mrf.mxu0
      %v2341 = vadd.f32 0.0, %v2340
      %v2342 = vpop.f32.mrf.mxu0
      %2343 = vmatprep.mubr.f32.mxu0 0.0
      %2344 = vmatmul.mubr.f32.gmra.mxu0 %v2247
      %v2345 = vpop.f32.mrf.mxu0
      %v2346 = vadd.f32 0.0, %v2345
      %v2347 = vpop.f32.mrf.mxu0
      %2348 = vmatprep.mubr.f32.mxu0 0.0
      %2349 = vmatmul.mubr.f32.gmra.mxu0 %v2250
      %v2350 = vpop.f32.mrf.mxu0
      %v2351 = vadd.f32 0.0, %v2350
      %v2352 = vpop.f32.mrf.mxu0
      %2353 = vmatprep.mubr.f32.mxu0 0.0
      %2354 = vmatmul.mubr.f32.gmra.mxu0 %v2253
      %v2355 = vpop.f32.mrf.mxu0
      %v2356 = vadd.f32 0.0, %v2355
      %v2357 = vpop.f32.mrf.mxu0
      %2358 = vmatprep.mubr.f32.mxu0 0.0
      %2359 = vmatmul.mubr.f32.gmra.mxu0 %v2256
      %v2360 = vpop.f32.mrf.mxu0
      %v2361 = vadd.f32 0.0, %v2360
      %v2362 = vpop.f32.mrf.mxu0
      %2363 = vmatprep.mubr.f32.mxu0 0.0
      %2364 = vmatmul.mubr.f32.gmra.mxu0 %v2259
      %v2365 = vpop.f32.mrf.mxu0
      %v2366 = vadd.f32 0.0, %v2365
      %v2367 = vpop.f32.mrf.mxu0
      %2368 = vdwg.mxu0
      %v2369 = vadd.f32 %v2211, %v2331
      %v2370 = vadd.f32 %v2212, %v2336
      %v2371 = vadd.f32 %v2213, %v2341
      %v2372 = vadd.f32 %v2214, %v2346
      %v2373 = vadd.f32 %v2215, %v2351
      %v2374 = vadd.f32 %v2216, %v2356
      %v2375 = vadd.f32 %v2217, %v2361
      %v2376 = vadd.f32 %v2218, %v2366
      %v2378 = vsel %vm455, %v2229, 0
      %v2381 = vsel %vm455, %v2230, 0
      %v2384 = vsel %vm455, %v2231, 0
      %v2387 = vsel %vm455, %v2232, 0
      %v2390 = vsel %vm455, %v2233, 0
      %v2393 = vsel %vm455, %v2234, 0
      %v2396 = vsel %vm455, %v2235, 0
      %v2399 = vsel %vm455, %v2236, 0
      %v2402 = vsel %vm480, %v429, 0
      %2404 = vmatprep.subr.mxu0 0.0
      %2405 = vmatpush1.msra.mxu0 0.0
      %2406 = vmatprep.subr.mxu0 0.0
      %2407 = vmatpush1.msra.mxu0 0.0
      %2408 = vmatprep.subr.mxu0 0.0
      %2409 = vmatpush1.msra.mxu0 0.0
      %2410 = vmatprep.subr.mxu0 0.0
      %2411 = vmatpush1.msra.mxu0 0.0
      %2412 = vmatprep.subr.mxu0 0.0
      %2413 = vmatpush1.msra.mxu0 0.0
      %2414 = vmatprep.subr.mxu0 0.0
      %2415 = vmatpush1.msra.mxu0 0.0
      %2416 = vmatprep.subr.mxu0 0.0
      %2417 = vmatpush1.msra.mxu0 0.0
      %2418 = vmatprep.subr.mxu0 0.0
      %2419 = vmatpush1.msra.mxu0 0.0
      %2420 = vmatprep.subr.mxu0 0.0
      %2421 = vmatpush1.msra.mxu0 0.0
      %2422 = vmatprep.subr.mxu0 0.0
      %2423 = vmatpush1.msra.mxu0 0.0
      %2424 = vmatprep.subr.mxu0 0.0
      %2425 = vmatpush1.msra.mxu0 0.0
      %2426 = vmatprep.subr.mxu0 0.0
      %2427 = vmatpush1.msra.mxu0 0.0
      %2428 = vmatprep.subr.mxu0 0.0
      %2429 = vmatpush1.msra.mxu0 0.0
      %2430 = vmatprep.subr.mxu0 0.0
      %2431 = vmatpush1.msra.mxu0 0.0
      %2432 = vmatprep.subr.mxu0 0.0
      %2433 = vmatpush1.msra.mxu0 0.0
      %2434 = vmatprep.subr.mxu0 0.0
      %2435 = vmatpush1.msra.mxu0 %v2402
      %2436 = vmatprep.subr.mxu0 0.0
      %2437 = vmatpush2.msra.mxu0 0.0
      %2438 = vmatprep.subr.mxu0 0.0
      %2439 = vmatpush2.msra.mxu0 0.0
      %2440 = vmatprep.subr.mxu0 0.0
      %2441 = vmatpush2.msra.mxu0 0.0
      %2442 = vmatprep.subr.mxu0 0.0
      %2443 = vmatpush2.msra.mxu0 0.0
      %2444 = vmatprep.subr.mxu0 0.0
      %2445 = vmatpush2.msra.mxu0 0.0
      %2446 = vmatprep.subr.mxu0 0.0
      %2447 = vmatpush2.msra.mxu0 0.0
      %2448 = vmatprep.subr.mxu0 0.0
      %2449 = vmatpush2.msra.mxu0 0.0
      %2450 = vmatprep.subr.mxu0 0.0
      %2451 = vmatpush2.msra.mxu0 0.0
      %2452 = vmatprep.subr.mxu0 0.0
      %2453 = vmatpush2.msra.mxu0 0.0
      %2454 = vmatprep.subr.mxu0 0.0
      %2455 = vmatpush2.msra.mxu0 0.0
      %2456 = vmatprep.subr.mxu0 0.0
      %2457 = vmatpush2.msra.mxu0 0.0
      %2458 = vmatprep.subr.mxu0 0.0
      %2459 = vmatpush2.msra.mxu0 0.0
      %2460 = vmatprep.subr.mxu0 0.0
      %2461 = vmatpush2.msra.mxu0 0.0
      %2462 = vmatprep.subr.mxu0 0.0
      %2463 = vmatpush2.msra.mxu0 0.0
      %2464 = vmatprep.subr.mxu0 0.0
      %2465 = vmatpush2.msra.mxu0 0.0
      %2466 = vmatprep.subr.mxu0 0.0
      %2467 = vmatpush2.msra.mxu0 0.0
      %2468 = vmatprep.mubr.f32.mxu0 0.0
      %2469 = vmatmul.mubr.f32.gmra.mxu0 %v2378
      %v2470 = vpop.f32.mrf.mxu0
      %v2471 = vadd.f32 0.0, %v2470
      %v2472 = vpop.f32.mrf.mxu0
      %2473 = vmatprep.mubr.f32.mxu0 0.0
      %2474 = vmatmul.mubr.f32.gmra.mxu0 %v2381
      %v2475 = vpop.f32.mrf.mxu0
      %v2476 = vadd.f32 0.0, %v2475
      %v2477 = vpop.f32.mrf.mxu0
      %2478 = vmatprep.mubr.f32.mxu0 0.0
      %2479 = vmatmul.mubr.f32.gmra.mxu0 %v2384
      %v2480 = vpop.f32.mrf.mxu0
      %v2481 = vadd.f32 0.0, %v2480
      %v2482 = vpop.f32.mrf.mxu0
      %2483 = vmatprep.mubr.f32.mxu0 0.0
      %2484 = vmatmul.mubr.f32.gmra.mxu0 %v2387
      %v2485 = vpop.f32.mrf.mxu0
      %v2486 = vadd.f32 0.0, %v2485
      %v2487 = vpop.f32.mrf.mxu0
      %2488 = vmatprep.mubr.f32.mxu0 0.0
      %2489 = vmatmul.mubr.f32.gmra.mxu0 %v2390
      %v2490 = vpop.f32.mrf.mxu0
      %v2491 = vadd.f32 0.0, %v2490
      %v2492 = vpop.f32.mrf.mxu0
      %2493 = vmatprep.mubr.f32.mxu0 0.0
      %2494 = vmatmul.mubr.f32.gmra.mxu0 %v2393
      %v2495 = vpop.f32.mrf.mxu0
      %v2496 = vadd.f32 0.0, %v2495
      %v2497 = vpop.f32.mrf.mxu0
      %2498 = vmatprep.mubr.f32.mxu0 0.0
      %2499 = vmatmul.mubr.f32.gmra.mxu0 %v2396
      %v2500 = vpop.f32.mrf.mxu0
      %v2501 = vadd.f32 0.0, %v2500
      %v2502 = vpop.f32.mrf.mxu0
      %2503 = vmatprep.mubr.f32.mxu0 0.0
      %2504 = vmatmul.mubr.f32.gmra.mxu0 %v2399
      %v2505 = vpop.f32.mrf.mxu0
      %v2506 = vadd.f32 0.0, %v2505
      %v2507 = vpop.f32.mrf.mxu0
      %2508 = vdwg.mxu0
      %v2509 = vadd.f32 %v2369, %v2471
      %v2510 = vadd.f32 %v2370, %v2476
      %v2511 = vadd.f32 %v2371, %v2481
      %v2512 = vadd.f32 %v2372, %v2486
      %v2513 = vadd.f32 %v2373, %v2491
      %v2514 = vadd.f32 %v2374, %v2496
      %v2515 = vadd.f32 %v2375, %v2501
      %v2516 = vadd.f32 %v2376, %v2506
      %v2517 = vld [vmem:[%s2219 + $0x1] sm:$0xff]
      %v2518 = vld [vmem:[%s2219 + $0x11] sm:$0xff]
      %v2519 = vld [vmem:[%s2219 + $0x21] sm:$0xff]
      %v2520 = vld [vmem:[%s2219 + $0x31] sm:$0xff]
      %v2521 = vld [vmem:[%s2219 + $0x41] sm:$0xff]
      %v2522 = vld [vmem:[%s2219 + $0x51] sm:$0xff]
      %v2523 = vld [vmem:[%s2219 + $0x61] sm:$0xff]
      %v2524 = vld [vmem:[%s2219 + $0x71] sm:$0xff]
      %v2525 = vld [vmem:[%s2228 + $0x1] sm:$0xff]
      %v2526 = vld [vmem:[%s2228 + $0x11] sm:$0xff]
      %v2527 = vld [vmem:[%s2228 + $0x21] sm:$0xff]
      %v2528 = vld [vmem:[%s2228 + $0x31] sm:$0xff]
      %v2529 = vld [vmem:[%s2228 + $0x41] sm:$0xff]
      %v2530 = vld [vmem:[%s2228 + $0x51] sm:$0xff]
      %v2531 = vld [vmem:[%s2228 + $0x61] sm:$0xff]
      %v2532 = vld [vmem:[%s2228 + $0x71] sm:$0xff]
      %v2533 = vrot.slane %v424, 4
      %v2535 = vsel %vm455, %v2517, 0
      %v2538 = vsel %vm455, %v2518, 0
      %v2541 = vsel %vm455, %v2519, 0
      %v2544 = vsel %vm455, %v2520, 0
      %v2547 = vsel %vm455, %v2521, 0
      %v2550 = vsel %vm455, %v2522, 0
      %v2553 = vsel %vm455, %v2523, 0
      %v2556 = vsel %vm455, %v2524, 0
      %v2558 = vsel %vm480, %v2533, 0
      %2560 = vmatprep.subr.mxu0 0.0
      %2561 = vmatpush1.msra.mxu0 0.0
      %2562 = vmatprep.subr.mxu0 0.0
      %2563 = vmatpush1.msra.mxu0 0.0
      %2564 = vmatprep.subr.mxu0 0.0
      %2565 = vmatpush1.msra.mxu0 0.0
      %2566 = vmatprep.subr.mxu0 0.0
      %2567 = vmatpush1.msra.mxu0 0.0
      %2568 = vmatprep.subr.mxu0 0.0
      %2569 = vmatpush1.msra.mxu0 0.0
      %2570 = vmatprep.subr.mxu0 0.0
      %2571 = vmatpush1.msra.mxu0 0.0
      %2572 = vmatprep.subr.mxu0 0.0
      %2573 = vmatpush1.msra.mxu0 0.0
      %2574 = vmatprep.subr.mxu0 0.0
      %2575 = vmatpush1.msra.mxu0 0.0
      %2576 = vmatprep.subr.mxu0 0.0
      %2577 = vmatpush1.msra.mxu0 0.0
      %2578 = vmatprep.subr.mxu0 0.0
      %2579 = vmatpush1.msra.mxu0 0.0
      %2580 = vmatprep.subr.mxu0 0.0
      %2581 = vmatpush1.msra.mxu0 0.0
      %2582 = vmatprep.subr.mxu0 0.0
      %2583 = vmatpush1.msra.mxu0 0.0
      %2584 = vmatprep.subr.mxu0 0.0
      %2585 = vmatpush1.msra.mxu0 0.0
      %2586 = vmatprep.subr.mxu0 0.0
      %2587 = vmatpush1.msra.mxu0 0.0
      %2588 = vmatprep.subr.mxu0 0.0
      %2589 = vmatpush1.msra.mxu0 0.0
      %2590 = vmatprep.subr.mxu0 0.0
      %2591 = vmatpush1.msra.mxu0 %v2558
      %2592 = vmatprep.subr.mxu0 0.0
      %2593 = vmatpush2.msra.mxu0 0.0
      %2594 = vmatprep.subr.mxu0 0.0
      %2595 = vmatpush2.msra.mxu0 0.0
      %2596 = vmatprep.subr.mxu0 0.0
      %2597 = vmatpush2.msra.mxu0 0.0
      %2598 = vmatprep.subr.mxu0 0.0
      %2599 = vmatpush2.msra.mxu0 0.0
      %2600 = vmatprep.subr.mxu0 0.0
      %2601 = vmatpush2.msra.mxu0 0.0
      %2602 = vmatprep.subr.mxu0 0.0
      %2603 = vmatpush2.msra.mxu0 0.0
      %2604 = vmatprep.subr.mxu0 0.0
      %2605 = vmatpush2.msra.mxu0 0.0
      %2606 = vmatprep.subr.mxu0 0.0
      %2607 = vmatpush2.msra.mxu0 0.0
      %2608 = vmatprep.subr.mxu0 0.0
      %2609 = vmatpush2.msra.mxu0 0.0
      %2610 = vmatprep.subr.mxu0 0.0
      %2611 = vmatpush2.msra.mxu0 0.0
      %2612 = vmatprep.subr.mxu0 0.0
      %2613 = vmatpush2.msra.mxu0 0.0
      %2614 = vmatprep.subr.mxu0 0.0
      %2615 = vmatpush2.msra.mxu0 0.0
      %2616 = vmatprep.subr.mxu0 0.0
      %2617 = vmatpush2.msra.mxu0 0.0
      %2618 = vmatprep.subr.mxu0 0.0
      %2619 = vmatpush2.msra.mxu0 0.0
      %2620 = vmatprep.subr.mxu0 0.0
      %2621 = vmatpush2.msra.mxu0 0.0
      %2622 = vmatprep.subr.mxu0 0.0
      %2623 = vmatpush2.msra.mxu0 0.0
      %2624 = vmatprep.mubr.f32.mxu0 0.0
      %2625 = vmatmul.mubr.f32.gmra.mxu0 %v2535
      %v2626 = vpop.f32.mrf.mxu0
      %v2627 = vadd.f32 0.0, %v2626
      %v2628 = vpop.f32.mrf.mxu0
      %2629 = vmatprep.mubr.f32.mxu0 0.0
      %2630 = vmatmul.mubr.f32.gmra.mxu0 %v2538
      %v2631 = vpop.f32.mrf.mxu0
      %v2632 = vadd.f32 0.0, %v2631
      %v2633 = vpop.f32.mrf.mxu0
      %2634 = vmatprep.mubr.f32.mxu0 0.0
      %2635 = vmatmul.mubr.f32.gmra.mxu0 %v2541
      %v2636 = vpop.f32.mrf.mxu0
      %v2637 = vadd.f32 0.0, %v2636
      %v2638 = vpop.f32.mrf.mxu0
      %2639 = vmatprep.mubr.f32.mxu0 0.0
      %2640 = vmatmul.mubr.f32.gmra.mxu0 %v2544
      %v2641 = vpop.f32.mrf.mxu0
      %v2642 = vadd.f32 0.0, %v2641
      %v2643 = vpop.f32.mrf.mxu0
      %2644 = vmatprep.mubr.f32.mxu0 0.0
      %2645 = vmatmul.mubr.f32.gmra.mxu0 %v2547
      %v2646 = vpop.f32.mrf.mxu0
      %v2647 = vadd.f32 0.0, %v2646
      %v2648 = vpop.f32.mrf.mxu0
      %2649 = vmatprep.mubr.f32.mxu0 0.0
      %2650 = vmatmul.mubr.f32.gmra.mxu0 %v2550
      %v2651 = vpop.f32.mrf.mxu0
      %v2652 = vadd.f32 0.0, %v2651
      %v2653 = vpop.f32.mrf.mxu0
      %2654 = vmatprep.mubr.f32.mxu0 0.0
      %2655 = vmatmul.mubr.f32.gmra.mxu0 %v2553
      %v2656 = vpop.f32.mrf.mxu0
      %v2657 = vadd.f32 0.0, %v2656
      %v2658 = vpop.f32.mrf.mxu0
      %2659 = vmatprep.mubr.f32.mxu0 0.0
      %2660 = vmatmul.mubr.f32.gmra.mxu0 %v2556
      %v2661 = vpop.f32.mrf.mxu0
      %v2662 = vadd.f32 0.0, %v2661
      %v2663 = vpop.f32.mrf.mxu0
      %2664 = vdwg.mxu0
      %v2665 = vadd.f32 %v2509, %v2627
      %v2666 = vadd.f32 %v2510, %v2632
      %v2667 = vadd.f32 %v2511, %v2637
      %v2668 = vadd.f32 %v2512, %v2642
      %v2669 = vadd.f32 %v2513, %v2647
      %v2670 = vadd.f32 %v2514, %v2652
      %v2671 = vadd.f32 %v2515, %v2657
      %v2672 = vadd.f32 %v2516, %v2662
      %v2673 = vrot.slane %v429, 4
      %v2675 = vsel %vm455, %v2525, 0
      %v2678 = vsel %vm455, %v2526, 0
      %v2681 = vsel %vm455, %v2527, 0
      %v2684 = vsel %vm455, %v2528, 0
      %v2687 = vsel %vm455, %v2529, 0
      %v2690 = vsel %vm455, %v2530, 0
      %v2693 = vsel %vm455, %v2531, 0
      %v2696 = vsel %vm455, %v2532, 0
      %v2698 = vsel %vm480, %v2673, 0
      %2700 = vmatprep.subr.mxu0 0.0
      %2701 = vmatpush1.msra.mxu0 0.0
      %2702 = vmatprep.subr.mxu0 0.0
      %2703 = vmatpush1.msra.mxu0 0.0
      %2704 = vmatprep.subr.mxu0 0.0
      %2705 = vmatpush1.msra.mxu0 0.0
      %2706 = vmatprep.subr.mxu0 0.0
      %2707 = vmatpush1.msra.mxu0 0.0
      %2708 = vmatprep.subr.mxu0 0.0
      %2709 = vmatpush1.msra.mxu0 0.0
      %2710 = vmatprep.subr.mxu0 0.0
      %2711 = vmatpush1.msra.mxu0 0.0
      %2712 = vmatprep.subr.mxu0 0.0
      %2713 = vmatpush1.msra.mxu0 0.0
      %2714 = vmatprep.subr.mxu0 0.0
      %2715 = vmatpush1.msra.mxu0 0.0
      %2716 = vmatprep.subr.mxu0 0.0
      %2717 = vmatpush1.msra.mxu0 0.0
      %2718 = vmatprep.subr.mxu0 0.0
      %2719 = vmatpush1.msra.mxu0 0.0
      %2720 = vmatprep.subr.mxu0 0.0
      %2721 = vmatpush1.msra.mxu0 0.0
      %2722 = vmatprep.subr.mxu0 0.0
      %2723 = vmatpush1.msra.mxu0 0.0
      %2724 = vmatprep.subr.mxu0 0.0
      %2725 = vmatpush1.msra.mxu0 0.0
      %2726 = vmatprep.subr.mxu0 0.0
      %2727 = vmatpush1.msra.mxu0 0.0
      %2728 = vmatprep.subr.mxu0 0.0
      %2729 = vmatpush1.msra.mxu0 0.0
      %2730 = vmatprep.subr.mxu0 0.0
      %2731 = vmatpush1.msra.mxu0 %v2698
      %2732 = vmatprep.subr.mxu0 0.0
      %2733 = vmatpush2.msra.mxu0 0.0
      %2734 = vmatprep.subr.mxu0 0.0
      %2735 = vmatpush2.msra.mxu0 0.0
      %2736 = vmatprep.subr.mxu0 0.0
      %2737 = vmatpush2.msra.mxu0 0.0
      %2738 = vmatprep.subr.mxu0 0.0
      %2739 = vmatpush2.msra.mxu0 0.0
      %2740 = vmatprep.subr.mxu0 0.0
      %2741 = vmatpush2.msra.mxu0 0.0
      %2742 = vmatprep.subr.mxu0 0.0
      %2743 = vmatpush2.msra.mxu0 0.0
      %2744 = vmatprep.subr.mxu0 0.0
      %2745 = vmatpush2.msra.mxu0 0.0
      %2746 = vmatprep.subr.mxu0 0.0
      %2747 = vmatpush2.msra.mxu0 0.0
      %2748 = vmatprep.subr.mxu0 0.0
      %2749 = vmatpush2.msra.mxu0 0.0
      %2750 = vmatprep.subr.mxu0 0.0
      %2751 = vmatpush2.msra.mxu0 0.0
      %2752 = vmatprep.subr.mxu0 0.0
      %2753 = vmatpush2.msra.mxu0 0.0
      %2754 = vmatprep.subr.mxu0 0.0
      %2755 = vmatpush2.msra.mxu0 0.0
      %2756 = vmatprep.subr.mxu0 0.0
      %2757 = vmatpush2.msra.mxu0 0.0
      %2758 = vmatprep.subr.mxu0 0.0
      %2759 = vmatpush2.msra.mxu0 0.0
      %2760 = vmatprep.subr.mxu0 0.0
      %2761 = vmatpush2.msra.mxu0 0.0
      %2762 = vmatprep.subr.mxu0 0.0
      %2763 = vmatpush2.msra.mxu0 0.0
      %2764 = vmatprep.mubr.f32.mxu0 0.0
      %2765 = vmatmul.mubr.f32.gmra.mxu0 %v2675
      %v2766 = vpop.f32.mrf.mxu0
      %v2767 = vadd.f32 0.0, %v2766
      %v2768 = vpop.f32.mrf.mxu0
      %2769 = vmatprep.mubr.f32.mxu0 0.0
      %2770 = vmatmul.mubr.f32.gmra.mxu0 %v2678
      %v2771 = vpop.f32.mrf.mxu0
      %v2772 = vadd.f32 0.0, %v2771
      %v2773 = vpop.f32.mrf.mxu0
      %2774 = vmatprep.mubr.f32.mxu0 0.0
      %2775 = vmatmul.mubr.f32.gmra.mxu0 %v2681
      %v2776 = vpop.f32.mrf.mxu0
      %v2777 = vadd.f32 0.0, %v2776
      %v2778 = vpop.f32.mrf.mxu0
      %2779 = vmatprep.mubr.f32.mxu0 0.0
      %2780 = vmatmul.mubr.f32.gmra.mxu0 %v2684
      %v2781 = vpop.f32.mrf.mxu0
      %v2782 = vadd.f32 0.0, %v2781
      %v2783 = vpop.f32.mrf.mxu0
      %2784 = vmatprep.mubr.f32.mxu0 0.0
      %2785 = vmatmul.mubr.f32.gmra.mxu0 %v2687
      %v2786 = vpop.f32.mrf.mxu0
      %v2787 = vadd.f32 0.0, %v2786
      %v2788 = vpop.f32.mrf.mxu0
      %2789 = vmatprep.mubr.f32.mxu0 0.0
      %2790 = vmatmul.mubr.f32.gmra.mxu0 %v2690
      %v2791 = vpop.f32.mrf.mxu0
      %v2792 = vadd.f32 0.0, %v2791
      %v2793 = vpop.f32.mrf.mxu0
      %2794 = vmatprep.mubr.f32.mxu0 0.0
      %2795 = vmatmul.mubr.f32.gmra.mxu0 %v2693
      %v2796 = vpop.f32.mrf.mxu0
      %v2797 = vadd.f32 0.0, %v2796
      %v2798 = vpop.f32.mrf.mxu0
      %2799 = vmatprep.mubr.f32.mxu0 0.0
      %2800 = vmatmul.mubr.f32.gmra.mxu0 %v2696
      %v2801 = vpop.f32.mrf.mxu0
      %v2802 = vadd.f32 0.0, %v2801
      %v2803 = vpop.f32.mrf.mxu0
      %2804 = vdwg.mxu0
      %v2805 = vadd.f32 %v2665, %v2767
      %v2806 = vadd.f32 %v2666, %v2772
      %v2807 = vadd.f32 %v2667, %v2777
      %v2808 = vadd.f32 %v2668, %v2782
      %v2809 = vadd.f32 %v2669, %v2787
      %v2810 = vadd.f32 %v2670, %v2792
      %v2811 = vadd.f32 %v2671, %v2797
      %v2812 = vadd.f32 %v2672, %v2802
      %v2813 = vld [vmem:[%s2219 + $0x2] sm:$0xff]
      %v2814 = vld [vmem:[%s2219 + $0x12] sm:$0xff]
      %v2815 = vld [vmem:[%s2219 + $0x22] sm:$0xff]
      %v2816 = vld [vmem:[%s2219 + $0x32] sm:$0xff]
      %v2817 = vld [vmem:[%s2219 + $0x42] sm:$0xff]
      %v2818 = vld [vmem:[%s2219 + $0x52] sm:$0xff]
      %v2819 = vld [vmem:[%s2219 + $0x62] sm:$0xff]
      %v2820 = vld [vmem:[%s2219 + $0x72] sm:$0xff]
      %v2821 = vld [vmem:[%s2228 + $0x2] sm:$0xff]
      %v2822 = vld [vmem:[%s2228 + $0x12] sm:$0xff]
      %v2823 = vld [vmem:[%s2228 + $0x22] sm:$0xff]
      %v2824 = vld [vmem:[%s2228 + $0x32] sm:$0xff]
      %v2825 = vld [vmem:[%s2228 + $0x42] sm:$0xff]
      %v2826 = vld [vmem:[%s2228 + $0x52] sm:$0xff]
      %v2827 = vld [vmem:[%s2228 + $0x62] sm:$0xff]
      %v2828 = vld [vmem:[%s2228 + $0x72] sm:$0xff]
      %v2830 = vsel %vm455, %v2813, 0
      %v2833 = vsel %vm455, %v2814, 0
      %v2836 = vsel %vm455, %v2815, 0
      %v2839 = vsel %vm455, %v2816, 0
      %v2842 = vsel %vm455, %v2817, 0
      %v2845 = vsel %vm455, %v2818, 0
      %v2848 = vsel %vm455, %v2819, 0
      %v2851 = vsel %vm455, %v2820, 0
      %v2854 = vsel %vm480, %v425, 0
      %2856 = vmatprep.subr.mxu0 0.0
      %2857 = vmatpush1.msra.mxu0 0.0
      %2858 = vmatprep.subr.mxu0 0.0
      %2859 = vmatpush1.msra.mxu0 0.0
      %2860 = vmatprep.subr.mxu0 0.0
      %2861 = vmatpush1.msra.mxu0 0.0
      %2862 = vmatprep.subr.mxu0 0.0
      %2863 = vmatpush1.msra.mxu0 0.0
      %2864 = vmatprep.subr.mxu0 0.0
      %2865 = vmatpush1.msra.mxu0 0.0
      %2866 = vmatprep.subr.mxu0 0.0
      %2867 = vmatpush1.msra.mxu0 0.0
      %2868 = vmatprep.subr.mxu0 0.0
      %2869 = vmatpush1.msra.mxu0 0.0
      %2870 = vmatprep.subr.mxu0 0.0
      %2871 = vmatpush1.msra.mxu0 0.0
      %2872 = vmatprep.subr.mxu0 0.0
      %2873 = vmatpush1.msra.mxu0 0.0
      %2874 = vmatprep.subr.mxu0 0.0
      %2875 = vmatpush1.msra.mxu0 0.0
      %2876 = vmatprep.subr.mxu0 0.0
      %2877 = vmatpush1.msra.mxu0 0.0
      %2878 = vmatprep.subr.mxu0 0.0
      %2879 = vmatpush1.msra.mxu0 0.0
      %2880 = vmatprep.subr.mxu0 0.0
      %2881 = vmatpush1.msra.mxu0 0.0
      %2882 = vmatprep.subr.mxu0 0.0
      %2883 = vmatpush1.msra.mxu0 0.0
      %2884 = vmatprep.subr.mxu0 0.0
      %2885 = vmatpush1.msra.mxu0 0.0
      %2886 = vmatprep.subr.mxu0 0.0
      %2887 = vmatpush1.msra.mxu0 %v2854
      %2888 = vmatprep.subr.mxu0 0.0
      %2889 = vmatpush2.msra.mxu0 0.0
      %2890 = vmatprep.subr.mxu0 0.0
      %2891 = vmatpush2.msra.mxu0 0.0
      %2892 = vmatprep.subr.mxu0 0.0
      %2893 = vmatpush2.msra.mxu0 0.0
      %2894 = vmatprep.subr.mxu0 0.0
      %2895 = vmatpush2.msra.mxu0 0.0
      %2896 = vmatprep.subr.mxu0 0.0
      %2897 = vmatpush2.msra.mxu0 0.0
      %2898 = vmatprep.subr.mxu0 0.0
      %2899 = vmatpush2.msra.mxu0 0.0
      %2900 = vmatprep.subr.mxu0 0.0
      %2901 = vmatpush2.msra.mxu0 0.0
      %2902 = vmatprep.subr.mxu0 0.0
      %2903 = vmatpush2.msra.mxu0 0.0
      %2904 = vmatprep.subr.mxu0 0.0
      %2905 = vmatpush2.msra.mxu0 0.0
      %2906 = vmatprep.subr.mxu0 0.0
      %2907 = vmatpush2.msra.mxu0 0.0
      %2908 = vmatprep.subr.mxu0 0.0
      %2909 = vmatpush2.msra.mxu0 0.0
      %2910 = vmatprep.subr.mxu0 0.0
      %2911 = vmatpush2.msra.mxu0 0.0
      %2912 = vmatprep.subr.mxu0 0.0
      %2913 = vmatpush2.msra.mxu0 0.0
      %2914 = vmatprep.subr.mxu0 0.0
      %2915 = vmatpush2.msra.mxu0 0.0
      %2916 = vmatprep.subr.mxu0 0.0
      %2917 = vmatpush2.msra.mxu0 0.0
      %2918 = vmatprep.subr.mxu0 0.0
      %2919 = vmatpush2.msra.mxu0 0.0
      %2920 = vmatprep.mubr.f32.mxu0 0.0
      %2921 = vmatmul.mubr.f32.gmra.mxu0 %v2830
      %v2922 = vpop.f32.mrf.mxu0
      %v2923 = vadd.f32 0.0, %v2922
      %v2924 = vpop.f32.mrf.mxu0
      %2925 = vmatprep.mubr.f32.mxu0 0.0
      %2926 = vmatmul.mubr.f32.gmra.mxu0 %v2833
      %v2927 = vpop.f32.mrf.mxu0
      %v2928 = vadd.f32 0.0, %v2927
      %v2929 = vpop.f32.mrf.mxu0
      %2930 = vmatprep.mubr.f32.mxu0 0.0
      %2931 = vmatmul.mubr.f32.gmra.mxu0 %v2836
      %v2932 = vpop.f32.mrf.mxu0
      %v2933 = vadd.f32 0.0, %v2932
      %v2934 = vpop.f32.mrf.mxu0
      %2935 = vmatprep.mubr.f32.mxu0 0.0
      %2936 = vmatmul.mubr.f32.gmra.mxu0 %v2839
      %v2937 = vpop.f32.mrf.mxu0
      %v2938 = vadd.f32 0.0, %v2937
      %v2939 = vpop.f32.mrf.mxu0
      %2940 = vmatprep.mubr.f32.mxu0 0.0
      %2941 = vmatmul.mubr.f32.gmra.mxu0 %v2842
      %v2942 = vpop.f32.mrf.mxu0
      %v2943 = vadd.f32 0.0, %v2942
      %v2944 = vpop.f32.mrf.mxu0
      %2945 = vmatprep.mubr.f32.mxu0 0.0
      %2946 = vmatmul.mubr.f32.gmra.mxu0 %v2845
      %v2947 = vpop.f32.mrf.mxu0
      %v2948 = vadd.f32 0.0, %v2947
      %v2949 = vpop.f32.mrf.mxu0
      %2950 = vmatprep.mubr.f32.mxu0 0.0
      %2951 = vmatmul.mubr.f32.gmra.mxu0 %v2848
      %v2952 = vpop.f32.mrf.mxu0
      %v2953 = vadd.f32 0.0, %v2952
      %v2954 = vpop.f32.mrf.mxu0
      %2955 = vmatprep.mubr.f32.mxu0 0.0
      %2956 = vmatmul.mubr.f32.gmra.mxu0 %v2851
      %v2957 = vpop.f32.mrf.mxu0
      %v2958 = vadd.f32 0.0, %v2957
      %v2959 = vpop.f32.mrf.mxu0
      %2960 = vdwg.mxu0
      %v2961 = vadd.f32 %v2805, %v2923
      %v2962 = vadd.f32 %v2806, %v2928
      %v2963 = vadd.f32 %v2807, %v2933
      %v2964 = vadd.f32 %v2808, %v2938
      %v2965 = vadd.f32 %v2809, %v2943
      %v2966 = vadd.f32 %v2810, %v2948
      %v2967 = vadd.f32 %v2811, %v2953
      %v2968 = vadd.f32 %v2812, %v2958
      %v2970 = vsel %vm455, %v2821, 0
      %v2973 = vsel %vm455, %v2822, 0
      %v2976 = vsel %vm455, %v2823, 0
      %v2979 = vsel %vm455, %v2824, 0
      %v2982 = vsel %vm455, %v2825, 0
      %v2985 = vsel %vm455, %v2826, 0
      %v2988 = vsel %vm455, %v2827, 0
      %v2991 = vsel %vm455, %v2828, 0
      %v2994 = vsel %vm480, %v430, 0
      %2996 = vmatprep.subr.mxu0 0.0
      %2997 = vmatpush1.msra.mxu0 0.0
      %2998 = vmatprep.subr.mxu0 0.0
      %2999 = vmatpush1.msra.mxu0 0.0
      %3000 = vmatprep.subr.mxu0 0.0
      %3001 = vmatpush1.msra.mxu0 0.0
      %3002 = vmatprep.subr.mxu0 0.0
      %3003 = vmatpush1.msra.mxu0 0.0
      %3004 = vmatprep.subr.mxu0 0.0
      %3005 = vmatpush1.msra.mxu0 0.0
      %3006 = vmatprep.subr.mxu0 0.0
      %3007 = vmatpush1.msra.mxu0 0.0
      %3008 = vmatprep.subr.mxu0 0.0
      %3009 = vmatpush1.msra.mxu0 0.0
      %3010 = vmatprep.subr.mxu0 0.0
      %3011 = vmatpush1.msra.mxu0 0.0
      %3012 = vmatprep.subr.mxu0 0.0
      %3013 = vmatpush1.msra.mxu0 0.0
      %3014 = vmatprep.subr.mxu0 0.0
      %3015 = vmatpush1.msra.mxu0 0.0
      %3016 = vmatprep.subr.mxu0 0.0
      %3017 = vmatpush1.msra.mxu0 0.0
      %3018 = vmatprep.subr.mxu0 0.0
      %3019 = vmatpush1.msra.mxu0 0.0
      %3020 = vmatprep.subr.mxu0 0.0
      %3021 = vmatpush1.msra.mxu0 0.0
      %3022 = vmatprep.subr.mxu0 0.0
      %3023 = vmatpush1.msra.mxu0 0.0
      %3024 = vmatprep.subr.mxu0 0.0
      %3025 = vmatpush1.msra.mxu0 0.0
      %3026 = vmatprep.subr.mxu0 0.0
      %3027 = vmatpush1.msra.mxu0 %v2994
      %3028 = vmatprep.subr.mxu0 0.0
      %3029 = vmatpush2.msra.mxu0 0.0
      %3030 = vmatprep.subr.mxu0 0.0
      %3031 = vmatpush2.msra.mxu0 0.0
      %3032 = vmatprep.subr.mxu0 0.0
      %3033 = vmatpush2.msra.mxu0 0.0
      %3034 = vmatprep.subr.mxu0 0.0
      %3035 = vmatpush2.msra.mxu0 0.0
      %3036 = vmatprep.subr.mxu0 0.0
      %3037 = vmatpush2.msra.mxu0 0.0
      %3038 = vmatprep.subr.mxu0 0.0
      %3039 = vmatpush2.msra.mxu0 0.0
      %3040 = vmatprep.subr.mxu0 0.0
      %3041 = vmatpush2.msra.mxu0 0.0
      %3042 = vmatprep.subr.mxu0 0.0
      %3043 = vmatpush2.msra.mxu0 0.0
      %3044 = vmatprep.subr.mxu0 0.0
      %3045 = vmatpush2.msra.mxu0 0.0
      %3046 = vmatprep.subr.mxu0 0.0
      %3047 = vmatpush2.msra.mxu0 0.0
      %3048 = vmatprep.subr.mxu0 0.0
      %3049 = vmatpush2.msra.mxu0 0.0
      %3050 = vmatprep.subr.mxu0 0.0
      %3051 = vmatpush2.msra.mxu0 0.0
      %3052 = vmatprep.subr.mxu0 0.0
      %3053 = vmatpush2.msra.mxu0 0.0
      %3054 = vmatprep.subr.mxu0 0.0
      %3055 = vmatpush2.msra.mxu0 0.0
      %3056 = vmatprep.subr.mxu0 0.0
      %3057 = vmatpush2.msra.mxu0 0.0
      %3058 = vmatprep.subr.mxu0 0.0
      %3059 = vmatpush2.msra.mxu0 0.0
      %3060 = vmatprep.mubr.f32.mxu0 0.0
      %3061 = vmatmul.mubr.f32.gmra.mxu0 %v2970
      %v3062 = vpop.f32.mrf.mxu0
      %v3063 = vadd.f32 0.0, %v3062
      %v3064 = vpop.f32.mrf.mxu0
      %3065 = vmatprep.mubr.f32.mxu0 0.0
      %3066 = vmatmul.mubr.f32.gmra.mxu0 %v2973
      %v3067 = vpop.f32.mrf.mxu0
      %v3068 = vadd.f32 0.0, %v3067
      %v3069 = vpop.f32.mrf.mxu0
      %3070 = vmatprep.mubr.f32.mxu0 0.0
      %3071 = vmatmul.mubr.f32.gmra.mxu0 %v2976
      %v3072 = vpop.f32.mrf.mxu0
      %v3073 = vadd.f32 0.0, %v3072
      %v3074 = vpop.f32.mrf.mxu0
      %3075 = vmatprep.mubr.f32.mxu0 0.0
      %3076 = vmatmul.mubr.f32.gmra.mxu0 %v2979
      %v3077 = vpop.f32.mrf.mxu0
      %v3078 = vadd.f32 0.0, %v3077
      %v3079 = vpop.f32.mrf.mxu0
      %3080 = vmatprep.mubr.f32.mxu0 0.0
      %3081 = vmatmul.mubr.f32.gmra.mxu0 %v2982
      %v3082 = vpop.f32.mrf.mxu0
      %v3083 = vadd.f32 0.0, %v3082
      %v3084 = vpop.f32.mrf.mxu0
      %3085 = vmatprep.mubr.f32.mxu0 0.0
      %3086 = vmatmul.mubr.f32.gmra.mxu0 %v2985
      %v3087 = vpop.f32.mrf.mxu0
      %v3088 = vadd.f32 0.0, %v3087
      %v3089 = vpop.f32.mrf.mxu0
      %3090 = vmatprep.mubr.f32.mxu0 0.0
      %3091 = vmatmul.mubr.f32.gmra.mxu0 %v2988
      %v3092 = vpop.f32.mrf.mxu0
      %v3093 = vadd.f32 0.0, %v3092
      %v3094 = vpop.f32.mrf.mxu0
      %3095 = vmatprep.mubr.f32.mxu0 0.0
      %3096 = vmatmul.mubr.f32.gmra.mxu0 %v2991
      %v3097 = vpop.f32.mrf.mxu0
      %v3098 = vadd.f32 0.0, %v3097
      %v3099 = vpop.f32.mrf.mxu0
      %3100 = vdwg.mxu0
      %v3101 = vadd.f32 %v2961, %v3063
      %v3102 = vadd.f32 %v2962, %v3068
      %v3103 = vadd.f32 %v2963, %v3073
      %v3104 = vadd.f32 %v2964, %v3078
      %v3105 = vadd.f32 %v2965, %v3083
      %v3106 = vadd.f32 %v2966, %v3088
      %v3107 = vadd.f32 %v2967, %v3093
      %v3108 = vadd.f32 %v2968, %v3098
      %3109 = vst.msk [vmem:[#allocation2] sm:$0xff] %vm455, %v3101
      %3110 = vst.msk [vmem:[#allocation2 + $0x8] sm:$0xff] %vm455, %v3102
      %3111 = vst.msk [vmem:[#allocation2 + $0x10] sm:$0xff] %vm455, %v3103
      %3112 = vst.msk [vmem:[#allocation2 + $0x18] sm:$0xff] %vm455, %v3104
      %3113 = vst.msk [vmem:[#allocation2 + $0x20] sm:$0xff] %vm455, %v3105
      %3114 = vst.msk [vmem:[#allocation2 + $0x28] sm:$0xff] %vm455, %v3106
      %3115 = vst.msk [vmem:[#allocation2 + $0x30] sm:$0xff] %vm455, %v3107
      %3116 = vst.msk [vmem:[#allocation2 + $0x38] sm:$0xff] %vm455, %v3108
      %p3117 = scmp.eq.s32.totalorder %s25, 2
      // Predicated region
      $region45: #{decoder_block_forward.6} parent=35 // pred_check
        %p3118 = pneg %p3117
      $region46: #{decoder_block_forward.6} parent=35 // pred_check_branch
        %3120 = sbr.rel (%p3118) target = $region48
      $region47: #{decoder_block_forward.6} parent=35 // pred_region
        %v3121 = vld [vmem:[#allocation2] sm:$0xff]
        %v3122 = vld [vmem:[#allocation2 + $0x8] sm:$0xff]
        %v3123 = vld [vmem:[#allocation2 + $0x10] sm:$0xff]
        %v3124 = vld [vmem:[#allocation2 + $0x18] sm:$0xff]
        %v3125 = vld [vmem:[#allocation2 + $0x20] sm:$0xff]
        %v3126 = vld [vmem:[#allocation2 + $0x28] sm:$0xff]
        %v3127 = vld [vmem:[#allocation2 + $0x30] sm:$0xff]
        %v3128 = vld [vmem:[#allocation2 + $0x38] sm:$0xff]
        %3129 = vst.msk [vmem:[%s391] sm:$0xff] %vm455, %v3121
        %3130 = vst.msk [vmem:[%s391 + $0x8] sm:$0xff] %vm455, %v3122
        %3131 = vst.msk [vmem:[%s391 + $0x10] sm:$0xff] %vm455, %v3123
        %3132 = vst.msk [vmem:[%s391 + $0x18] sm:$0xff] %vm455, %v3124
        %3133 = vst.msk [vmem:[%s391 + $0x20] sm:$0xff] %vm455, %v3125
        %3134 = vst.msk [vmem:[%s391 + $0x28] sm:$0xff] %vm455, %v3126
        %3135 = vst.msk [vmem:[%s391 + $0x30] sm:$0xff] %vm455, %v3127
        %3136 = vst.msk [vmem:[%s391 + $0x38] sm:$0xff] %vm455, %v3128
        %v3137 = vld [vmem:[%s396] sm:$0x1]
        %v3138 = vsel %vm455, %v3121, 0.0
        %v3139 = vsel %vm455, %v3122, 0.0
        %v3140 = vadd.f32 %v3138, %v3139
        %v3141 = vsel %vm455, %v3123, 0.0
        %v3142 = vadd.f32 %v3140, %v3141
        %v3143 = vsel %vm455, %v3124, 0.0
        %v3144 = vadd.f32 %v3142, %v3143
        %v3145 = vsel %vm455, %v3125, 0.0
        %v3146 = vadd.f32 %v3144, %v3145
        %v3147 = vsel %vm455, %v3126, 0.0
        %v3148 = vadd.f32 %v3146, %v3147
        %v3149 = vsel %vm455, %v3127, 0.0
        %v3150 = vadd.f32 %v3148, %v3149
        %v3151 = vsel %vm455, %v3128, 0.0
        %v3152 = vadd.f32 %v3150, %v3151
        %v3153 = vrot.slane %v3152, 4
        %v3154 = vadd.f32 %v3152, %v3153
        %v3155 = vrot.slane %v3154, 2
        %v3156 = vadd.f32 %v3154, %v3155
        %v3157 = vrot.slane %v3156, 1
        %v3158 = vadd.f32 %v3156, %v3157
        %v3159 = vadd.f32 %v3137, %v3158
        %vm3160 = vcmask 24576
        %3161 = vst.msk [vmem:[%s396] sm:$0x1] %vm3160, %v3159
        %v3162 = vld [vmem:[%s399] sm:$0x1]
        %v3163 = vmul.f32 %v3121, %v3121
        %v3164 = vmul.f32 %v3122, %v3122
        %v3165 = vmul.f32 %v3123, %v3123
        %v3166 = vmul.f32 %v3124, %v3124
        %v3167 = vmul.f32 %v3125, %v3125
        %v3168 = vmul.f32 %v3126, %v3126
        %v3169 = vmul.f32 %v3127, %v3127
        %v3170 = vmul.f32 %v3128, %v3128
        %v3171 = vsel %vm455, %v3163, 0.0
        %v3172 = vsel %vm455, %v3164, 0.0
        %v3173 = vadd.f32 %v3171, %v3172
        %v3174 = vsel %vm455, %v3165, 0.0
        %v3175 = vadd.f32 %v3173, %v3174
        %v3176 = vsel %vm455, %v3166, 0.0
        %v3177 = vadd.f32 %v3175, %v3176
        %v3178 = vsel %vm455, %v3167, 0.0
        %v3179 = vadd.f32 %v3177, %v3178
        %v3180 = vsel %vm455, %v3168, 0.0
        %v3181 = vadd.f32 %v3179, %v3180
        %v3182 = vsel %vm455, %v3169, 0.0
        %v3183 = vadd.f32 %v3181, %v3182
        %v3184 = vsel %vm455, %v3170, 0.0
        %v3185 = vadd.f32 %v3183, %v3184
        %v3186 = vrot.slane %v3185, 4
        %v3187 = vadd.f32 %v3185, %v3186
        %v3188 = vrot.slane %v3187, 2
        %v3189 = vadd.f32 %v3187, %v3188
        %v3190 = vrot.slane %v3189, 1
        %v3191 = vadd.f32 %v3189, %v3190
        %v3192 = vadd.f32 %v3162, %v3191
        %3193 = vst.msk [vmem:[%s399] sm:$0x1] %vm3160, %v3192
      $region48: #{decoder_block_forward.6} parent=35 // pred_fallthru
        _
      %s3194 = smul.u32 %s23, 8
      %s3195 = sadd.s32 %s3194, %s24
      %p3196 = scmp.lt.s32.totalorder %s3195, 15
      %s3197 = scalar_select %p3196, %s3195, 15
      %s3198 = smul.addr %s3197, 8
      %s3199 = smul.addr %s3198, 8
      %s3200 = scalar_lea.vmem %s4, %s3199
      %p3201 = scmp.lt.s32.totalorder %s23, 1
      %s3202 = scalar_select %p3201, %s23, 1
      %s3203 = scalar_lea.vmem %s5, %s3202
      %p3204 = scmp.lt.s32.totalorder %s23, 1
      %s3205 = scalar_select %p3204, %s23, 1
      %s3206 = scalar_lea.vmem %s6, %s3205
      // Predicated region
      $region49: #{decoder_block_forward.6} parent=35 // pred_check
        %p3207 = pneg %p175
      $region50: #{decoder_block_forward.6} parent=35 // pred_check_branch
        %3209 = sbr.rel (%p3207) target = $region52
      $region51: #{decoder_block_forward.6} parent=35 // pred_region
        %s3210 = smul.u32 %s23, 8
        %s3211 = sadd.s32 %s3210, %s24
      $region52: #{decoder_block_forward.6} parent=35 // pred_fallthru
        _
      // Predicated region
      $region53: #{decoder_block_forward.6} parent=35 // pred_check
        %p3212 = pneg %p201
      $region54: #{decoder_block_forward.6} parent=35 // pred_check_branch
        %3214 = sbr.rel (%p3212) target = $region56
      $region55: #{decoder_block_forward.6} parent=35 // pred_region
        _
      $region56: #{decoder_block_forward.6} parent=35 // pred_fallthru
        _
      // Predicated region
      $region57: #{decoder_block_forward.6} parent=35 // pred_check
        %p3215 = pneg %p227
      $region58: #{decoder_block_forward.6} parent=35 // pred_check_branch
        %3217 = sbr.rel (%p3215) target = $region60
      $region59: #{decoder_block_forward.6} parent=35 // pred_region
        _
      $region60: #{decoder_block_forward.6} parent=35 // pred_fallthru
        _
    $region36: #{decoder_block_forward.6} parent=5 // pred_fallthru
      _
    %p3218 = scmp.le.s32.totalorder 2, %s13
    // Predicated region
    $region61: #{decoder_block_forward.6} parent=5 // pred_check
      %p3219 = pneg %p3218
    $region62: #{decoder_block_forward.6} parent=5 // pred_check_branch
      %3221 = sbr.rel (%p3219) target = $region64
    $region63: #{decoder_block_forward.6} parent=5 // pred_region
      %s3222 = ssub.s32 %s13, 2
      // Predicated region
      $region65: #{decoder_block_forward.6} parent=63 // pred_check
        %p3223 = pneg %p181
      $region66: #{decoder_block_forward.6} parent=63 // pred_check_branch
        %3225 = sbr.rel (%p3223) target = $region68
      $region67: #{decoder_block_forward.6} parent=63 // pred_region
        %s3226 = smul.u32 %s26, 8
        %s3227 = sadd.s32 %s3226, %s27
        %p3228 = scmp.lt.s32.totalorder %s3227, 15
        %s3229 = scalar_select %p3228, %s3227, 15
        %s3230 = smul.addr %s3229, 8
        %s3231 = smul.addr %s3230, 8
        %s3232 = scalar_lea.vmem %s4, %s3231
      $region68: #{decoder_block_forward.6} parent=63 // pred_fallthru
        _
      // Predicated region
      $region69: #{decoder_block_forward.6} parent=63 // pred_check
        %p3233 = pneg %p207
      $region70: #{decoder_block_forward.6} parent=63 // pred_check_branch
        %3235 = sbr.rel (%p3233) target = $region72
      $region71: #{decoder_block_forward.6} parent=63 // pred_region
        %p3236 = scmp.lt.s32.totalorder %s26, 1
        %s3237 = scalar_select %p3236, %s26, 1
        %s3238 = scalar_lea.vmem %s5, %s3237
      $region72: #{decoder_block_forward.6} parent=63 // pred_fallthru
        _
      // Predicated region
      $region73: #{decoder_block_forward.6} parent=63 // pred_check
        %p3239 = pneg %p233
      $region74: #{decoder_block_forward.6} parent=63 // pred_check_branch
        %3241 = sbr.rel (%p3239) target = $region76
      $region75: #{decoder_block_forward.6} parent=63 // pred_region
        %p3242 = scmp.lt.s32.totalorder %s26, 1
        %s3243 = scalar_select %p3242, %s26, 1
        %s3244 = scalar_lea.vmem %s6, %s3243
      $region76: #{decoder_block_forward.6} parent=63 // pred_fallthru
        _
    $region64: #{decoder_block_forward.6} parent=5 // pred_fallthru
      _
  $region6: #{decoder_block_forward.6} parent=0 // loop_footer
    %s17 = sadd.s32 1, %s13
  $region7: #{decoder_block_forward.6} parent=0 // loop_footer_branch
    %12 = sbr.rel target = $region3
  $region8: #{decoder_block_forward.6} parent=0 // loop_exit
    _

</llo_original>
